<compile_context>
chip_gen: v6e
topology: v6e:2x2x1
jax: 0.10.0
libtpu: 0.0.40
codegen_flags: <defaults>
</compile_context>

<pallas_src>
import jax
import jax.numpy as jnp
from jax.experimental import pallas as pl
from jax.experimental.pallas import tpu as pltpu


def _make_dwconv_kernel(H, W, Ct, kpl):
    def kernel(x_ref, w_ref, b_ref, o_ref, xp_ref):
        # x_ref : (1, H, W, Ct)        input slab, channels on lanes
        # w_ref : (kpl, 3, 3, Ct)      per-tap C-lane weight vectors
        # b_ref : (kpl, Ct)            per-group bias
        # o_ref : (kpl, 1, H, W, Ct)   output slabs (k-major group layout)
        # xp_ref: (H+2, W+2, Ct)       VMEM scratch: zero-halo padded copy
        xp_ref[...] = jnp.zeros_like(xp_ref)
        xp_ref[1:H + 1, 1:W + 1, :] = x_ref[0].astype(jnp.float32)

        for k in range(kpl):
            acc = jnp.zeros((H, W, Ct), jnp.float32)
            for dh in range(3):
                for dw in range(3):
                    tap = w_ref[k, dh, dw:dw + 1, :].astype(jnp.float32)  # (1, Ct)
                    acc = acc + xp_ref[dh:dh + H, dw:dw + W, :] * tap
            acc = acc + b_ref[k:k + 1, :].astype(jnp.float32)
            o_ref[k, 0] = acc.astype(o_ref.dtype)

    return kernel


def depthwise_conv(x, weight, bias, kernels_per_layer):
    """x: (N, C, H, W); weight: (C*kpl, 1, 3, 3); bias: (C*kpl,) -> (N, C*kpl, H, W)."""
    N, C, H, W = x.shape
    kpl = kernels_per_layer
    OC = C * kpl
    assert weight.shape == (OC, 1, 3, 3)
    assert bias.shape == (OC,)

    # Channels on the lane axis.
    x_nhwc = jnp.transpose(x, (0, 2, 3, 1))                                 # (N, H, W, C)
    # PyTorch group layout: oc = c*kpl + k  ->  wt[k, dh, dw, c], bt[k, c]
    wt = jnp.transpose(weight[:, 0].reshape(C, kpl, 3, 3), (1, 2, 3, 0))    # (kpl, 3, 3, C)
    bt = jnp.transpose(bias.reshape(C, kpl), (1, 0))                        # (kpl, C)

    # Channel tiling: 128-lane tiles when C is a clean multiple, else full C.
    Ct = 128 if (C % 128 == 0) else C
    n_ct = C // Ct
    # TODO(synk): add H-row tiling (halo rows) for images where a full
    # (H, W, Ct) f32 slab would exceed the per-chip VMEM budget.

    kernel = _make_dwconv_kernel(H, W, Ct, kpl)
    itemsize = jnp.dtype(x.dtype).itemsize
    cost = pl.CostEstimate(
        flops=2 * 9 * N * OC * H * W,
        transcendentals=0,
        bytes_accessed=int((N * C * H * W + N * OC * H * W) * itemsize
                           + weight.size * 4 + bias.size * 4),
    )

    out_k = pl.pallas_call(
        kernel,
        out_shape=jax.ShapeDtypeStruct((kpl, N, H, W, C), x.dtype),
        grid_spec=pltpu.PrefetchScalarGridSpec(
            num_scalar_prefetch=0,
            grid=(n_ct, N),  # batch innermost: weight/bias blocks stay resident
            in_specs=[
                pl.BlockSpec((1, H, W, Ct), lambda ci, b: (b, 0, 0, ci)),
                pl.BlockSpec((kpl, 3, 3, Ct), lambda ci, b: (0, 0, 0, ci)),
                pl.BlockSpec((kpl, Ct), lambda ci, b: (0, ci)),
            ],
            out_specs=pl.BlockSpec((kpl, 1, H, W, Ct),
                                   lambda ci, b: (0, b, 0, 0, ci)),
            scratch_shapes=[pltpu.VMEM((H + 2, W + 2, Ct), jnp.float32)],
        ),
        compiler_params=pltpu.CompilerParams(
            dimension_semantics=("parallel", "parallel")),
        cost_estimate=cost,
    )(x_nhwc, wt, bt)

    # (kpl, N, H, W, C) -> (N, C, kpl, H, W) -> (N, OC, H, W); oc = c*kpl + k.
    out = jnp.transpose(out_k, (1, 4, 0, 2, 3)).reshape(N, OC, H, W)
    return out


def _reference(x, weight, bias, nin):
    out = jax.lax.conv_general_dilated(
        x.astype(jnp.float32),
        weight.astype(jnp.float32),
        window_strides=(1, 1),
        padding="SAME",
        feature_group_count=nin,
        dimension_numbers=("NCHW", "OIHW", "NCHW"),
    )
    return out + bias.astype(jnp.float32)[None, :, None, None]


if __name__ == "__main__":
    N, C, H, W = 2, 4, 16, 16
    kernels_per_layer = 2
    OC = C * kernels_per_layer

    key = jax.random.PRNGKey(0)
    kx, kw, kb = jax.random.split(key, 3)
    x = jax.random.normal(kx, (N, C, H, W), dtype=jnp.float32)
    # Deterministic parameter init (synthetic; shapes match nn.Conv2d(groups=nin)).
    weight = jax.random.normal(kw, (OC, 1, 3, 3), dtype=jnp.float32) * 0.1
    bias = jax.random.normal(kb, (OC,), dtype=jnp.float32) * 0.1

    out = depthwise_conv(x, weight, bias, kernels_per_layer)
    out = jax.block_until_ready(out)

    ref = _reference(x, weight, bias, C)
    assert out.shape == (N, OC, H, W)
    assert jnp.allclose(out, ref, atol=1e-5, rtol=1e-5)

    print("KERNEL_OK")
</pallas_src>

<mosaic_0001>
module attributes {stable_mosaic.version = 11 : i64} {
  func.func @kernel(%arg0: i32, %arg1: i32, %arg2: memref<1x16x16x4xf32, #tpu.memory_space<vmem>>, %arg3: memref<2x3x3x4xf32, #tpu.memory_space<vmem>>, %arg4: memref<2x4xf32, #tpu.memory_space<vmem>>, %arg5: memref<2x1x16x16x4xf32, #tpu.memory_space<vmem>>, %arg6: memref<18x18x4xf32, #tpu.memory_space<vmem>>) attributes {dimension_semantics = [#tpu.dimension_semantics<parallel>, #tpu.dimension_semantics<parallel>], iteration_bounds = array<i64: 1, 2>, scalar_prefetch = 0 : i64, scratch_operands = 1 : i64, tpu.core_type = #tpu.core_type<tc>, window_params = [{transform_indices = @transform_0, window_bounds = array<i64: 1, 16, 16, 4>}, {transform_indices = @transform_1, window_bounds = array<i64: 2, 3, 3, 4>}, {transform_indices = @transform_2, window_bounds = array<i64: 2, 4>}, {transform_indices = @transform_3, window_bounds = array<i64: 2, 1, 16, 16, 4>}]} {
    %cst = arith.constant 0.000000e+00 : f32
    %0 = vector.broadcast %cst : f32 to vector<18x18x4xf32>
    %c0 = arith.constant 0 : index
    %c0_0 = arith.constant 0 : index
    %c0_1 = arith.constant 0 : index
    %1 = vector.load %arg6[%c0, %c0_0, %c0_1] : memref<18x18x4xf32, #tpu.memory_space<vmem>>, vector<18x18x4xf32>
    tpu.vector_store %arg6[%c0, %c0_0, %c0_1], %0 {strides = array<i32>} : memref<18x18x4xf32, #tpu.memory_space<vmem>>, vector<18x18x4xf32>,
    %c0_2 = arith.constant 0 : index
    %c0_3 = arith.constant 0 : index
    %c0_4 = arith.constant 0 : index
    %c0_5 = arith.constant 0 : index
    %2 = vector.load %arg2[%c0_2, %c0_3, %c0_4, %c0_5] : memref<1x16x16x4xf32, #tpu.memory_space<vmem>>, vector<1x16x16x4xf32>
    %3 = vector.shape_cast %2 : vector<1x16x16x4xf32> to vector<16x16x4xf32>
    %c1 = arith.constant 1 : index
    %c1_6 = arith.constant 1 : index
    %c0_7 = arith.constant 0 : index
    %4 = vector.load %arg6[%c1, %c1_6, %c0_7] : memref<18x18x4xf32, #tpu.memory_space<vmem>>, vector<16x16x4xf32>
    tpu.vector_store %arg6[%c1, %c1_6, %c0_7], %3 {strides = array<i32>} : memref<18x18x4xf32, #tpu.memory_space<vmem>>, vector<16x16x4xf32>,
    %cst_8 = arith.constant 0.000000e+00 : f32
    %5 = vector.broadcast %cst_8 : f32 to vector<16x16x4xf32>
    %c0_9 = arith.constant 0 : index
    %c0_10 = arith.constant 0 : index
    %c0_11 = arith.constant 0 : index
    %c0_12 = arith.constant 0 : index
    %6 = vector.load %arg3[%c0_9, %c0_10, %c0_11, %c0_12] : memref<2x3x3x4xf32, #tpu.memory_space<vmem>>, vector<1x1x1x4xf32>
    %7 = vector.shape_cast %6 : vector<1x1x1x4xf32> to vector<1x4xf32>
    %c0_13 = arith.constant 0 : index
    %c0_14 = arith.constant 0 : index
    %c0_15 = arith.constant 0 : index
    %8 = vector.load %arg6[%c0_13, %c0_14, %c0_15] : memref<18x18x4xf32, #tpu.memory_space<vmem>>, vector<16x16x4xf32>
    %9 = vector.shape_cast %7 : vector<1x4xf32> to vector<1x1x4xf32>
    %10 = vector.broadcast %9 : vector<1x1x4xf32> to vector<16x16x4xf32>
    %11 = arith.mulf %8, %10 : vector<16x16x4xf32>
    %12 = arith.addf %5, %11 : vector<16x16x4xf32>
    %c0_16 = arith.constant 0 : index
    %c0_17 = arith.constant 0 : index
    %c1_18 = arith.constant 1 : index
    %c0_19 = arith.constant 0 : index
    %13 = vector.load %arg3[%c0_16, %c0_17, %c1_18, %c0_19] : memref<2x3x3x4xf32, #tpu.memory_space<vmem>>, vector<1x1x1x4xf32>
    %14 = vector.shape_cast %13 : vector<1x1x1x4xf32> to vector<1x4xf32>
    %c0_20 = arith.constant 0 : index
    %c1_21 = arith.constant 1 : index
    %c0_22 = arith.constant 0 : index
    %15 = vector.load %arg6[%c0_20, %c1_21, %c0_22] : memref<18x18x4xf32, #tpu.memory_space<vmem>>, vector<16x16x4xf32>
    %16 = vector.shape_cast %14 : vector<1x4xf32> to vector<1x1x4xf32>
    %17 = vector.broadcast %16 : vector<1x1x4xf32> to vector<16x16x4xf32>
    %18 = arith.mulf %15, %17 : vector<16x16x4xf32>
    %19 = arith.addf %12, %18 : vector<16x16x4xf32>
    %c0_23 = arith.constant 0 : index
    %c0_24 = arith.constant 0 : index
    %c2 = arith.constant 2 : index
    %c0_25 = arith.constant 0 : index
    %20 = vector.load %arg3[%c0_23, %c0_24, %c2, %c0_25] : memref<2x3x3x4xf32, #tpu.memory_space<vmem>>, vector<1x1x1x4xf32>
    %21 = vector.shape_cast %20 : vector<1x1x1x4xf32> to vector<1x4xf32>
    %c0_26 = arith.constant 0 : index
    %c2_27 = arith.constant 2 : index
    %c0_28 = arith.constant 0 : index
    %22 = vector.load %arg6[%c0_26, %c2_27, %c0_28] : memref<18x18x4xf32, #tpu.memory_space<vmem>>, vector<16x16x4xf32>
    %23 = vector.shape_cast %21 : vector<1x4xf32> to vector<1x1x4xf32>
    %24 = vector.broadcast %23 : vector<1x1x4xf32> to vector<16x16x4xf32>
    %25 = arith.mulf %22, %24 : vector<16x16x4xf32>
    %26 = arith.addf %19, %25 : vector<16x16x4xf32>
    %c0_29 = arith.constant 0 : index
    %c1_30 = arith.constant 1 : index
    %c0_31 = arith.constant 0 : index
    %c0_32 = arith.constant 0 : index
    %27 = vector.load %arg3[%c0_29, %c1_30, %c0_31, %c0_32] : memref<2x3x3x4xf32, #tpu.memory_space<vmem>>, vector<1x1x1x4xf32>
    %28 = vector.shape_cast %27 : vector<1x1x1x4xf32> to vector<1x4xf32>
    %c1_33 = arith.constant 1 : index
    %c0_34 = arith.constant 0 : index
    %c0_35 = arith.constant 0 : index
    %29 = vector.load %arg6[%c1_33, %c0_34, %c0_35] : memref<18x18x4xf32, #tpu.memory_space<vmem>>, vector<16x16x4xf32>
    %30 = vector.shape_cast %28 : vector<1x4xf32> to vector<1x1x4xf32>
    %31 = vector.broadcast %30 : vector<1x1x4xf32> to vector<16x16x4xf32>
    %32 = arith.mulf %29, %31 : vector<16x16x4xf32>
    %33 = arith.addf %26, %32 : vector<16x16x4xf32>
    %c0_36 = arith.constant 0 : index
    %c1_37 = arith.constant 1 : index
    %c1_38 = arith.constant 1 : index
    %c0_39 = arith.constant 0 : index
    %34 = vector.load %arg3[%c0_36, %c1_37, %c1_38, %c0_39] : memref<2x3x3x4xf32, #tpu.memory_space<vmem>>, vector<1x1x1x4xf32>
    %35 = vector.shape_cast %34 : vector<1x1x1x4xf32> to vector<1x4xf32>
    %c1_40 = arith.constant 1 : index
    %c1_41 = arith.constant 1 : index
    %c0_42 = arith.constant 0 : index
    %36 = vector.load %arg6[%c1_40, %c1_41, %c0_42] : memref<18x18x4xf32, #tpu.memory_space<vmem>>, vector<16x16x4xf32>
    %37 = vector.shape_cast %35 : vector<1x4xf32> to vector<1x1x4xf32>
    %38 = vector.broadcast %37 : vector<1x1x4xf32> to vector<16x16x4xf32>
    %39 = arith.mulf %36, %38 : vector<16x16x4xf32>
    %40 = arith.addf %33, %39 : vector<16x16x4xf32>
    %c0_43 = arith.constant 0 : index
    %c1_44 = arith.constant 1 : index
    %c2_45 = arith.constant 2 : index
    %c0_46 = arith.constant 0 : index
    %41 = vector.load %arg3[%c0_43, %c1_44, %c2_45, %c0_46] : memref<2x3x3x4xf32, #tpu.memory_space<vmem>>, vector<1x1x1x4xf32>
    %42 = vector.shape_cast %41 : vector<1x1x1x4xf32> to vector<1x4xf32>
    %c1_47 = arith.constant 1 : index
    %c2_48 = arith.constant 2 : index
    %c0_49 = arith.constant 0 : index
    %43 = vector.load %arg6[%c1_47, %c2_48, %c0_49] : memref<18x18x4xf32, #tpu.memory_space<vmem>>, vector<16x16x4xf32>
    %44 = vector.shape_cast %42 : vector<1x4xf32> to vector<1x1x4xf32>
    %45 = vector.broadcast %44 : vector<1x1x4xf32> to vector<16x16x4xf32>
    %46 = arith.mulf %43, %45 : vector<16x16x4xf32>
    %47 = arith.addf %40, %46 : vector<16x16x4xf32>
    %c0_50 = arith.constant 0 : index
    %c2_51 = arith.constant 2 : index
    %c0_52 = arith.constant 0 : index
    %c0_53 = arith.constant 0 : index
    %48 = vector.load %arg3[%c0_50, %c2_51, %c0_52, %c0_53] : memref<2x3x3x4xf32, #tpu.memory_space<vmem>>, vector<1x1x1x4xf32>
    %49 = vector.shape_cast %48 : vector<1x1x1x4xf32> to vector<1x4xf32>
    %c2_54 = arith.constant 2 : index
    %c0_55 = arith.constant 0 : index
    %c0_56 = arith.constant 0 : index
    %50 = vector.load %arg6[%c2_54, %c0_55, %c0_56] : memref<18x18x4xf32, #tpu.memory_space<vmem>>, vector<16x16x4xf32>
    %51 = vector.shape_cast %49 : vector<1x4xf32> to vector<1x1x4xf32>
    %52 = vector.broadcast %51 : vector<1x1x4xf32> to vector<16x16x4xf32>
    %53 = arith.mulf %50, %52 : vector<16x16x4xf32>
    %54 = arith.addf %47, %53 : vector<16x16x4xf32>
    %c0_57 = arith.constant 0 : index
    %c2_58 = arith.constant 2 : index
    %c1_59 = arith.constant 1 : index
    %c0_60 = arith.constant 0 : index
    %55 = vector.load %arg3[%c0_57, %c2_58, %c1_59, %c0_60] : memref<2x3x3x4xf32, #tpu.memory_space<vmem>>, vector<1x1x1x4xf32>
    %56 = vector.shape_cast %55 : vector<1x1x1x4xf32> to vector<1x4xf32>
    %c2_61 = arith.constant 2 : index
    %c1_62 = arith.constant 1 : index
    %c0_63 = arith.constant 0 : index
    %57 = vector.load %arg6[%c2_61, %c1_62, %c0_63] : memref<18x18x4xf32, #tpu.memory_space<vmem>>, vector<16x16x4xf32>
    %58 = vector.shape_cast %56 : vector<1x4xf32> to vector<1x1x4xf32>
    %59 = vector.broadcast %58 : vector<1x1x4xf32> to vector<16x16x4xf32>
    %60 = arith.mulf %57, %59 : vector<16x16x4xf32>
    %61 = arith.addf %54, %60 : vector<16x16x4xf32>
    %c0_64 = arith.constant 0 : index
    %c2_65 = arith.constant 2 : index
    %c2_66 = arith.constant 2 : index
    %c0_67 = arith.constant 0 : index
    %62 = vector.load %arg3[%c0_64, %c2_65, %c2_66, %c0_67] : memref<2x3x3x4xf32, #tpu.memory_space<vmem>>, vector<1x1x1x4xf32>
    %63 = vector.shape_cast %62 : vector<1x1x1x4xf32> to vector<1x4xf32>
    %c2_68 = arith.constant 2 : index
    %c2_69 = arith.constant 2 : index
    %c0_70 = arith.constant 0 : index
    %64 = vector.load %arg6[%c2_68, %c2_69, %c0_70] : memref<18x18x4xf32, #tpu.memory_space<vmem>>, vector<16x16x4xf32>
    %65 = vector.shape_cast %63 : vector<1x4xf32> to vector<1x1x4xf32>
    %66 = vector.broadcast %65 : vector<1x1x4xf32> to vector<16x16x4xf32>
    %67 = arith.mulf %64, %66 : vector<16x16x4xf32>
    %68 = arith.addf %61, %67 : vector<16x16x4xf32>
    %c0_71 = arith.constant 0 : index
    %c0_72 = arith.constant 0 : index
    %69 = vector.load %arg4[%c0_71, %c0_72] : memref<2x4xf32, #tpu.memory_space<vmem>>, vector<1x4xf32>
    %70 = vector.shape_cast %69 : vector<1x4xf32> to vector<1x1x4xf32>
    %71 = vector.broadcast %70 : vector<1x1x4xf32> to vector<16x16x4xf32>
    %72 = arith.addf %68, %71 : vector<16x16x4xf32>
    %c0_73 = arith.constant 0 : index
    %c0_74 = arith.constant 0 : index
    %c0_75 = arith.constant 0 : index
    %c0_76 = arith.constant 0 : index
    %c0_77 = arith.constant 0 : index
    %73 = vector.load %arg5[%c0_73, %c0_74, %c0_75, %c0_76, %c0_77] : memref<2x1x16x16x4xf32, #tpu.memory_space<vmem>>, vector<1x1x16x16x4xf32>
    %74 = vector.shape_cast %73 : vector<1x1x16x16x4xf32> to vector<16x16x4xf32>
    %75 = vector.shape_cast %72 : vector<16x16x4xf32> to vector<1x1x16x16x4xf32>
    tpu.vector_store %arg5[%c0_73, %c0_74, %c0_75, %c0_76, %c0_77], %75 {strides = array<i32>} : memref<2x1x16x16x4xf32, #tpu.memory_space<vmem>>, vector<1x1x16x16x4xf32>,
    %cst_78 = arith.constant 0.000000e+00 : f32
    %76 = vector.broadcast %cst_78 : f32 to vector<16x16x4xf32>
    %c1_79 = arith.constant 1 : index
    %c0_80 = arith.constant 0 : index
    %c0_81 = arith.constant 0 : index
    %c0_82 = arith.constant 0 : index
    %77 = vector.load %arg3[%c1_79, %c0_80, %c0_81, %c0_82] : memref<2x3x3x4xf32, #tpu.memory_space<vmem>>, vector<1x1x1x4xf32>
    %78 = vector.shape_cast %77 : vector<1x1x1x4xf32> to vector<1x4xf32>
    %c0_83 = arith.constant 0 : index
    %c0_84 = arith.constant 0 : index
    %c0_85 = arith.constant 0 : index
    %79 = vector.load %arg6[%c0_83, %c0_84, %c0_85] : memref<18x18x4xf32, #tpu.memory_space<vmem>>, vector<16x16x4xf32>
    %80 = vector.shape_cast %78 : vector<1x4xf32> to vector<1x1x4xf32>
    %81 = vector.broadcast %80 : vector<1x1x4xf32> to vector<16x16x4xf32>
    %82 = arith.mulf %79, %81 : vector<16x16x4xf32>
    %83 = arith.addf %76, %82 : vector<16x16x4xf32>
    %c1_86 = arith.constant 1 : index
    %c0_87 = arith.constant 0 : index
    %c1_88 = arith.constant 1 : index
    %c0_89 = arith.constant 0 : index
    %84 = vector.load %arg3[%c1_86, %c0_87, %c1_88, %c0_89] : memref<2x3x3x4xf32, #tpu.memory_space<vmem>>, vector<1x1x1x4xf32>
    %85 = vector.shape_cast %84 : vector<1x1x1x4xf32> to vector<1x4xf32>
    %c0_90 = arith.constant 0 : index
    %c1_91 = arith.constant 1 : index
    %c0_92 = arith.constant 0 : index
    %86 = vector.load %arg6[%c0_90, %c1_91, %c0_92] : memref<18x18x4xf32, #tpu.memory_space<vmem>>, vector<16x16x4xf32>
    %87 = vector.shape_cast %85 : vector<1x4xf32> to vector<1x1x4xf32>
    %88 = vector.broadcast %87 : vector<1x1x4xf32> to vector<16x16x4xf32>
    %89 = arith.mulf %86, %88 : vector<16x16x4xf32>
    %90 = arith.addf %83, %89 : vector<16x16x4xf32>
    %c1_93 = arith.constant 1 : index
    %c0_94 = arith.constant 0 : index
    %c2_95 = arith.constant 2 : index
    %c0_96 = arith.constant 0 : index
    %91 = vector.load %arg3[%c1_93, %c0_94, %c2_95, %c0_96] : memref<2x3x3x4xf32, #tpu.memory_space<vmem>>, vector<1x1x1x4xf32>
    %92 = vector.shape_cast %91 : vector<1x1x1x4xf32> to vector<1x4xf32>
    %c0_97 = arith.constant 0 : index
    %c2_98 = arith.constant 2 : index
    %c0_99 = arith.constant 0 : index
    %93 = vector.load %arg6[%c0_97, %c2_98, %c0_99] : memref<18x18x4xf32, #tpu.memory_space<vmem>>, vector<16x16x4xf32>
    %94 = vector.shape_cast %92 : vector<1x4xf32> to vector<1x1x4xf32>
    %95 = vector.broadcast %94 : vector<1x1x4xf32> to vector<16x16x4xf32>
    %96 = arith.mulf %93, %95 : vector<16x16x4xf32>
    %97 = arith.addf %90, %96 : vector<16x16x4xf32>
    %c1_100 = arith.constant 1 : index
    %c1_101 = arith.constant 1 : index
    %c0_102 = arith.constant 0 : index
    %c0_103 = arith.constant 0 : index
    %98 = vector.load %arg3[%c1_100, %c1_101, %c0_102, %c0_103] : memref<2x3x3x4xf32, #tpu.memory_space<vmem>>, vector<1x1x1x4xf32>
    %99 = vector.shape_cast %98 : vector<1x1x1x4xf32> to vector<1x4xf32>
    %c1_104 = arith.constant 1 : index
    %c0_105 = arith.constant 0 : index
    %c0_106 = arith.constant 0 : index
    %100 = vector.load %arg6[%c1_104, %c0_105, %c0_106] : memref<18x18x4xf32, #tpu.memory_space<vmem>>, vector<16x16x4xf32>
    %101 = vector.shape_cast %99 : vector<1x4xf32> to vector<1x1x4xf32>
    %102 = vector.broadcast %101 : vector<1x1x4xf32> to vector<16x16x4xf32>
    %103 = arith.mulf %100, %102 : vector<16x16x4xf32>
    %104 = arith.addf %97, %103 : vector<16x16x4xf32>
    %c1_107 = arith.constant 1 : index
    %c1_108 = arith.constant 1 : index
    %c1_109 = arith.constant 1 : index
    %c0_110 = arith.constant 0 : index
    %105 = vector.load %arg3[%c1_107, %c1_108, %c1_109, %c0_110] : memref<2x3x3x4xf32, #tpu.memory_space<vmem>>, vector<1x1x1x4xf32>
    %106 = vector.shape_cast %105 : vector<1x1x1x4xf32> to vector<1x4xf32>
    %c1_111 = arith.constant 1 : index
    %c1_112 = arith.constant 1 : index
    %c0_113 = arith.constant 0 : index
    %107 = vector.load %arg6[%c1_111, %c1_112, %c0_113] : memref<18x18x4xf32, #tpu.memory_space<vmem>>, vector<16x16x4xf32>
    %108 = vector.shape_cast %106 : vector<1x4xf32> to vector<1x1x4xf32>
    %109 = vector.broadcast %108 : vector<1x1x4xf32> to vector<16x16x4xf32>
    %110 = arith.mulf %107, %109 : vector<16x16x4xf32>
    %111 = arith.addf %104, %110 : vector<16x16x4xf32>
    %c1_114 = arith.constant 1 : index
    %c1_115 = arith.constant 1 : index
    %c2_116 = arith.constant 2 : index
    %c0_117 = arith.constant 0 : index
    %112 = vector.load %arg3[%c1_114, %c1_115, %c2_116, %c0_117] : memref<2x3x3x4xf32, #tpu.memory_space<vmem>>, vector<1x1x1x4xf32>
    %113 = vector.shape_cast %112 : vector<1x1x1x4xf32> to vector<1x4xf32>
    %c1_118 = arith.constant 1 : index
    %c2_119 = arith.constant 2 : index
    %c0_120 = arith.constant 0 : index
    %114 = vector.load %arg6[%c1_118, %c2_119, %c0_120] : memref<18x18x4xf32, #tpu.memory_space<vmem>>, vector<16x16x4xf32>
    %115 = vector.shape_cast %113 : vector<1x4xf32> to vector<1x1x4xf32>
    %116 = vector.broadcast %115 : vector<1x1x4xf32> to vector<16x16x4xf32>
    %117 = arith.mulf %114, %116 : vector<16x16x4xf32>
    %118 = arith.addf %111, %117 : vector<16x16x4xf32>
    %c1_121 = arith.constant 1 : index
    %c2_122 = arith.constant 2 : index
    %c0_123 = arith.constant 0 : index
    %c0_124 = arith.constant 0 : index
    %119 = vector.load %arg3[%c1_121, %c2_122, %c0_123, %c0_124] : memref<2x3x3x4xf32, #tpu.memory_space<vmem>>, vector<1x1x1x4xf32>
    %120 = vector.shape_cast %119 : vector<1x1x1x4xf32> to vector<1x4xf32>
    %c2_125 = arith.constant 2 : index
    %c0_126 = arith.constant 0 : index
    %c0_127 = arith.constant 0 : index
    %121 = vector.load %arg6[%c2_125, %c0_126, %c0_127] : memref<18x18x4xf32, #tpu.memory_space<vmem>>, vector<16x16x4xf32>
    %122 = vector.shape_cast %120 : vector<1x4xf32> to vector<1x1x4xf32>
    %123 = vector.broadcast %122 : vector<1x1x4xf32> to vector<16x16x4xf32>
    %124 = arith.mulf %121, %123 : vector<16x16x4xf32>
    %125 = arith.addf %118, %124 : vector<16x16x4xf32>
    %c1_128 = arith.constant 1 : index
    %c2_129 = arith.constant 2 : index
    %c1_130 = arith.constant 1 : index
    %c0_131 = arith.constant 0 : index
    %126 = vector.load %arg3[%c1_128, %c2_129, %c1_130, %c0_131] : memref<2x3x3x4xf32, #tpu.memory_space<vmem>>, vector<1x1x1x4xf32>
    %127 = vector.shape_cast %126 : vector<1x1x1x4xf32> to vector<1x4xf32>
    %c2_132 = arith.constant 2 : index
    %c1_133 = arith.constant 1 : index
    %c0_134 = arith.constant 0 : index
    %128 = vector.load %arg6[%c2_132, %c1_133, %c0_134] : memref<18x18x4xf32, #tpu.memory_space<vmem>>, vector<16x16x4xf32>
    %129 = vector.shape_cast %127 : vector<1x4xf32> to vector<1x1x4xf32>
    %130 = vector.broadcast %129 : vector<1x1x4xf32> to vector<16x16x4xf32>
    %131 = arith.mulf %128, %130 : vector<16x16x4xf32>
    %132 = arith.addf %125, %131 : vector<16x16x4xf32>
    %c1_135 = arith.constant 1 : index
    %c2_136 = arith.constant 2 : index
    %c2_137 = arith.constant 2 : index
    %c0_138 = arith.constant 0 : index
    %133 = vector.load %arg3[%c1_135, %c2_136, %c2_137, %c0_138] : memref<2x3x3x4xf32, #tpu.memory_space<vmem>>, vector<1x1x1x4xf32>
    %134 = vector.shape_cast %133 : vector<1x1x1x4xf32> to vector<1x4xf32>
    %c2_139 = arith.constant 2 : index
    %c2_140 = arith.constant 2 : index
    %c0_141 = arith.constant 0 : index
    %135 = vector.load %arg6[%c2_139, %c2_140, %c0_141] : memref<18x18x4xf32, #tpu.memory_space<vmem>>, vector<16x16x4xf32>
    %136 = vector.shape_cast %134 : vector<1x4xf32> to vector<1x1x4xf32>
    %137 = vector.broadcast %136 : vector<1x1x4xf32> to vector<16x16x4xf32>
    %138 = arith.mulf %135, %137 : vector<16x16x4xf32>
    %139 = arith.addf %132, %138 : vector<16x16x4xf32>
    %c1_142 = arith.constant 1 : index
    %c0_143 = arith.constant 0 : index
    %140 = vector.load %arg4[%c1_142, %c0_143] : memref<2x4xf32, #tpu.memory_space<vmem>>, vector<1x4xf32>
    %141 = vector.shape_cast %140 : vector<1x4xf32> to vector<1x1x4xf32>
    %142 = vector.broadcast %141 : vector<1x1x4xf32> to vector<16x16x4xf32>
    %143 = arith.addf %139, %142 : vector<16x16x4xf32>
    %c1_144 = arith.constant 1 : index
    %c0_145 = arith.constant 0 : index
    %c0_146 = arith.constant 0 : index
    %c0_147 = arith.constant 0 : index
    %c0_148 = arith.constant 0 : index
    %144 = vector.load %arg5[%c1_144, %c0_145, %c0_146, %c0_147, %c0_148] : memref<2x1x16x16x4xf32, #tpu.memory_space<vmem>>, vector<1x1x16x16x4xf32>
    %145 = vector.shape_cast %144 : vector<1x1x16x16x4xf32> to vector<16x16x4xf32>
    %146 = vector.shape_cast %143 : vector<16x16x4xf32> to vector<1x1x16x16x4xf32>
    tpu.vector_store %arg5[%c1_144, %c0_145, %c0_146, %c0_147, %c0_148], %146 {strides = array<i32>} : memref<2x1x16x16x4xf32, #tpu.memory_space<vmem>>, vector<1x1x16x16x4xf32>,
    return
  }
  func.func @transform_0(%arg0: i32, %arg1: i32) -> (i32, i32, i32, i32) {
    %c0_i32 = arith.constant 0 : i32
    %c0_i32_0 = arith.constant 0 : i32
    %c0_i32_1 = arith.constant 0 : i32
    return %arg1, %c0_i32, %c0_i32_0, %arg0 : i32, i32, i32, i32
  }
  func.func @transform_1(%arg0: i32, %arg1: i32) -> (i32, i32, i32, i32) {
    %c0_i32 = arith.constant 0 : i32
    %c0_i32_0 = arith.constant 0 : i32
    %c0_i32_1 = arith.constant 0 : i32
    %c0_i32_2 = arith.constant 0 : i32
    return %c0_i32, %c0_i32_0, %c0_i32_1, %arg0 : i32, i32, i32, i32
  }
  func.func @transform_2(%arg0: i32, %arg1: i32) -> (i32, i32) {
    %c0_i32 = arith.constant 0 : i32
    %c0_i32_0 = arith.constant 0 : i32
    return %c0_i32, %arg0 : i32, i32
  }
  func.func @transform_3(%arg0: i32, %arg1: i32) -> (i32, i32, i32, i32, i32) {
    %c0_i32 = arith.constant 0 : i32
    %c0_i32_0 = arith.constant 0 : i32
    %c0_i32_1 = arith.constant 0 : i32
    %c0_i32_2 = arith.constant 0 : i32
    return %c0_i32, %arg1, %c0_i32_0, %c0_i32_1, %arg0 : i32, i32, i32, i32, i32
  }
}

</mosaic_0001>

<llo_original>
// kernel: tpu_custom_call.1
$region0: #{tpu_custom_call.1}
  #allocation0 [shape = 'u32[]', space=smem, size = 0x4, offset = 0x4, fixed_abs, tag = 'smem constant byte address 0x4 - core index']
  #allocation1 [shape = 'u32[144,128]{1,0:T(1,128)}', space=vmem, size = 0x12000, scoped, tag = 'internal scratch']
  #allocation2 [shape = 'f32[18,18,4]{2,1,0:T(8,128)}', space=vmem, size = 0x36000, scoped, tag = 'scratch operand']
  %s0 = inlined_call_operand.vmem [shape: f32[2,16,16,4], index: 0, kind: input, shape index: {}]
  %s1 = inlined_call_operand.vmem [shape: f32[2,3,3,4], index: 1, kind: input, shape index: {}]
  %s2 = inlined_call_operand.vmem [shape: f32[2,4], index: 2, kind: input, shape index: {}]
  %s3 = inlined_call_operand.vmem [shape: f32[2,2,16,16,4], index: 3, kind: output, shape index: {}]
  %s4 = sld [smem:[#allocation0]]
  $region79: #{tpu_custom_call.1} parent=0
    _
  %s6 = ssub.s32 1, %s4
  %s7 = scalar_select 0, %s6, %s4
  $region1: #{tpu_custom_call.1} parent=0
    #allocation3 [shape = 'u8[524288]{0}', space=vmem, size = 0x80000, scoped, tag = 'output window, operand 0']
    loop: start=0, step=1, limit=4
    $region2: #{tpu_custom_call.1} parent=1 // loop_pre_header
      _
    $region3: #{tpu_custom_call.1} parent=1 // loop_header
      %s9 = sphi 0, %s13
      %p10 = scmp.ge.s32.totalorder %s9, 4
      %s16 = sphi 0, %s28
      %s17 = sphi 0, %s24
      %s18 = sphi 0, %s16
      %s19 = sphi 0, %s17
      %s20 = sphi 0, %s18
      %s21 = sphi 0, %s19
      %s33 = sphi 0, %s35
      %s36 = sphi 0, %s33
      %s37 = sphi 0, %s36
      %s53 = sphi 0, %s37
      %s59 = sphi 0, %s61
      %s62 = sphi 0, %s59
      %s63 = sphi 0, %s62
      %s79 = sphi 0, %s63
      %s85 = sphi 0, %s87
      %s88 = sphi 0, %s85
      %s89 = sphi 0, %s88
      %s105 = sphi 0, %s89
      %s113 = sphi 0, %s115
      %s116 = sphi 0, %s113
      %s117 = sphi 0, %s116
      %s133 = sphi 0, %s117
    $region4: #{tpu_custom_call.1} parent=1 // loop_header_branch
      %12 = sbr.rel (%p10) target = $region8
    $region5: #{tpu_custom_call.1} parent=1 // loop_body
      %s14 = ssub.s32 %s9, 1
      %s15 = ssub.s32 %s9, 2
      %s22 = sadd.s32 1, %s17
      %p23 = scmp.ge.s32.totalorder %s22, 2
      %s24 = scalar_select %p23, 0, %s22
      %s25 = sadd.s32 1, %s16
      %s26 = scalar_select %p23, %s25, %s16
      %p27 = scmp.ge.s32.totalorder %s26, 1
      %s28 = scalar_select %p27, 0, %s26
      %s29 = ssub.s32 %s17, %s24
      %s30 = ssub.s32 %s16, %s28
      %s31 = sor.u32 %s29, %s30
      %p32 = scmp.eq.s32.totalorder %s31, 0
      %s34 = sadd.s32 %s33, 1
      %s35 = scalar_select %p32, %s33, %s34
      %p38 = pneg %p32
      %p39 = scmp.eq.s32.totalorder %s9, 1
      %p40 = por %p38, %p39
      %p41 = scmp.ne.s32.totalorder %s33, %s36
      %p42 = scmp.eq.s32.totalorder %s9, 0
      %p43 = por %p41, %p42
      %p44 = scmp.ne.s32.totalorder %s33, %s36
      %p45 = scmp.eq.s32.totalorder %s14, 1
      %p46 = por %p44, %p45
      %p47 = scmp.ne.s32.totalorder %s36, %s37
      %p48 = scmp.eq.s32.totalorder %s14, 0
      %p49 = por %p47, %p48
      %p50 = scmp.ne.s32.totalorder %s36, %s37
      %p51 = scmp.eq.s32.totalorder %s15, 1
      %p52 = por %p50, %p51
      %p54 = scmp.ne.s32.totalorder %s37, %s53
      %p55 = scmp.eq.s32.totalorder %s15, 0
      %p56 = por %p54, %p55
      %s57 = ssub.s32 %s16, %s28
      %p58 = scmp.eq.s32.totalorder %s57, 0
      %s60 = sadd.s32 %s59, 1
      %s61 = scalar_select %p58, %s59, %s60
      %p64 = pneg %p58
      %p65 = scmp.eq.s32.totalorder %s9, 1
      %p66 = por %p64, %p65
      %p67 = scmp.ne.s32.totalorder %s59, %s62
      %p68 = scmp.eq.s32.totalorder %s9, 0
      %p69 = por %p67, %p68
      %p70 = scmp.ne.s32.totalorder %s59, %s62
      %p71 = scmp.eq.s32.totalorder %s14, 1
      %p72 = por %p70, %p71
      %p73 = scmp.ne.s32.totalorder %s62, %s63
      %p74 = scmp.eq.s32.totalorder %s14, 0
      %p75 = por %p73, %p74
      %p76 = scmp.ne.s32.totalorder %s62, %s63
      %p77 = scmp.eq.s32.totalorder %s15, 1
      %p78 = por %p76, %p77
      %p80 = scmp.ne.s32.totalorder %s63, %s79
      %p81 = scmp.eq.s32.totalorder %s15, 0
      %p82 = por %p80, %p81
      %s83 = ssub.s32 %s16, %s28
      %p84 = scmp.eq.s32.totalorder %s83, 0
      %s86 = sadd.s32 %s85, 1
      %s87 = scalar_select %p84, %s85, %s86
      %p90 = pneg %p84
      %p91 = scmp.eq.s32.totalorder %s9, 1
      %p92 = por %p90, %p91
      %p93 = scmp.ne.s32.totalorder %s85, %s88
      %p94 = scmp.eq.s32.totalorder %s9, 0
      %p95 = por %p93, %p94
      %p96 = scmp.ne.s32.totalorder %s85, %s88
      %p97 = scmp.eq.s32.totalorder %s14, 1
      %p98 = por %p96, %p97
      %p99 = scmp.ne.s32.totalorder %s88, %s89
      %p100 = scmp.eq.s32.totalorder %s14, 0
      %p101 = por %p99, %p100
      %p102 = scmp.ne.s32.totalorder %s88, %s89
      %p103 = scmp.eq.s32.totalorder %s15, 1
      %p104 = por %p102, %p103
      %p106 = scmp.ne.s32.totalorder %s89, %s105
      %p107 = scmp.eq.s32.totalorder %s15, 0
      %p108 = por %p106, %p107
      %s109 = ssub.s32 %s17, %s24
      %s110 = ssub.s32 %s16, %s28
      %s111 = sor.u32 %s109, %s110
      %p112 = scmp.eq.s32.totalorder %s111, 0
      %s114 = sadd.s32 %s113, 1
      %s115 = scalar_select %p112, %s113, %s114
      %p118 = pneg %p112
      %p119 = scmp.eq.s32.totalorder %s9, 1
      %p120 = por %p118, %p119
      %p121 = scmp.ne.s32.totalorder %s113, %s116
      %p122 = scmp.eq.s32.totalorder %s9, 0
      %p123 = por %p121, %p122
      %p124 = scmp.ne.s32.totalorder %s113, %s116
      %p125 = scmp.eq.s32.totalorder %s14, 1
      %p126 = por %p124, %p125
      %p127 = scmp.ne.s32.totalorder %s116, %s117
      %p128 = scmp.eq.s32.totalorder %s14, 0
      %p129 = por %p127, %p128
      %p130 = scmp.ne.s32.totalorder %s116, %s117
      %p131 = scmp.eq.s32.totalorder %s15, 1
      %p132 = por %p130, %p131
      %p134 = scmp.ne.s32.totalorder %s117, %s133
      %p135 = scmp.eq.s32.totalorder %s15, 0
      %p136 = por %p134, %p135
      %p137 = scmp.le.s32.totalorder 1, %s9
      %p138 = scmp.lt.s32.totalorder %s9, 3
      %p139 = pnand %p137, %p138
      %p140 = pneg %p139
      // Predicated region
      $region9: #{tpu_custom_call.1} parent=5 // pred_check
        _
      $region10: #{tpu_custom_call.1} parent=5 // pred_check_branch
        %142 = sbr.rel (%p139) target = $region12
      $region11: #{tpu_custom_call.1} parent=5 // pred_region
        %s143 = ssub.s32 %s9, 1
        // Predicated region
        $region13: #{tpu_custom_call.1} parent=11 // pred_check
          %p144 = pneg %p75
        $region14: #{tpu_custom_call.1} parent=11 // pred_check_branch
          %146 = sbr.rel (%p144) target = $region16
        $region15: #{tpu_custom_call.1} parent=11 // pred_region
          %p147 = scmp.lt.s32.totalorder %s18, 0
          %s148 = scalar_select %p147, %s18, 0
          %s149 = smul.addr %s148, 4
          %s150 = scalar_lea.vmem %s1, %s149
        $region16: #{tpu_custom_call.1} parent=11 // pred_fallthru
          _
        // Predicated region
        $region17: #{tpu_custom_call.1} parent=11 // pred_check
          %p151 = pneg %p101
        $region18: #{tpu_custom_call.1} parent=11 // pred_check_branch
          %153 = sbr.rel (%p151) target = $region20
        $region19: #{tpu_custom_call.1} parent=11 // pred_region
          %p154 = scmp.lt.s32.totalorder %s18, 0
          %s155 = scalar_select %p154, %s18, 0
          %s156 = smul.addr %s155, 2
          %s157 = scalar_lea.vmem %s2, %s156
        $region20: #{tpu_custom_call.1} parent=11 // pred_fallthru
          _
      $region12: #{tpu_custom_call.1} parent=5 // pred_fallthru
        _
      %p158 = scmp.lt.s32.totalorder %s9, 2
      // Predicated region
      $region21: #{tpu_custom_call.1} parent=5 // pred_check
        %p159 = pneg %p158
      $region22: #{tpu_custom_call.1} parent=5 // pred_check_branch
        %161 = sbr.rel (%p159) target = $region24
      $region23: #{tpu_custom_call.1} parent=5 // pred_region
        // Predicated region
        $region25: #{tpu_custom_call.1} parent=23 // pred_check
          %p162 = pneg %p43
        $region26: #{tpu_custom_call.1} parent=23 // pred_check_branch
          %164 = sbr.rel (%p162) target = $region28
        $region27: #{tpu_custom_call.1} parent=23 // pred_region
          %p165 = scmp.lt.s32.totalorder %s17, 1
          %s166 = scalar_select %p165, %s17, 1
          %p167 = scmp.lt.s32.totalorder %s16, 0
          %s168 = scalar_select %p167, %s16, 0
          %s169 = smul.addr %s166, 32
          %s170 = sadd.s32 %s168, %s169
          %s171 = smul.addr %s170, 8
          %s172 = scalar_lea.vmem %s0, %s171
        $region28: #{tpu_custom_call.1} parent=23 // pred_fallthru
          _
      $region24: #{tpu_custom_call.1} parent=5 // pred_fallthru
        _
      %p173 = scmp.le.s32.totalorder 1, %s9
      %p174 = scmp.lt.s32.totalorder %s9, 3
      %p175 = pnand %p173, %p174
      %p176 = pneg %p175
      // Predicated region
      $region29: #{tpu_custom_call.1} parent=5 // pred_check
        _
      $region30: #{tpu_custom_call.1} parent=5 // pred_check_branch
        %178 = sbr.rel (%p175) target = $region32
      $region31: #{tpu_custom_call.1} parent=5 // pred_region
        %s179 = ssub.s32 %s9, 1
        %p180 = scmp.lt.s32.totalorder %s19, 1
        %s181 = scalar_select %p180, %s19, 1
        %p182 = scmp.lt.s32.totalorder %s18, 0
        %s183 = scalar_select %p182, %s18, 0
        %s184 = smul.addr %s181, 32
        %s185 = sadd.s32 %s183, %s184
        %s186 = smul.addr %s185, 8
        %s187 = scalar_lea.vmem %s0, %s186
        %p188 = pneg %p49
        %p189 = pneg %p46
        %p190 = scmp.lt.s32.totalorder %s18, 0
        %s191 = scalar_select %p190, %s18, 0
        %s192 = smul.addr %s191, 4
        %s193 = scalar_lea.vmem %s1, %s192
        %p194 = pneg %p75
        %p195 = pneg %p72
        %p196 = scmp.lt.s32.totalorder %s18, 0
        %s197 = scalar_select %p196, %s18, 0
        %s198 = smul.addr %s197, 2
        %s199 = scalar_lea.vmem %s2, %s198
        %p200 = pneg %p101
        %p201 = pneg %p98
        %p202 = pneg %p129
        %p203 = pneg %p126
        %s204 = sand.u32 %s116, 1
        %s205 = sand.u32 %s116, 1
        %s206 = smul.addr %s205, 512
        %s207 = scalar_lea.vmem [#allocation3], %s206
        %p208 = scmp.lt.s32.totalorder %s19, 1
        %s209 = scalar_select %p208, %s19, 1
        %p210 = scmp.lt.s32.totalorder %s18, 0
        %s211 = scalar_select %p210, %s18, 0
        %s212 = smul.addr %s209, 32
        %s213 = sadd.s32 %s211, %s212
        %s214 = smul.addr %s213, 8
        %s215 = scalar_lea.vmem %s0, %s214
        %p216 = scmp.lt.s32.totalorder %s18, 0
        %s217 = scalar_select %p216, %s18, 0
        %s218 = smul.addr %s217, 4
        %s219 = scalar_lea.vmem %s1, %s218
        %p220 = scmp.lt.s32.totalorder %s18, 0
        %s221 = scalar_select %p220, %s18, 0
        %s222 = smul.addr %s221, 2
        %s223 = scalar_lea.vmem %s2, %s222
        %vm224 = vcmask 31744
        %225 = vst.msk [vmem:[#allocation2] sm:$0xff] %vm224, 0.0
        %226 = vst.msk [vmem:[#allocation2 + $0x8] sm:$0xff] %vm224, 0.0
        %vm227 = vcmask 25600
        %228 = vst.msk [vmem:[#allocation2 + $0x10] sm:$0x3] %vm227, 0.0
        %229 = vst.msk [vmem:[#allocation2 + $0x18] sm:$0xff] %vm224, 0.0
        %230 = vst.msk [vmem:[#allocation2 + $0x20] sm:$0xff] %vm224, 0.0
        %231 = vst.msk [vmem:[#allocation2 + $0x28] sm:$0x3] %vm227, 0.0
        %232 = vst.msk [vmem:[#allocation2 + $0x30] sm:$0xff] %vm224, 0.0
        %233 = vst.msk [vmem:[#allocation2 + $0x38] sm:$0xff] %vm224, 0.0
        %234 = vst.msk [vmem:[#allocation2 + $0x40] sm:$0x3] %vm227, 0.0
        %235 = vst.msk [vmem:[#allocation2 + $0x48] sm:$0xff] %vm224, 0.0
        %236 = vst.msk [vmem:[#allocation2 + $0x50] sm:$0xff] %vm224, 0.0
        %237 = vst.msk [vmem:[#allocation2 + $0x58] sm:$0x3] %vm227, 0.0
        %238 = vst.msk [vmem:[#allocation2 + $0x60] sm:$0xff] %vm224, 0.0
        %239 = vst.msk [vmem:[#allocation2 + $0x68] sm:$0xff] %vm224, 0.0
        %240 = vst.msk [vmem:[#allocation2 + $0x70] sm:$0x3] %vm227, 0.0
        %241 = vst.msk [vmem:[#allocation2 + $0x78] sm:$0xff] %vm224, 0.0
        %242 = vst.msk [vmem:[#allocation2 + $0x80] sm:$0xff] %vm224, 0.0
        %243 = vst.msk [vmem:[#allocation2 + $0x88] sm:$0x3] %vm227, 0.0
        %244 = vst.msk [vmem:[#allocation2 + $0x90] sm:$0xff] %vm224, 0.0
        %245 = vst.msk [vmem:[#allocation2 + $0x98] sm:$0xff] %vm224, 0.0
        %246 = vst.msk [vmem:[#allocation2 + $0xa0] sm:$0x3] %vm227, 0.0
        %247 = vst.msk [vmem:[#allocation2 + $0xa8] sm:$0xff] %vm224, 0.0
        %248 = vst.msk [vmem:[#allocation2 + $0xb0] sm:$0xff] %vm224, 0.0
        %249 = vst.msk [vmem:[#allocation2 + $0xb8] sm:$0x3] %vm227, 0.0
        %250 = vst.msk [vmem:[#allocation2 + $0xc0] sm:$0xff] %vm224, 0.0
        %251 = vst.msk [vmem:[#allocation2 + $0xc8] sm:$0xff] %vm224, 0.0
        %252 = vst.msk [vmem:[#allocation2 + $0xd0] sm:$0x3] %vm227, 0.0
        %253 = vst.msk [vmem:[#allocation2 + $0xd8] sm:$0xff] %vm224, 0.0
        %254 = vst.msk [vmem:[#allocation2 + $0xe0] sm:$0xff] %vm224, 0.0
        %255 = vst.msk [vmem:[#allocation2 + $0xe8] sm:$0x3] %vm227, 0.0
        %256 = vst.msk [vmem:[#allocation2 + $0xf0] sm:$0xff] %vm224, 0.0
        %257 = vst.msk [vmem:[#allocation2 + $0xf8] sm:$0xff] %vm224, 0.0
        %258 = vst.msk [vmem:[#allocation2 + $0x100] sm:$0x3] %vm227, 0.0
        %259 = vst.msk [vmem:[#allocation2 + $0x108] sm:$0xff] %vm224, 0.0
        %260 = vst.msk [vmem:[#allocation2 + $0x110] sm:$0xff] %vm224, 0.0
        %261 = vst.msk [vmem:[#allocation2 + $0x118] sm:$0x3] %vm227, 0.0
        %262 = vst.msk [vmem:[#allocation2 + $0x120] sm:$0xff] %vm224, 0.0
        %263 = vst.msk [vmem:[#allocation2 + $0x128] sm:$0xff] %vm224, 0.0
        %264 = vst.msk [vmem:[#allocation2 + $0x130] sm:$0x3] %vm227, 0.0
        %265 = vst.msk [vmem:[#allocation2 + $0x138] sm:$0xff] %vm224, 0.0
        %266 = vst.msk [vmem:[#allocation2 + $0x140] sm:$0xff] %vm224, 0.0
        %267 = vst.msk [vmem:[#allocation2 + $0x148] sm:$0x3] %vm227, 0.0
        %268 = vst.msk [vmem:[#allocation2 + $0x150] sm:$0xff] %vm224, 0.0
        %269 = vst.msk [vmem:[#allocation2 + $0x158] sm:$0xff] %vm224, 0.0
        %270 = vst.msk [vmem:[#allocation2 + $0x160] sm:$0x3] %vm227, 0.0
        %271 = vst.msk [vmem:[#allocation2 + $0x168] sm:$0xff] %vm224, 0.0
        %272 = vst.msk [vmem:[#allocation2 + $0x170] sm:$0xff] %vm224, 0.0
        %273 = vst.msk [vmem:[#allocation2 + $0x178] sm:$0x3] %vm227, 0.0
        %274 = vst.msk [vmem:[#allocation2 + $0x180] sm:$0xff] %vm224, 0.0
        %275 = vst.msk [vmem:[#allocation2 + $0x188] sm:$0xff] %vm224, 0.0
        %276 = vst.msk [vmem:[#allocation2 + $0x190] sm:$0x3] %vm227, 0.0
        %277 = vst.msk [vmem:[#allocation2 + $0x198] sm:$0xff] %vm224, 0.0
        %278 = vst.msk [vmem:[#allocation2 + $0x1a0] sm:$0xff] %vm224, 0.0
        %279 = vst.msk [vmem:[#allocation2 + $0x1a8] sm:$0x3] %vm227, 0.0
        %v280 = vld [vmem:[%s215] sm:$0xff]
        %v281 = vld [vmem:[%s215 + $0x8] sm:$0xff]
        %v282 = vld [vmem:[%s215 + $0x10] sm:$0xff]
        %v283 = vld [vmem:[%s215 + $0x18] sm:$0xff]
        %v284 = vld [vmem:[%s215 + $0x20] sm:$0xff]
        %v285 = vld [vmem:[%s215 + $0x28] sm:$0xff]
        %v286 = vld [vmem:[%s215 + $0x30] sm:$0xff]
        %v287 = vld [vmem:[%s215 + $0x38] sm:$0xff]
        %v288 = vld [vmem:[%s215 + $0x40] sm:$0xff]
        %v289 = vld [vmem:[%s215 + $0x48] sm:$0xff]
        %v290 = vld [vmem:[%s215 + $0x50] sm:$0xff]
        %v291 = vld [vmem:[%s215 + $0x58] sm:$0xff]
        %v292 = vld [vmem:[%s215 + $0x60] sm:$0xff]
        %v293 = vld [vmem:[%s215 + $0x68] sm:$0xff]
        %v294 = vld [vmem:[%s215 + $0x70] sm:$0xff]
        %v295 = vld [vmem:[%s215 + $0x78] sm:$0xff]
        %v296 = vld [vmem:[%s215 + $0x80] sm:$0xff]
        %v297 = vld [vmem:[%s215 + $0x88] sm:$0xff]
        %v298 = vld [vmem:[%s215 + $0x90] sm:$0xff]
        %v299 = vld [vmem:[%s215 + $0x98] sm:$0xff]
        %v300 = vld [vmem:[%s215 + $0xa0] sm:$0xff]
        %v301 = vld [vmem:[%s215 + $0xa8] sm:$0xff]
        %v302 = vld [vmem:[%s215 + $0xb0] sm:$0xff]
        %v303 = vld [vmem:[%s215 + $0xb8] sm:$0xff]
        %v304 = vld [vmem:[%s215 + $0xc0] sm:$0xff]
        %v305 = vld [vmem:[%s215 + $0xc8] sm:$0xff]
        %v306 = vld [vmem:[%s215 + $0xd0] sm:$0xff]
        %v307 = vld [vmem:[%s215 + $0xd8] sm:$0xff]
        %v308 = vld [vmem:[%s215 + $0xe0] sm:$0xff]
        %v309 = vld [vmem:[%s215 + $0xe8] sm:$0xff]
        %v310 = vld [vmem:[%s215 + $0xf0] sm:$0xff]
        %v311 = vld [vmem:[%s215 + $0xf8] sm:$0xff]
        %s312 = scalar_lea.vmem [#allocation2], 24
        %313 = vst.msk [vmem:[%s312 + $0x1] sm:$0xff] %vm224, %v280
        %314 = vst.msk [vmem:[%s312 + $0x9] sm:$0xff] %vm224, %v281
        %315 = vst.msk [vmem:[%s312 + $0x19] sm:$0xff] %vm224, %v282
        %316 = vst.msk [vmem:[%s312 + $0x21] sm:$0xff] %vm224, %v283
        %317 = vst.msk [vmem:[%s312 + $0x31] sm:$0xff] %vm224, %v284
        %318 = vst.msk [vmem:[%s312 + $0x39] sm:$0xff] %vm224, %v285
        %319 = vst.msk [vmem:[%s312 + $0x49] sm:$0xff] %vm224, %v286
        %320 = vst.msk [vmem:[%s312 + $0x51] sm:$0xff] %vm224, %v287
        %321 = vst.msk [vmem:[%s312 + $0x61] sm:$0xff] %vm224, %v288
        %322 = vst.msk [vmem:[%s312 + $0x69] sm:$0xff] %vm224, %v289
        %323 = vst.msk [vmem:[%s312 + $0x79] sm:$0xff] %vm224, %v290
        %324 = vst.msk [vmem:[%s312 + $0x81] sm:$0xff] %vm224, %v291
        %325 = vst.msk [vmem:[%s312 + $0x91] sm:$0xff] %vm224, %v292
        %326 = vst.msk [vmem:[%s312 + $0x99] sm:$0xff] %vm224, %v293
        %327 = vst.msk [vmem:[%s312 + $0xa9] sm:$0xff] %vm224, %v294
        %328 = vst.msk [vmem:[%s312 + $0xb1] sm:$0xff] %vm224, %v295
        %329 = vst.msk [vmem:[%s312 + $0xc1] sm:$0xff] %vm224, %v296
        %330 = vst.msk [vmem:[%s312 + $0xc9] sm:$0xff] %vm224, %v297
        %331 = vst.msk [vmem:[%s312 + $0xd9] sm:$0xff] %vm224, %v298
        %332 = vst.msk [vmem:[%s312 + $0xe1] sm:$0xff] %vm224, %v299
        %333 = vst.msk [vmem:[%s312 + $0xf1] sm:$0xff] %vm224, %v300
        %334 = vst.msk [vmem:[%s312 + $0xf9] sm:$0xff] %vm224, %v301
        %335 = vst.msk [vmem:[%s312 + $0x109] sm:$0xff] %vm224, %v302
        %336 = vst.msk [vmem:[%s312 + $0x111] sm:$0xff] %vm224, %v303
        %337 = vst.msk [vmem:[%s312 + $0x121] sm:$0xff] %vm224, %v304
        %338 = vst.msk [vmem:[%s312 + $0x129] sm:$0xff] %vm224, %v305
        %339 = vst.msk [vmem:[%s312 + $0x139] sm:$0xff] %vm224, %v306
        %340 = vst.msk [vmem:[%s312 + $0x141] sm:$0xff] %vm224, %v307
        %341 = vst.msk [vmem:[%s312 + $0x151] sm:$0xff] %vm224, %v308
        %342 = vst.msk [vmem:[%s312 + $0x159] sm:$0xff] %vm224, %v309
        %343 = vst.msk [vmem:[%s312 + $0x169] sm:$0xff] %vm224, %v310
        %344 = vst.msk [vmem:[%s312 + $0x171] sm:$0xff] %vm224, %v311
        %v345 = vld [vmem:[%s219] sm:$0x1]
        %v346 = vld [vmem:[#allocation2] sm:$0xff]
        %v347 = vld [vmem:[#allocation2 + $0x8] sm:$0xff]
        %v348 = vld [vmem:[#allocation2 + $0x18] sm:$0xff]
        %v349 = vld [vmem:[#allocation2 + $0x20] sm:$0xff]
        %v350 = vld [vmem:[#allocation2 + $0x30] sm:$0xff]
        %v351 = vld [vmem:[#allocation2 + $0x38] sm:$0xff]
        %v352 = vld [vmem:[#allocation2 + $0x48] sm:$0xff]
        %v353 = vld [vmem:[#allocation2 + $0x50] sm:$0xff]
        %v354 = vld [vmem:[#allocation2 + $0x60] sm:$0xff]
        %v355 = vld [vmem:[#allocation2 + $0x68] sm:$0xff]
        %v356 = vld [vmem:[#allocation2 + $0x78] sm:$0xff]
        %v357 = vld [vmem:[#allocation2 + $0x80] sm:$0xff]
        %v358 = vld [vmem:[#allocation2 + $0x90] sm:$0xff]
        %v359 = vld [vmem:[#allocation2 + $0x98] sm:$0xff]
        %v360 = vld [vmem:[#allocation2 + $0xa8] sm:$0xff]
        %v361 = vld [vmem:[#allocation2 + $0xb0] sm:$0xff]
        %v362 = vld [vmem:[#allocation2 + $0xc0] sm:$0xff]
        %v363 = vld [vmem:[#allocation2 + $0xc8] sm:$0xff]
        %v364 = vld [vmem:[#allocation2 + $0xd8] sm:$0xff]
        %v365 = vld [vmem:[#allocation2 + $0xe0] sm:$0xff]
        %v366 = vld [vmem:[#allocation2 + $0xf0] sm:$0xff]
        %v367 = vld [vmem:[#allocation2 + $0xf8] sm:$0xff]
        %v368 = vld [vmem:[#allocation2 + $0x108] sm:$0xff]
        %v369 = vld [vmem:[#allocation2 + $0x110] sm:$0xff]
        %v370 = vld [vmem:[#allocation2 + $0x120] sm:$0xff]
        %v371 = vld [vmem:[#allocation2 + $0x128] sm:$0xff]
        %v372 = vld [vmem:[#allocation2 + $0x138] sm:$0xff]
        %v373 = vld [vmem:[#allocation2 + $0x140] sm:$0xff]
        %v374 = vld [vmem:[#allocation2 + $0x150] sm:$0xff]
        %v375 = vld [vmem:[#allocation2 + $0x158] sm:$0xff]
        %v376 = vld [vmem:[#allocation2 + $0x168] sm:$0xff]
        %v377 = vld [vmem:[#allocation2 + $0x170] sm:$0xff]
        %v378 = vlaneseq
        %v379 = vshrl.u32 %v378, 7
        %v380 = vsub.s32 0, %v379
        %v381 = vrot.slane %v345, %v380
        %v382 = vmul.f32 %v346, %v381
        %v383 = vmul.f32 %v347, %v381
        %v384 = vmul.f32 %v348, %v381
        %v385 = vmul.f32 %v349, %v381
        %v386 = vmul.f32 %v350, %v381
        %v387 = vmul.f32 %v351, %v381
        %v388 = vmul.f32 %v352, %v381
        %v389 = vmul.f32 %v353, %v381
        %v390 = vmul.f32 %v354, %v381
        %v391 = vmul.f32 %v355, %v381
        %v392 = vmul.f32 %v356, %v381
        %v393 = vmul.f32 %v357, %v381
        %v394 = vmul.f32 %v358, %v381
        %v395 = vmul.f32 %v359, %v381
        %v396 = vmul.f32 %v360, %v381
        %v397 = vmul.f32 %v361, %v381
        %v398 = vmul.f32 %v362, %v381
        %v399 = vmul.f32 %v363, %v381
        %v400 = vmul.f32 %v364, %v381
        %v401 = vmul.f32 %v365, %v381
        %v402 = vmul.f32 %v366, %v381
        %v403 = vmul.f32 %v367, %v381
        %v404 = vmul.f32 %v368, %v381
        %v405 = vmul.f32 %v369, %v381
        %v406 = vmul.f32 %v370, %v381
        %v407 = vmul.f32 %v371, %v381
        %v408 = vmul.f32 %v372, %v381
        %v409 = vmul.f32 %v373, %v381
        %v410 = vmul.f32 %v374, %v381
        %v411 = vmul.f32 %v375, %v381
        %v412 = vmul.f32 %v376, %v381
        %v413 = vmul.f32 %v377, %v381
        %v414 = vadd.f32 %v382, 0.0
        %v415 = vadd.f32 %v383, 0.0
        %v416 = vadd.f32 %v384, 0.0
        %v417 = vadd.f32 %v385, 0.0
        %v418 = vadd.f32 %v386, 0.0
        %v419 = vadd.f32 %v387, 0.0
        %v420 = vadd.f32 %v388, 0.0
        %v421 = vadd.f32 %v389, 0.0
        %v422 = vadd.f32 %v390, 0.0
        %v423 = vadd.f32 %v391, 0.0
        %v424 = vadd.f32 %v392, 0.0
        %v425 = vadd.f32 %v393, 0.0
        %v426 = vadd.f32 %v394, 0.0
        %v427 = vadd.f32 %v395, 0.0
        %v428 = vadd.f32 %v396, 0.0
        %v429 = vadd.f32 %v397, 0.0
        %v430 = vadd.f32 %v398, 0.0
        %v431 = vadd.f32 %v399, 0.0
        %v432 = vadd.f32 %v400, 0.0
        %v433 = vadd.f32 %v401, 0.0
        %v434 = vadd.f32 %v402, 0.0
        %v435 = vadd.f32 %v403, 0.0
        %v436 = vadd.f32 %v404, 0.0
        %v437 = vadd.f32 %v405, 0.0
        %v438 = vadd.f32 %v406, 0.0
        %v439 = vadd.f32 %v407, 0.0
        %v440 = vadd.f32 %v408, 0.0
        %v441 = vadd.f32 %v409, 0.0
        %v442 = vadd.f32 %v410, 0.0
        %v443 = vadd.f32 %v411, 0.0
        %v444 = vadd.f32 %v412, 0.0
        %v445 = vadd.f32 %v413, 0.0
        %v446 = vld [vmem:[%s219 + $0x1] sm:$0x1]
        %v447 = vld [vmem:[#allocation2 + $0x1] sm:$0xff]
        %v448 = vld [vmem:[#allocation2 + $0x9] sm:$0xff]
        %v449 = vld [vmem:[#allocation2 + $0x19] sm:$0xff]
        %v450 = vld [vmem:[#allocation2 + $0x21] sm:$0xff]
        %v451 = vld [vmem:[#allocation2 + $0x31] sm:$0xff]
        %v452 = vld [vmem:[#allocation2 + $0x39] sm:$0xff]
        %v453 = vld [vmem:[#allocation2 + $0x49] sm:$0xff]
        %v454 = vld [vmem:[#allocation2 + $0x51] sm:$0xff]
        %v455 = vld [vmem:[#allocation2 + $0x61] sm:$0xff]
        %v456 = vld [vmem:[#allocation2 + $0x69] sm:$0xff]
        %v457 = vld [vmem:[#allocation2 + $0x79] sm:$0xff]
        %v458 = vld [vmem:[#allocation2 + $0x81] sm:$0xff]
        %v459 = vld [vmem:[#allocation2 + $0x91] sm:$0xff]
        %v460 = vld [vmem:[#allocation2 + $0x99] sm:$0xff]
        %v461 = vld [vmem:[#allocation2 + $0xa9] sm:$0xff]
        %v462 = vld [vmem:[#allocation2 + $0xb1] sm:$0xff]
        %v463 = vld [vmem:[#allocation2 + $0xc1] sm:$0xff]
        %v464 = vld [vmem:[#allocation2 + $0xc9] sm:$0xff]
        %v465 = vld [vmem:[#allocation2 + $0xd9] sm:$0xff]
        %v466 = vld [vmem:[#allocation2 + $0xe1] sm:$0xff]
        %v467 = vld [vmem:[#allocation2 + $0xf1] sm:$0xff]
        %v468 = vld [vmem:[#allocation2 + $0xf9] sm:$0xff]
        %v469 = vld [vmem:[#allocation2 + $0x109] sm:$0xff]
        %v470 = vld [vmem:[#allocation2 + $0x111] sm:$0xff]
        %v471 = vld [vmem:[#allocation2 + $0x121] sm:$0xff]
        %v472 = vld [vmem:[#allocation2 + $0x129] sm:$0xff]
        %v473 = vld [vmem:[#allocation2 + $0x139] sm:$0xff]
        %v474 = vld [vmem:[#allocation2 + $0x141] sm:$0xff]
        %v475 = vld [vmem:[#allocation2 + $0x151] sm:$0xff]
        %v476 = vld [vmem:[#allocation2 + $0x159] sm:$0xff]
        %v477 = vld [vmem:[#allocation2 + $0x169] sm:$0xff]
        %v478 = vld [vmem:[#allocation2 + $0x171] sm:$0xff]
        %v479 = vlaneseq
        %v480 = vshrl.u32 %v479, 7
        %v481 = vsub.s32 0, %v480
        %v482 = vrot.slane %v446, %v481
        %v483 = vmul.f32 %v447, %v482
        %v484 = vmul.f32 %v448, %v482
        %v485 = vmul.f32 %v449, %v482
        %v486 = vmul.f32 %v450, %v482
        %v487 = vmul.f32 %v451, %v482
        %v488 = vmul.f32 %v452, %v482
        %v489 = vmul.f32 %v453, %v482
        %v490 = vmul.f32 %v454, %v482
        %v491 = vmul.f32 %v455, %v482
        %v492 = vmul.f32 %v456, %v482
        %v493 = vmul.f32 %v457, %v482
        %v494 = vmul.f32 %v458, %v482
        %v495 = vmul.f32 %v459, %v482
        %v496 = vmul.f32 %v460, %v482
        %v497 = vmul.f32 %v461, %v482
        %v498 = vmul.f32 %v462, %v482
        %v499 = vmul.f32 %v463, %v482
        %v500 = vmul.f32 %v464, %v482
        %v501 = vmul.f32 %v465, %v482
        %v502 = vmul.f32 %v466, %v482
        %v503 = vmul.f32 %v467, %v482
        %v504 = vmul.f32 %v468, %v482
        %v505 = vmul.f32 %v469, %v482
        %v506 = vmul.f32 %v470, %v482
        %v507 = vmul.f32 %v471, %v482
        %v508 = vmul.f32 %v472, %v482
        %v509 = vmul.f32 %v473, %v482
        %v510 = vmul.f32 %v474, %v482
        %v511 = vmul.f32 %v475, %v482
        %v512 = vmul.f32 %v476, %v482
        %v513 = vmul.f32 %v477, %v482
        %v514 = vmul.f32 %v478, %v482
        %v515 = vadd.f32 %v414, %v483
        %v516 = vadd.f32 %v415, %v484
        %v517 = vadd.f32 %v416, %v485
        %v518 = vadd.f32 %v417, %v486
        %v519 = vadd.f32 %v418, %v487
        %v520 = vadd.f32 %v419, %v488
        %v521 = vadd.f32 %v420, %v489
        %v522 = vadd.f32 %v421, %v490
        %v523 = vadd.f32 %v422, %v491
        %v524 = vadd.f32 %v423, %v492
        %v525 = vadd.f32 %v424, %v493
        %v526 = vadd.f32 %v425, %v494
        %v527 = vadd.f32 %v426, %v495
        %v528 = vadd.f32 %v427, %v496
        %v529 = vadd.f32 %v428, %v497
        %v530 = vadd.f32 %v429, %v498
        %v531 = vadd.f32 %v430, %v499
        %v532 = vadd.f32 %v431, %v500
        %v533 = vadd.f32 %v432, %v501
        %v534 = vadd.f32 %v433, %v502
        %v535 = vadd.f32 %v434, %v503
        %v536 = vadd.f32 %v435, %v504
        %v537 = vadd.f32 %v436, %v505
        %v538 = vadd.f32 %v437, %v506
        %v539 = vadd.f32 %v438, %v507
        %v540 = vadd.f32 %v439, %v508
        %v541 = vadd.f32 %v440, %v509
        %v542 = vadd.f32 %v441, %v510
        %v543 = vadd.f32 %v442, %v511
        %v544 = vadd.f32 %v443, %v512
        %v545 = vadd.f32 %v444, %v513
        %v546 = vadd.f32 %v445, %v514
        %v547 = vld [vmem:[%s219 + $0x2] sm:$0x1]
        %v548 = vld [vmem:[#allocation2 + $0x2] sm:$0xff]
        %v549 = vld [vmem:[#allocation2 + $0xa] sm:$0xff]
        %v550 = vld [vmem:[#allocation2 + $0x1a] sm:$0xff]
        %v551 = vld [vmem:[#allocation2 + $0x22] sm:$0xff]
        %v552 = vld [vmem:[#allocation2 + $0x32] sm:$0xff]
        %v553 = vld [vmem:[#allocation2 + $0x3a] sm:$0xff]
        %v554 = vld [vmem:[#allocation2 + $0x4a] sm:$0xff]
        %v555 = vld [vmem:[#allocation2 + $0x52] sm:$0xff]
        %v556 = vld [vmem:[#allocation2 + $0x62] sm:$0xff]
        %v557 = vld [vmem:[#allocation2 + $0x6a] sm:$0xff]
        %v558 = vld [vmem:[#allocation2 + $0x7a] sm:$0xff]
        %v559 = vld [vmem:[#allocation2 + $0x82] sm:$0xff]
        %v560 = vld [vmem:[#allocation2 + $0x92] sm:$0xff]
        %v561 = vld [vmem:[#allocation2 + $0x9a] sm:$0xff]
        %v562 = vld [vmem:[#allocation2 + $0xaa] sm:$0xff]
        %v563 = vld [vmem:[#allocation2 + $0xb2] sm:$0xff]
        %v564 = vld [vmem:[#allocation2 + $0xc2] sm:$0xff]
        %v565 = vld [vmem:[#allocation2 + $0xca] sm:$0xff]
        %v566 = vld [vmem:[#allocation2 + $0xda] sm:$0xff]
        %v567 = vld [vmem:[#allocation2 + $0xe2] sm:$0xff]
        %v568 = vld [vmem:[#allocation2 + $0xf2] sm:$0xff]
        %v569 = vld [vmem:[#allocation2 + $0xfa] sm:$0xff]
        %v570 = vld [vmem:[#allocation2 + $0x10a] sm:$0xff]
        %v571 = vld [vmem:[#allocation2 + $0x112] sm:$0xff]
        %v572 = vld [vmem:[#allocation2 + $0x122] sm:$0xff]
        %v573 = vld [vmem:[#allocation2 + $0x12a] sm:$0xff]
        %v574 = vld [vmem:[#allocation2 + $0x13a] sm:$0xff]
        %v575 = vld [vmem:[#allocation2 + $0x142] sm:$0xff]
        %v576 = vld [vmem:[#allocation2 + $0x152] sm:$0xff]
        %v577 = vld [vmem:[#allocation2 + $0x15a] sm:$0xff]
        %v578 = vld [vmem:[#allocation2 + $0x16a] sm:$0xff]
        %v579 = vld [vmem:[#allocation2 + $0x172] sm:$0xff]
        %v580 = vlaneseq
        %v581 = vshrl.u32 %v580, 7
        %v582 = vsub.s32 0, %v581
        %v583 = vrot.slane %v547, %v582
        %v584 = vmul.f32 %v548, %v583
        %v585 = vmul.f32 %v549, %v583
        %v586 = vmul.f32 %v550, %v583
        %v587 = vmul.f32 %v551, %v583
        %v588 = vmul.f32 %v552, %v583
        %v589 = vmul.f32 %v553, %v583
        %v590 = vmul.f32 %v554, %v583
        %v591 = vmul.f32 %v555, %v583
        %v592 = vmul.f32 %v556, %v583
        %v593 = vmul.f32 %v557, %v583
        %v594 = vmul.f32 %v558, %v583
        %v595 = vmul.f32 %v559, %v583
        %v596 = vmul.f32 %v560, %v583
        %v597 = vmul.f32 %v561, %v583
        %v598 = vmul.f32 %v562, %v583
        %v599 = vmul.f32 %v563, %v583
        %v600 = vmul.f32 %v564, %v583
        %v601 = vmul.f32 %v565, %v583
        %v602 = vmul.f32 %v566, %v583
        %v603 = vmul.f32 %v567, %v583
        %v604 = vmul.f32 %v568, %v583
        %v605 = vmul.f32 %v569, %v583
        %v606 = vmul.f32 %v570, %v583
        %v607 = vmul.f32 %v571, %v583
        %v608 = vmul.f32 %v572, %v583
        %v609 = vmul.f32 %v573, %v583
        %v610 = vmul.f32 %v574, %v583
        %v611 = vmul.f32 %v575, %v583
        %v612 = vmul.f32 %v576, %v583
        %v613 = vmul.f32 %v577, %v583
        %v614 = vmul.f32 %v578, %v583
        %v615 = vmul.f32 %v579, %v583
        %v616 = vadd.f32 %v515, %v584
        %v617 = vadd.f32 %v516, %v585
        %v618 = vadd.f32 %v517, %v586
        %v619 = vadd.f32 %v518, %v587
        %v620 = vadd.f32 %v519, %v588
        %v621 = vadd.f32 %v520, %v589
        %v622 = vadd.f32 %v521, %v590
        %v623 = vadd.f32 %v522, %v591
        %v624 = vadd.f32 %v523, %v592
        %v625 = vadd.f32 %v524, %v593
        %v626 = vadd.f32 %v525, %v594
        %v627 = vadd.f32 %v526, %v595
        %v628 = vadd.f32 %v527, %v596
        %v629 = vadd.f32 %v528, %v597
        %v630 = vadd.f32 %v529, %v598
        %v631 = vadd.f32 %v530, %v599
        %v632 = vadd.f32 %v531, %v600
        %v633 = vadd.f32 %v532, %v601
        %v634 = vadd.f32 %v533, %v602
        %v635 = vadd.f32 %v534, %v603
        %v636 = vadd.f32 %v535, %v604
        %v637 = vadd.f32 %v536, %v605
        %v638 = vadd.f32 %v537, %v606
        %v639 = vadd.f32 %v538, %v607
        %v640 = vadd.f32 %v539, %v608
        %v641 = vadd.f32 %v540, %v609
        %v642 = vadd.f32 %v541, %v610
        %v643 = vadd.f32 %v542, %v611
        %v644 = vadd.f32 %v543, %v612
        %v645 = vadd.f32 %v544, %v613
        %v646 = vadd.f32 %v545, %v614
        %v647 = vadd.f32 %v546, %v615
        %s648 = scalar_lea.vmem %s219, 4
        %v649 = vld [vmem:[%s648] sm:$0x1]
        %v650 = vld [vmem:[%s312] sm:$0xff]
        %v651 = vld [vmem:[%s312 + $0x8] sm:$0xff]
        %v652 = vld [vmem:[%s312 + $0x18] sm:$0xff]
        %v653 = vld [vmem:[%s312 + $0x20] sm:$0xff]
        %v654 = vld [vmem:[%s312 + $0x30] sm:$0xff]
        %v655 = vld [vmem:[%s312 + $0x38] sm:$0xff]
        %v656 = vld [vmem:[%s312 + $0x48] sm:$0xff]
        %v657 = vld [vmem:[%s312 + $0x50] sm:$0xff]
        %v658 = vld [vmem:[%s312 + $0x60] sm:$0xff]
        %v659 = vld [vmem:[%s312 + $0x68] sm:$0xff]
        %v660 = vld [vmem:[%s312 + $0x78] sm:$0xff]
        %v661 = vld [vmem:[%s312 + $0x80] sm:$0xff]
        %v662 = vld [vmem:[%s312 + $0x90] sm:$0xff]
        %v663 = vld [vmem:[%s312 + $0x98] sm:$0xff]
        %v664 = vld [vmem:[%s312 + $0xa8] sm:$0xff]
        %v665 = vld [vmem:[%s312 + $0xb0] sm:$0xff]
        %v666 = vld [vmem:[%s312 + $0xc0] sm:$0xff]
        %v667 = vld [vmem:[%s312 + $0xc8] sm:$0xff]
        %v668 = vld [vmem:[%s312 + $0xd8] sm:$0xff]
        %v669 = vld [vmem:[%s312 + $0xe0] sm:$0xff]
        %v670 = vld [vmem:[%s312 + $0xf0] sm:$0xff]
        %v671 = vld [vmem:[%s312 + $0xf8] sm:$0xff]
        %v672 = vld [vmem:[%s312 + $0x108] sm:$0xff]
        %v673 = vld [vmem:[%s312 + $0x110] sm:$0xff]
        %v674 = vld [vmem:[%s312 + $0x120] sm:$0xff]
        %v675 = vld [vmem:[%s312 + $0x128] sm:$0xff]
        %v676 = vld [vmem:[%s312 + $0x138] sm:$0xff]
        %v677 = vld [vmem:[%s312 + $0x140] sm:$0xff]
        %v678 = vld [vmem:[%s312 + $0x150] sm:$0xff]
        %v679 = vld [vmem:[%s312 + $0x158] sm:$0xff]
        %v680 = vld [vmem:[%s312 + $0x168] sm:$0xff]
        %v681 = vld [vmem:[%s312 + $0x170] sm:$0xff]
        %v682 = vlaneseq
        %v683 = vshrl.u32 %v682, 7
        %v684 = vsub.s32 0, %v683
        %v685 = vrot.slane %v649, %v684
        %v686 = vmul.f32 %v650, %v685
        %v687 = vmul.f32 %v651, %v685
        %v688 = vmul.f32 %v652, %v685
        %v689 = vmul.f32 %v653, %v685
        %v690 = vmul.f32 %v654, %v685
        %v691 = vmul.f32 %v655, %v685
        %v692 = vmul.f32 %v656, %v685
        %v693 = vmul.f32 %v657, %v685
        %v694 = vmul.f32 %v658, %v685
        %v695 = vmul.f32 %v659, %v685
        %v696 = vmul.f32 %v660, %v685
        %v697 = vmul.f32 %v661, %v685
        %v698 = vmul.f32 %v662, %v685
        %v699 = vmul.f32 %v663, %v685
        %v700 = vmul.f32 %v664, %v685
        %v701 = vmul.f32 %v665, %v685
        %v702 = vmul.f32 %v666, %v685
        %v703 = vmul.f32 %v667, %v685
        %v704 = vmul.f32 %v668, %v685
        %v705 = vmul.f32 %v669, %v685
        %v706 = vmul.f32 %v670, %v685
        %v707 = vmul.f32 %v671, %v685
        %v708 = vmul.f32 %v672, %v685
        %v709 = vmul.f32 %v673, %v685
        %v710 = vmul.f32 %v674, %v685
        %v711 = vmul.f32 %v675, %v685
        %v712 = vmul.f32 %v676, %v685
        %v713 = vmul.f32 %v677, %v685
        %v714 = vmul.f32 %v678, %v685
        %v715 = vmul.f32 %v679, %v685
        %v716 = vmul.f32 %v680, %v685
        %v717 = vmul.f32 %v681, %v685
        %v718 = vadd.f32 %v616, %v686
        %v719 = vadd.f32 %v617, %v687
        %v720 = vadd.f32 %v618, %v688
        %v721 = vadd.f32 %v619, %v689
        %v722 = vadd.f32 %v620, %v690
        %v723 = vadd.f32 %v621, %v691
        %v724 = vadd.f32 %v622, %v692
        %v725 = vadd.f32 %v623, %v693
        %v726 = vadd.f32 %v624, %v694
        %v727 = vadd.f32 %v625, %v695
        %v728 = vadd.f32 %v626, %v696
        %v729 = vadd.f32 %v627, %v697
        %v730 = vadd.f32 %v628, %v698
        %v731 = vadd.f32 %v629, %v699
        %v732 = vadd.f32 %v630, %v700
        %v733 = vadd.f32 %v631, %v701
        %v734 = vadd.f32 %v632, %v702
        %v735 = vadd.f32 %v633, %v703
        %v736 = vadd.f32 %v634, %v704
        %v737 = vadd.f32 %v635, %v705
        %v738 = vadd.f32 %v636, %v706
        %v739 = vadd.f32 %v637, %v707
        %v740 = vadd.f32 %v638, %v708
        %v741 = vadd.f32 %v639, %v709
        %v742 = vadd.f32 %v640, %v710
        %v743 = vadd.f32 %v641, %v711
        %v744 = vadd.f32 %v642, %v712
        %v745 = vadd.f32 %v643, %v713
        %v746 = vadd.f32 %v644, %v714
        %v747 = vadd.f32 %v645, %v715
        %v748 = vadd.f32 %v646, %v716
        %v749 = vadd.f32 %v647, %v717
        %v750 = vld [vmem:[%s648 + $0x1] sm:$0x1]
        %v751 = vld [vmem:[%s312 + $0x1] sm:$0xff]
        %v752 = vld [vmem:[%s312 + $0x9] sm:$0xff]
        %v753 = vld [vmem:[%s312 + $0x19] sm:$0xff]
        %v754 = vld [vmem:[%s312 + $0x21] sm:$0xff]
        %v755 = vld [vmem:[%s312 + $0x31] sm:$0xff]
        %v756 = vld [vmem:[%s312 + $0x39] sm:$0xff]
        %v757 = vld [vmem:[%s312 + $0x49] sm:$0xff]
        %v758 = vld [vmem:[%s312 + $0x51] sm:$0xff]
        %v759 = vld [vmem:[%s312 + $0x61] sm:$0xff]
        %v760 = vld [vmem:[%s312 + $0x69] sm:$0xff]
        %v761 = vld [vmem:[%s312 + $0x79] sm:$0xff]
        %v762 = vld [vmem:[%s312 + $0x81] sm:$0xff]
        %v763 = vld [vmem:[%s312 + $0x91] sm:$0xff]
        %v764 = vld [vmem:[%s312 + $0x99] sm:$0xff]
        %v765 = vld [vmem:[%s312 + $0xa9] sm:$0xff]
        %v766 = vld [vmem:[%s312 + $0xb1] sm:$0xff]
        %v767 = vld [vmem:[%s312 + $0xc1] sm:$0xff]
        %v768 = vld [vmem:[%s312 + $0xc9] sm:$0xff]
        %v769 = vld [vmem:[%s312 + $0xd9] sm:$0xff]
        %v770 = vld [vmem:[%s312 + $0xe1] sm:$0xff]
        %v771 = vld [vmem:[%s312 + $0xf1] sm:$0xff]
        %v772 = vld [vmem:[%s312 + $0xf9] sm:$0xff]
        %v773 = vld [vmem:[%s312 + $0x109] sm:$0xff]
        %v774 = vld [vmem:[%s312 + $0x111] sm:$0xff]
        %v775 = vld [vmem:[%s312 + $0x121] sm:$0xff]
        %v776 = vld [vmem:[%s312 + $0x129] sm:$0xff]
        %v777 = vld [vmem:[%s312 + $0x139] sm:$0xff]
        %v778 = vld [vmem:[%s312 + $0x141] sm:$0xff]
        %v779 = vld [vmem:[%s312 + $0x151] sm:$0xff]
        %v780 = vld [vmem:[%s312 + $0x159] sm:$0xff]
        %v781 = vld [vmem:[%s312 + $0x169] sm:$0xff]
        %v782 = vld [vmem:[%s312 + $0x171] sm:$0xff]
        %v783 = vlaneseq
        %v784 = vshrl.u32 %v783, 7
        %v785 = vsub.s32 0, %v784
        %v786 = vrot.slane %v750, %v785
        %v787 = vmul.f32 %v751, %v786
        %v788 = vmul.f32 %v752, %v786
        %v789 = vmul.f32 %v753, %v786
        %v790 = vmul.f32 %v754, %v786
        %v791 = vmul.f32 %v755, %v786
        %v792 = vmul.f32 %v756, %v786
        %v793 = vmul.f32 %v757, %v786
        %v794 = vmul.f32 %v758, %v786
        %v795 = vmul.f32 %v759, %v786
        %v796 = vmul.f32 %v760, %v786
        %v797 = vmul.f32 %v761, %v786
        %v798 = vmul.f32 %v762, %v786
        %v799 = vmul.f32 %v763, %v786
        %v800 = vmul.f32 %v764, %v786
        %v801 = vmul.f32 %v765, %v786
        %v802 = vmul.f32 %v766, %v786
        %v803 = vmul.f32 %v767, %v786
        %v804 = vmul.f32 %v768, %v786
        %v805 = vmul.f32 %v769, %v786
        %v806 = vmul.f32 %v770, %v786
        %v807 = vmul.f32 %v771, %v786
        %v808 = vmul.f32 %v772, %v786
        %v809 = vmul.f32 %v773, %v786
        %v810 = vmul.f32 %v774, %v786
        %v811 = vmul.f32 %v775, %v786
        %v812 = vmul.f32 %v776, %v786
        %v813 = vmul.f32 %v777, %v786
        %v814 = vmul.f32 %v778, %v786
        %v815 = vmul.f32 %v779, %v786
        %v816 = vmul.f32 %v780, %v786
        %v817 = vmul.f32 %v781, %v786
        %v818 = vmul.f32 %v782, %v786
        %v819 = vadd.f32 %v718, %v787
        %v820 = vadd.f32 %v719, %v788
        %v821 = vadd.f32 %v720, %v789
        %v822 = vadd.f32 %v721, %v790
        %v823 = vadd.f32 %v722, %v791
        %v824 = vadd.f32 %v723, %v792
        %v825 = vadd.f32 %v724, %v793
        %v826 = vadd.f32 %v725, %v794
        %v827 = vadd.f32 %v726, %v795
        %v828 = vadd.f32 %v727, %v796
        %v829 = vadd.f32 %v728, %v797
        %v830 = vadd.f32 %v729, %v798
        %v831 = vadd.f32 %v730, %v799
        %v832 = vadd.f32 %v731, %v800
        %v833 = vadd.f32 %v732, %v801
        %v834 = vadd.f32 %v733, %v802
        %v835 = vadd.f32 %v734, %v803
        %v836 = vadd.f32 %v735, %v804
        %v837 = vadd.f32 %v736, %v805
        %v838 = vadd.f32 %v737, %v806
        %v839 = vadd.f32 %v738, %v807
        %v840 = vadd.f32 %v739, %v808
        %v841 = vadd.f32 %v740, %v809
        %v842 = vadd.f32 %v741, %v810
        %v843 = vadd.f32 %v742, %v811
        %v844 = vadd.f32 %v743, %v812
        %v845 = vadd.f32 %v744, %v813
        %v846 = vadd.f32 %v745, %v814
        %v847 = vadd.f32 %v746, %v815
        %v848 = vadd.f32 %v747, %v816
        %v849 = vadd.f32 %v748, %v817
        %v850 = vadd.f32 %v749, %v818
        %v851 = vld [vmem:[%s648 + $0x2] sm:$0x1]
        %v852 = vld [vmem:[%s312 + $0x2] sm:$0xff]
        %v853 = vld [vmem:[%s312 + $0xa] sm:$0xff]
        %v854 = vld [vmem:[%s312 + $0x1a] sm:$0xff]
        %v855 = vld [vmem:[%s312 + $0x22] sm:$0xff]
        %v856 = vld [vmem:[%s312 + $0x32] sm:$0xff]
        %v857 = vld [vmem:[%s312 + $0x3a] sm:$0xff]
        %v858 = vld [vmem:[%s312 + $0x4a] sm:$0xff]
        %v859 = vld [vmem:[%s312 + $0x52] sm:$0xff]
        %v860 = vld [vmem:[%s312 + $0x62] sm:$0xff]
        %v861 = vld [vmem:[%s312 + $0x6a] sm:$0xff]
        %v862 = vld [vmem:[%s312 + $0x7a] sm:$0xff]
        %v863 = vld [vmem:[%s312 + $0x82] sm:$0xff]
        %v864 = vld [vmem:[%s312 + $0x92] sm:$0xff]
        %v865 = vld [vmem:[%s312 + $0x9a] sm:$0xff]
        %v866 = vld [vmem:[%s312 + $0xaa] sm:$0xff]
        %v867 = vld [vmem:[%s312 + $0xb2] sm:$0xff]
        %v868 = vld [vmem:[%s312 + $0xc2] sm:$0xff]
        %v869 = vld [vmem:[%s312 + $0xca] sm:$0xff]
        %v870 = vld [vmem:[%s312 + $0xda] sm:$0xff]
        %v871 = vld [vmem:[%s312 + $0xe2] sm:$0xff]
        %v872 = vld [vmem:[%s312 + $0xf2] sm:$0xff]
        %v873 = vld [vmem:[%s312 + $0xfa] sm:$0xff]
        %v874 = vld [vmem:[%s312 + $0x10a] sm:$0xff]
        %v875 = vld [vmem:[%s312 + $0x112] sm:$0xff]
        %v876 = vld [vmem:[%s312 + $0x122] sm:$0xff]
        %v877 = vld [vmem:[%s312 + $0x12a] sm:$0xff]
        %v878 = vld [vmem:[%s312 + $0x13a] sm:$0xff]
        %v879 = vld [vmem:[%s312 + $0x142] sm:$0xff]
        %v880 = vld [vmem:[%s312 + $0x152] sm:$0xff]
        %v881 = vld [vmem:[%s312 + $0x15a] sm:$0xff]
        %v882 = vld [vmem:[%s312 + $0x16a] sm:$0xff]
        %v883 = vld [vmem:[%s312 + $0x172] sm:$0xff]
        %v884 = vlaneseq
        %v885 = vshrl.u32 %v884, 7
        %v886 = vsub.s32 0, %v885
        %v887 = vrot.slane %v851, %v886
        %v888 = vmul.f32 %v852, %v887
        %v889 = vmul.f32 %v853, %v887
        %v890 = vmul.f32 %v854, %v887
        %v891 = vmul.f32 %v855, %v887
        %v892 = vmul.f32 %v856, %v887
        %v893 = vmul.f32 %v857, %v887
        %v894 = vmul.f32 %v858, %v887
        %v895 = vmul.f32 %v859, %v887
        %v896 = vmul.f32 %v860, %v887
        %v897 = vmul.f32 %v861, %v887
        %v898 = vmul.f32 %v862, %v887
        %v899 = vmul.f32 %v863, %v887
        %v900 = vmul.f32 %v864, %v887
        %v901 = vmul.f32 %v865, %v887
        %v902 = vmul.f32 %v866, %v887
        %v903 = vmul.f32 %v867, %v887
        %v904 = vmul.f32 %v868, %v887
        %v905 = vmul.f32 %v869, %v887
        %v906 = vmul.f32 %v870, %v887
        %v907 = vmul.f32 %v871, %v887
        %v908 = vmul.f32 %v872, %v887
        %v909 = vmul.f32 %v873, %v887
        %v910 = vmul.f32 %v874, %v887
        %v911 = vmul.f32 %v875, %v887
        %v912 = vmul.f32 %v876, %v887
        %v913 = vmul.f32 %v877, %v887
        %v914 = vmul.f32 %v878, %v887
        %v915 = vmul.f32 %v879, %v887
        %v916 = vmul.f32 %v880, %v887
        %v917 = vmul.f32 %v881, %v887
        %v918 = vmul.f32 %v882, %v887
        %v919 = vmul.f32 %v883, %v887
        %v920 = vadd.f32 %v819, %v888
        %v921 = vadd.f32 %v820, %v889
        %v922 = vadd.f32 %v821, %v890
        %v923 = vadd.f32 %v822, %v891
        %v924 = vadd.f32 %v823, %v892
        %v925 = vadd.f32 %v824, %v893
        %v926 = vadd.f32 %v825, %v894
        %v927 = vadd.f32 %v826, %v895
        %v928 = vadd.f32 %v827, %v896
        %v929 = vadd.f32 %v828, %v897
        %v930 = vadd.f32 %v829, %v898
        %v931 = vadd.f32 %v830, %v899
        %v932 = vadd.f32 %v831, %v900
        %v933 = vadd.f32 %v832, %v901
        %v934 = vadd.f32 %v833, %v902
        %v935 = vadd.f32 %v834, %v903
        %v936 = vadd.f32 %v835, %v904
        %v937 = vadd.f32 %v836, %v905
        %v938 = vadd.f32 %v837, %v906
        %v939 = vadd.f32 %v838, %v907
        %v940 = vadd.f32 %v839, %v908
        %v941 = vadd.f32 %v840, %v909
        %v942 = vadd.f32 %v841, %v910
        %v943 = vadd.f32 %v842, %v911
        %v944 = vadd.f32 %v843, %v912
        %v945 = vadd.f32 %v844, %v913
        %v946 = vadd.f32 %v845, %v914
        %v947 = vadd.f32 %v846, %v915
        %v948 = vadd.f32 %v847, %v916
        %v949 = vadd.f32 %v848, %v917
        %v950 = vadd.f32 %v849, %v918
        %v951 = vadd.f32 %v850, %v919
        %s952 = scalar_lea.vmem %s219, 8
        %v953 = vld [vmem:[%s952] sm:$0x1]
        %s954 = scalar_lea.vmem [#allocation2], 48
        %v955 = vld [vmem:[%s954] sm:$0xff]
        %v956 = vld [vmem:[%s954 + $0x8] sm:$0xff]
        %v957 = vld [vmem:[%s954 + $0x18] sm:$0xff]
        %v958 = vld [vmem:[%s954 + $0x20] sm:$0xff]
        %v959 = vld [vmem:[%s954 + $0x30] sm:$0xff]
        %v960 = vld [vmem:[%s954 + $0x38] sm:$0xff]
        %v961 = vld [vmem:[%s954 + $0x48] sm:$0xff]
        %v962 = vld [vmem:[%s954 + $0x50] sm:$0xff]
        %v963 = vld [vmem:[%s954 + $0x60] sm:$0xff]
        %v964 = vld [vmem:[%s954 + $0x68] sm:$0xff]
        %v965 = vld [vmem:[%s954 + $0x78] sm:$0xff]
        %v966 = vld [vmem:[%s954 + $0x80] sm:$0xff]
        %v967 = vld [vmem:[%s954 + $0x90] sm:$0xff]
        %v968 = vld [vmem:[%s954 + $0x98] sm:$0xff]
        %v969 = vld [vmem:[%s954 + $0xa8] sm:$0xff]
        %v970 = vld [vmem:[%s954 + $0xb0] sm:$0xff]
        %v971 = vld [vmem:[%s954 + $0xc0] sm:$0xff]
        %v972 = vld [vmem:[%s954 + $0xc8] sm:$0xff]
        %v973 = vld [vmem:[%s954 + $0xd8] sm:$0xff]
        %v974 = vld [vmem:[%s954 + $0xe0] sm:$0xff]
        %v975 = vld [vmem:[%s954 + $0xf0] sm:$0xff]
        %v976 = vld [vmem:[%s954 + $0xf8] sm:$0xff]
        %v977 = vld [vmem:[%s954 + $0x108] sm:$0xff]
        %v978 = vld [vmem:[%s954 + $0x110] sm:$0xff]
        %v979 = vld [vmem:[%s954 + $0x120] sm:$0xff]
        %v980 = vld [vmem:[%s954 + $0x128] sm:$0xff]
        %v981 = vld [vmem:[%s954 + $0x138] sm:$0xff]
        %v982 = vld [vmem:[%s954 + $0x140] sm:$0xff]
        %v983 = vld [vmem:[%s954 + $0x150] sm:$0xff]
        %v984 = vld [vmem:[%s954 + $0x158] sm:$0xff]
        %v985 = vld [vmem:[%s954 + $0x168] sm:$0xff]
        %v986 = vld [vmem:[%s954 + $0x170] sm:$0xff]
        %v987 = vlaneseq
        %v988 = vshrl.u32 %v987, 7
        %v989 = vsub.s32 0, %v988
        %v990 = vrot.slane %v953, %v989
        %v991 = vmul.f32 %v955, %v990
        %v992 = vmul.f32 %v956, %v990
        %v993 = vmul.f32 %v957, %v990
        %v994 = vmul.f32 %v958, %v990
        %v995 = vmul.f32 %v959, %v990
        %v996 = vmul.f32 %v960, %v990
        %v997 = vmul.f32 %v961, %v990
        %v998 = vmul.f32 %v962, %v990
        %v999 = vmul.f32 %v963, %v990
        %v1000 = vmul.f32 %v964, %v990
        %v1001 = vmul.f32 %v965, %v990
        %v1002 = vmul.f32 %v966, %v990
        %v1003 = vmul.f32 %v967, %v990
        %v1004 = vmul.f32 %v968, %v990
        %v1005 = vmul.f32 %v969, %v990
        %v1006 = vmul.f32 %v970, %v990
        %v1007 = vmul.f32 %v971, %v990
        %v1008 = vmul.f32 %v972, %v990
        %v1009 = vmul.f32 %v973, %v990
        %v1010 = vmul.f32 %v974, %v990
        %v1011 = vmul.f32 %v975, %v990
        %v1012 = vmul.f32 %v976, %v990
        %v1013 = vmul.f32 %v977, %v990
        %v1014 = vmul.f32 %v978, %v990
        %v1015 = vmul.f32 %v979, %v990
        %v1016 = vmul.f32 %v980, %v990
        %v1017 = vmul.f32 %v981, %v990
        %v1018 = vmul.f32 %v982, %v990
        %v1019 = vmul.f32 %v983, %v990
        %v1020 = vmul.f32 %v984, %v990
        %v1021 = vmul.f32 %v985, %v990
        %v1022 = vmul.f32 %v986, %v990
        %v1023 = vadd.f32 %v920, %v991
        %v1024 = vadd.f32 %v921, %v992
        %v1025 = vadd.f32 %v922, %v993
        %v1026 = vadd.f32 %v923, %v994
        %v1027 = vadd.f32 %v924, %v995
        %v1028 = vadd.f32 %v925, %v996
        %v1029 = vadd.f32 %v926, %v997
        %v1030 = vadd.f32 %v927, %v998
        %v1031 = vadd.f32 %v928, %v999
        %v1032 = vadd.f32 %v929, %v1000
        %v1033 = vadd.f32 %v930, %v1001
        %v1034 = vadd.f32 %v931, %v1002
        %v1035 = vadd.f32 %v932, %v1003
        %v1036 = vadd.f32 %v933, %v1004
        %v1037 = vadd.f32 %v934, %v1005
        %v1038 = vadd.f32 %v935, %v1006
        %v1039 = vadd.f32 %v936, %v1007
        %v1040 = vadd.f32 %v937, %v1008
        %v1041 = vadd.f32 %v938, %v1009
        %v1042 = vadd.f32 %v939, %v1010
        %v1043 = vadd.f32 %v940, %v1011
        %v1044 = vadd.f32 %v941, %v1012
        %v1045 = vadd.f32 %v942, %v1013
        %v1046 = vadd.f32 %v943, %v1014
        %v1047 = vadd.f32 %v944, %v1015
        %v1048 = vadd.f32 %v945, %v1016
        %v1049 = vadd.f32 %v946, %v1017
        %v1050 = vadd.f32 %v947, %v1018
        %v1051 = vadd.f32 %v948, %v1019
        %v1052 = vadd.f32 %v949, %v1020
        %v1053 = vadd.f32 %v950, %v1021
        %v1054 = vadd.f32 %v951, %v1022
        %v1055 = vld [vmem:[%s952 + $0x1] sm:$0x1]
        %v1056 = vld [vmem:[%s954 + $0x1] sm:$0xff]
        %v1057 = vld [vmem:[%s954 + $0x9] sm:$0xff]
        %v1058 = vld [vmem:[%s954 + $0x19] sm:$0xff]
        %v1059 = vld [vmem:[%s954 + $0x21] sm:$0xff]
        %v1060 = vld [vmem:[%s954 + $0x31] sm:$0xff]
        %v1061 = vld [vmem:[%s954 + $0x39] sm:$0xff]
        %v1062 = vld [vmem:[%s954 + $0x49] sm:$0xff]
        %v1063 = vld [vmem:[%s954 + $0x51] sm:$0xff]
        %v1064 = vld [vmem:[%s954 + $0x61] sm:$0xff]
        %v1065 = vld [vmem:[%s954 + $0x69] sm:$0xff]
        %v1066 = vld [vmem:[%s954 + $0x79] sm:$0xff]
        %v1067 = vld [vmem:[%s954 + $0x81] sm:$0xff]
        %v1068 = vld [vmem:[%s954 + $0x91] sm:$0xff]
        %v1069 = vld [vmem:[%s954 + $0x99] sm:$0xff]
        %v1070 = vld [vmem:[%s954 + $0xa9] sm:$0xff]
        %v1071 = vld [vmem:[%s954 + $0xb1] sm:$0xff]
        %v1072 = vld [vmem:[%s954 + $0xc1] sm:$0xff]
        %v1073 = vld [vmem:[%s954 + $0xc9] sm:$0xff]
        %v1074 = vld [vmem:[%s954 + $0xd9] sm:$0xff]
        %v1075 = vld [vmem:[%s954 + $0xe1] sm:$0xff]
        %v1076 = vld [vmem:[%s954 + $0xf1] sm:$0xff]
        %v1077 = vld [vmem:[%s954 + $0xf9] sm:$0xff]
        %v1078 = vld [vmem:[%s954 + $0x109] sm:$0xff]
        %v1079 = vld [vmem:[%s954 + $0x111] sm:$0xff]
        %v1080 = vld [vmem:[%s954 + $0x121] sm:$0xff]
        %v1081 = vld [vmem:[%s954 + $0x129] sm:$0xff]
        %v1082 = vld [vmem:[%s954 + $0x139] sm:$0xff]
        %v1083 = vld [vmem:[%s954 + $0x141] sm:$0xff]
        %v1084 = vld [vmem:[%s954 + $0x151] sm:$0xff]
        %v1085 = vld [vmem:[%s954 + $0x159] sm:$0xff]
        %v1086 = vld [vmem:[%s954 + $0x169] sm:$0xff]
        %v1087 = vld [vmem:[%s954 + $0x171] sm:$0xff]
        %v1088 = vlaneseq
        %v1089 = vshrl.u32 %v1088, 7
        %v1090 = vsub.s32 0, %v1089
        %v1091 = vrot.slane %v1055, %v1090
        %v1092 = vmul.f32 %v1056, %v1091
        %v1093 = vmul.f32 %v1057, %v1091
        %v1094 = vmul.f32 %v1058, %v1091
        %v1095 = vmul.f32 %v1059, %v1091
        %v1096 = vmul.f32 %v1060, %v1091
        %v1097 = vmul.f32 %v1061, %v1091
        %v1098 = vmul.f32 %v1062, %v1091
        %v1099 = vmul.f32 %v1063, %v1091
        %v1100 = vmul.f32 %v1064, %v1091
        %v1101 = vmul.f32 %v1065, %v1091
        %v1102 = vmul.f32 %v1066, %v1091
        %v1103 = vmul.f32 %v1067, %v1091
        %v1104 = vmul.f32 %v1068, %v1091
        %v1105 = vmul.f32 %v1069, %v1091
        %v1106 = vmul.f32 %v1070, %v1091
        %v1107 = vmul.f32 %v1071, %v1091
        %v1108 = vmul.f32 %v1072, %v1091
        %v1109 = vmul.f32 %v1073, %v1091
        %v1110 = vmul.f32 %v1074, %v1091
        %v1111 = vmul.f32 %v1075, %v1091
        %v1112 = vmul.f32 %v1076, %v1091
        %v1113 = vmul.f32 %v1077, %v1091
        %v1114 = vmul.f32 %v1078, %v1091
        %v1115 = vmul.f32 %v1079, %v1091
        %v1116 = vmul.f32 %v1080, %v1091
        %v1117 = vmul.f32 %v1081, %v1091
        %v1118 = vmul.f32 %v1082, %v1091
        %v1119 = vmul.f32 %v1083, %v1091
        %v1120 = vmul.f32 %v1084, %v1091
        %v1121 = vmul.f32 %v1085, %v1091
        %v1122 = vmul.f32 %v1086, %v1091
        %v1123 = vmul.f32 %v1087, %v1091
        %v1124 = vadd.f32 %v1023, %v1092
        %v1125 = vadd.f32 %v1024, %v1093
        %v1126 = vadd.f32 %v1025, %v1094
        %v1127 = vadd.f32 %v1026, %v1095
        %v1128 = vadd.f32 %v1027, %v1096
        %v1129 = vadd.f32 %v1028, %v1097
        %v1130 = vadd.f32 %v1029, %v1098
        %v1131 = vadd.f32 %v1030, %v1099
        %v1132 = vadd.f32 %v1031, %v1100
        %v1133 = vadd.f32 %v1032, %v1101
        %v1134 = vadd.f32 %v1033, %v1102
        %v1135 = vadd.f32 %v1034, %v1103
        %v1136 = vadd.f32 %v1035, %v1104
        %v1137 = vadd.f32 %v1036, %v1105
        %v1138 = vadd.f32 %v1037, %v1106
        %v1139 = vadd.f32 %v1038, %v1107
        %v1140 = vadd.f32 %v1039, %v1108
        %v1141 = vadd.f32 %v1040, %v1109
        %v1142 = vadd.f32 %v1041, %v1110
        %v1143 = vadd.f32 %v1042, %v1111
        %v1144 = vadd.f32 %v1043, %v1112
        %v1145 = vadd.f32 %v1044, %v1113
        %v1146 = vadd.f32 %v1045, %v1114
        %v1147 = vadd.f32 %v1046, %v1115
        %v1148 = vadd.f32 %v1047, %v1116
        %v1149 = vadd.f32 %v1048, %v1117
        %v1150 = vadd.f32 %v1049, %v1118
        %v1151 = vadd.f32 %v1050, %v1119
        %v1152 = vadd.f32 %v1051, %v1120
        %v1153 = vadd.f32 %v1052, %v1121
        %v1154 = vadd.f32 %v1053, %v1122
        %v1155 = vadd.f32 %v1054, %v1123
        %v1156 = vld [vmem:[%s952 + $0x2] sm:$0x1]
        %v1157 = vld [vmem:[%s954 + $0x2] sm:$0xff]
        %v1158 = vld [vmem:[%s954 + $0xa] sm:$0xff]
        %v1159 = vld [vmem:[%s954 + $0x1a] sm:$0xff]
        %v1160 = vld [vmem:[%s954 + $0x22] sm:$0xff]
        %v1161 = vld [vmem:[%s954 + $0x32] sm:$0xff]
        %v1162 = vld [vmem:[%s954 + $0x3a] sm:$0xff]
        %v1163 = vld [vmem:[%s954 + $0x4a] sm:$0xff]
        %v1164 = vld [vmem:[%s954 + $0x52] sm:$0xff]
        %v1165 = vld [vmem:[%s954 + $0x62] sm:$0xff]
        %v1166 = vld [vmem:[%s954 + $0x6a] sm:$0xff]
        %v1167 = vld [vmem:[%s954 + $0x7a] sm:$0xff]
        %v1168 = vld [vmem:[%s954 + $0x82] sm:$0xff]
        %v1169 = vld [vmem:[%s954 + $0x92] sm:$0xff]
        %v1170 = vld [vmem:[%s954 + $0x9a] sm:$0xff]
        %v1171 = vld [vmem:[%s954 + $0xaa] sm:$0xff]
        %v1172 = vld [vmem:[%s954 + $0xb2] sm:$0xff]
        %v1173 = vld [vmem:[%s954 + $0xc2] sm:$0xff]
        %v1174 = vld [vmem:[%s954 + $0xca] sm:$0xff]
        %v1175 = vld [vmem:[%s954 + $0xda] sm:$0xff]
        %v1176 = vld [vmem:[%s954 + $0xe2] sm:$0xff]
        %v1177 = vld [vmem:[%s954 + $0xf2] sm:$0xff]
        %v1178 = vld [vmem:[%s954 + $0xfa] sm:$0xff]
        %v1179 = vld [vmem:[%s954 + $0x10a] sm:$0xff]
        %v1180 = vld [vmem:[%s954 + $0x112] sm:$0xff]
        %v1181 = vld [vmem:[%s954 + $0x122] sm:$0xff]
        %v1182 = vld [vmem:[%s954 + $0x12a] sm:$0xff]
        %v1183 = vld [vmem:[%s954 + $0x13a] sm:$0xff]
        %v1184 = vld [vmem:[%s954 + $0x142] sm:$0xff]
        %v1185 = vld [vmem:[%s954 + $0x152] sm:$0xff]
        %v1186 = vld [vmem:[%s954 + $0x15a] sm:$0xff]
        %v1187 = vld [vmem:[%s954 + $0x16a] sm:$0xff]
        %v1188 = vld [vmem:[%s954 + $0x172] sm:$0xff]
        %v1189 = vlaneseq
        %v1190 = vshrl.u32 %v1189, 7
        %v1191 = vsub.s32 0, %v1190
        %v1192 = vrot.slane %v1156, %v1191
        %v1193 = vmul.f32 %v1157, %v1192
        %v1194 = vmul.f32 %v1158, %v1192
        %v1195 = vmul.f32 %v1159, %v1192
        %v1196 = vmul.f32 %v1160, %v1192
        %v1197 = vmul.f32 %v1161, %v1192
        %v1198 = vmul.f32 %v1162, %v1192
        %v1199 = vmul.f32 %v1163, %v1192
        %v1200 = vmul.f32 %v1164, %v1192
        %v1201 = vmul.f32 %v1165, %v1192
        %v1202 = vmul.f32 %v1166, %v1192
        %v1203 = vmul.f32 %v1167, %v1192
        %v1204 = vmul.f32 %v1168, %v1192
        %v1205 = vmul.f32 %v1169, %v1192
        %v1206 = vmul.f32 %v1170, %v1192
        %v1207 = vmul.f32 %v1171, %v1192
        %v1208 = vmul.f32 %v1172, %v1192
        %v1209 = vmul.f32 %v1173, %v1192
        %v1210 = vmul.f32 %v1174, %v1192
        %v1211 = vmul.f32 %v1175, %v1192
        %v1212 = vmul.f32 %v1176, %v1192
        %v1213 = vmul.f32 %v1177, %v1192
        %v1214 = vmul.f32 %v1178, %v1192
        %v1215 = vmul.f32 %v1179, %v1192
        %v1216 = vmul.f32 %v1180, %v1192
        %v1217 = vmul.f32 %v1181, %v1192
        %v1218 = vmul.f32 %v1182, %v1192
        %v1219 = vmul.f32 %v1183, %v1192
        %v1220 = vmul.f32 %v1184, %v1192
        %v1221 = vmul.f32 %v1185, %v1192
        %v1222 = vmul.f32 %v1186, %v1192
        %v1223 = vmul.f32 %v1187, %v1192
        %v1224 = vmul.f32 %v1188, %v1192
        %v1225 = vadd.f32 %v1124, %v1193
        %v1226 = vadd.f32 %v1125, %v1194
        %v1227 = vadd.f32 %v1126, %v1195
        %v1228 = vadd.f32 %v1127, %v1196
        %v1229 = vadd.f32 %v1128, %v1197
        %v1230 = vadd.f32 %v1129, %v1198
        %v1231 = vadd.f32 %v1130, %v1199
        %v1232 = vadd.f32 %v1131, %v1200
        %v1233 = vadd.f32 %v1132, %v1201
        %v1234 = vadd.f32 %v1133, %v1202
        %v1235 = vadd.f32 %v1134, %v1203
        %v1236 = vadd.f32 %v1135, %v1204
        %v1237 = vadd.f32 %v1136, %v1205
        %v1238 = vadd.f32 %v1137, %v1206
        %v1239 = vadd.f32 %v1138, %v1207
        %v1240 = vadd.f32 %v1139, %v1208
        %v1241 = vadd.f32 %v1140, %v1209
        %v1242 = vadd.f32 %v1141, %v1210
        %v1243 = vadd.f32 %v1142, %v1211
        %v1244 = vadd.f32 %v1143, %v1212
        %v1245 = vadd.f32 %v1144, %v1213
        %v1246 = vadd.f32 %v1145, %v1214
        %v1247 = vadd.f32 %v1146, %v1215
        %v1248 = vadd.f32 %v1147, %v1216
        %v1249 = vadd.f32 %v1148, %v1217
        %v1250 = vadd.f32 %v1149, %v1218
        %v1251 = vadd.f32 %v1150, %v1219
        %v1252 = vadd.f32 %v1151, %v1220
        %v1253 = vadd.f32 %v1152, %v1221
        %v1254 = vadd.f32 %v1153, %v1222
        %v1255 = vadd.f32 %v1154, %v1223
        %v1256 = vadd.f32 %v1155, %v1224
        %v1257 = vld [vmem:[%s223] sm:$0x1]
        %v1258 = vlaneseq
        %v1259 = vshrl.u32 %v1258, 7
        %v1260 = vsub.s32 0, %v1259
        %v1261 = vrot.slane %v1257, %v1260
        %v1262 = vadd.f32 %v1225, %v1261
        %v1263 = vadd.f32 %v1226, %v1261
        %v1264 = vadd.f32 %v1227, %v1261
        %v1265 = vadd.f32 %v1228, %v1261
        %v1266 = vadd.f32 %v1229, %v1261
        %v1267 = vadd.f32 %v1230, %v1261
        %v1268 = vadd.f32 %v1231, %v1261
        %v1269 = vadd.f32 %v1232, %v1261
        %v1270 = vadd.f32 %v1233, %v1261
        %v1271 = vadd.f32 %v1234, %v1261
        %v1272 = vadd.f32 %v1235, %v1261
        %v1273 = vadd.f32 %v1236, %v1261
        %v1274 = vadd.f32 %v1237, %v1261
        %v1275 = vadd.f32 %v1238, %v1261
        %v1276 = vadd.f32 %v1239, %v1261
        %v1277 = vadd.f32 %v1240, %v1261
        %v1278 = vadd.f32 %v1241, %v1261
        %v1279 = vadd.f32 %v1242, %v1261
        %v1280 = vadd.f32 %v1243, %v1261
        %v1281 = vadd.f32 %v1244, %v1261
        %v1282 = vadd.f32 %v1245, %v1261
        %v1283 = vadd.f32 %v1246, %v1261
        %v1284 = vadd.f32 %v1247, %v1261
        %v1285 = vadd.f32 %v1248, %v1261
        %v1286 = vadd.f32 %v1249, %v1261
        %v1287 = vadd.f32 %v1250, %v1261
        %v1288 = vadd.f32 %v1251, %v1261
        %v1289 = vadd.f32 %v1252, %v1261
        %v1290 = vadd.f32 %v1253, %v1261
        %v1291 = vadd.f32 %v1254, %v1261
        %v1292 = vadd.f32 %v1255, %v1261
        %v1293 = vadd.f32 %v1256, %v1261
        %1294 = vst.msk [vmem:[%s207] sm:$0xff] %vm224, %v1262
        %1295 = vst.msk [vmem:[%s207 + $0x8] sm:$0xff] %vm224, %v1263
        %1296 = vst.msk [vmem:[%s207 + $0x10] sm:$0xff] %vm224, %v1264
        %1297 = vst.msk [vmem:[%s207 + $0x18] sm:$0xff] %vm224, %v1265
        %1298 = vst.msk [vmem:[%s207 + $0x20] sm:$0xff] %vm224, %v1266
        %1299 = vst.msk [vmem:[%s207 + $0x28] sm:$0xff] %vm224, %v1267
        %1300 = vst.msk [vmem:[%s207 + $0x30] sm:$0xff] %vm224, %v1268
        %1301 = vst.msk [vmem:[%s207 + $0x38] sm:$0xff] %vm224, %v1269
        %1302 = vst.msk [vmem:[%s207 + $0x40] sm:$0xff] %vm224, %v1270
        %1303 = vst.msk [vmem:[%s207 + $0x48] sm:$0xff] %vm224, %v1271
        %1304 = vst.msk [vmem:[%s207 + $0x50] sm:$0xff] %vm224, %v1272
        %1305 = vst.msk [vmem:[%s207 + $0x58] sm:$0xff] %vm224, %v1273
        %1306 = vst.msk [vmem:[%s207 + $0x60] sm:$0xff] %vm224, %v1274
        %1307 = vst.msk [vmem:[%s207 + $0x68] sm:$0xff] %vm224, %v1275
        %1308 = vst.msk [vmem:[%s207 + $0x70] sm:$0xff] %vm224, %v1276
        %1309 = vst.msk [vmem:[%s207 + $0x78] sm:$0xff] %vm224, %v1277
        %1310 = vst.msk [vmem:[%s207 + $0x80] sm:$0xff] %vm224, %v1278
        %1311 = vst.msk [vmem:[%s207 + $0x88] sm:$0xff] %vm224, %v1279
        %1312 = vst.msk [vmem:[%s207 + $0x90] sm:$0xff] %vm224, %v1280
        %1313 = vst.msk [vmem:[%s207 + $0x98] sm:$0xff] %vm224, %v1281
        %1314 = vst.msk [vmem:[%s207 + $0xa0] sm:$0xff] %vm224, %v1282
        %1315 = vst.msk [vmem:[%s207 + $0xa8] sm:$0xff] %vm224, %v1283
        %1316 = vst.msk [vmem:[%s207 + $0xb0] sm:$0xff] %vm224, %v1284
        %1317 = vst.msk [vmem:[%s207 + $0xb8] sm:$0xff] %vm224, %v1285
        %1318 = vst.msk [vmem:[%s207 + $0xc0] sm:$0xff] %vm224, %v1286
        %1319 = vst.msk [vmem:[%s207 + $0xc8] sm:$0xff] %vm224, %v1287
        %1320 = vst.msk [vmem:[%s207 + $0xd0] sm:$0xff] %vm224, %v1288
        %1321 = vst.msk [vmem:[%s207 + $0xd8] sm:$0xff] %vm224, %v1289
        %1322 = vst.msk [vmem:[%s207 + $0xe0] sm:$0xff] %vm224, %v1290
        %1323 = vst.msk [vmem:[%s207 + $0xe8] sm:$0xff] %vm224, %v1291
        %1324 = vst.msk [vmem:[%s207 + $0xf0] sm:$0xff] %vm224, %v1292
        %1325 = vst.msk [vmem:[%s207 + $0xf8] sm:$0xff] %vm224, %v1293
        %s1326 = scalar_lea.vmem %s219, 12
        %v1327 = vld [vmem:[%s1326] sm:$0x1]
        %v1328 = vld [vmem:[#allocation2] sm:$0xff]
        %v1329 = vld [vmem:[#allocation2 + $0x8] sm:$0xff]
        %v1330 = vld [vmem:[#allocation2 + $0x18] sm:$0xff]
        %v1331 = vld [vmem:[#allocation2 + $0x20] sm:$0xff]
        %v1332 = vld [vmem:[#allocation2 + $0x30] sm:$0xff]
        %v1333 = vld [vmem:[#allocation2 + $0x38] sm:$0xff]
        %v1334 = vld [vmem:[#allocation2 + $0x48] sm:$0xff]
        %v1335 = vld [vmem:[#allocation2 + $0x50] sm:$0xff]
        %v1336 = vld [vmem:[#allocation2 + $0x60] sm:$0xff]
        %v1337 = vld [vmem:[#allocation2 + $0x68] sm:$0xff]
        %v1338 = vld [vmem:[#allocation2 + $0x78] sm:$0xff]
        %v1339 = vld [vmem:[#allocation2 + $0x80] sm:$0xff]
        %v1340 = vld [vmem:[#allocation2 + $0x90] sm:$0xff]
        %v1341 = vld [vmem:[#allocation2 + $0x98] sm:$0xff]
        %v1342 = vld [vmem:[#allocation2 + $0xa8] sm:$0xff]
        %v1343 = vld [vmem:[#allocation2 + $0xb0] sm:$0xff]
        %v1344 = vld [vmem:[#allocation2 + $0xc0] sm:$0xff]
        %v1345 = vld [vmem:[#allocation2 + $0xc8] sm:$0xff]
        %v1346 = vld [vmem:[#allocation2 + $0xd8] sm:$0xff]
        %v1347 = vld [vmem:[#allocation2 + $0xe0] sm:$0xff]
        %v1348 = vld [vmem:[#allocation2 + $0xf0] sm:$0xff]
        %v1349 = vld [vmem:[#allocation2 + $0xf8] sm:$0xff]
        %v1350 = vld [vmem:[#allocation2 + $0x108] sm:$0xff]
        %v1351 = vld [vmem:[#allocation2 + $0x110] sm:$0xff]
        %v1352 = vld [vmem:[#allocation2 + $0x120] sm:$0xff]
        %v1353 = vld [vmem:[#allocation2 + $0x128] sm:$0xff]
        %v1354 = vld [vmem:[#allocation2 + $0x138] sm:$0xff]
        %v1355 = vld [vmem:[#allocation2 + $0x140] sm:$0xff]
        %v1356 = vld [vmem:[#allocation2 + $0x150] sm:$0xff]
        %v1357 = vld [vmem:[#allocation2 + $0x158] sm:$0xff]
        %v1358 = vld [vmem:[#allocation2 + $0x168] sm:$0xff]
        %v1359 = vld [vmem:[#allocation2 + $0x170] sm:$0xff]
        %v1360 = vlaneseq
        %v1361 = vshrl.u32 %v1360, 7
        %v1362 = vsub.s32 0, %v1361
        %v1363 = vrot.slane %v1327, %v1362
        %v1364 = vmul.f32 %v1328, %v1363
        %v1365 = vmul.f32 %v1329, %v1363
        %v1366 = vmul.f32 %v1330, %v1363
        %v1367 = vmul.f32 %v1331, %v1363
        %v1368 = vmul.f32 %v1332, %v1363
        %v1369 = vmul.f32 %v1333, %v1363
        %v1370 = vmul.f32 %v1334, %v1363
        %v1371 = vmul.f32 %v1335, %v1363
        %v1372 = vmul.f32 %v1336, %v1363
        %v1373 = vmul.f32 %v1337, %v1363
        %v1374 = vmul.f32 %v1338, %v1363
        %v1375 = vmul.f32 %v1339, %v1363
        %v1376 = vmul.f32 %v1340, %v1363
        %v1377 = vmul.f32 %v1341, %v1363
        %v1378 = vmul.f32 %v1342, %v1363
        %v1379 = vmul.f32 %v1343, %v1363
        %v1380 = vmul.f32 %v1344, %v1363
        %v1381 = vmul.f32 %v1345, %v1363
        %v1382 = vmul.f32 %v1346, %v1363
        %v1383 = vmul.f32 %v1347, %v1363
        %v1384 = vmul.f32 %v1348, %v1363
        %v1385 = vmul.f32 %v1349, %v1363
        %v1386 = vmul.f32 %v1350, %v1363
        %v1387 = vmul.f32 %v1351, %v1363
        %v1388 = vmul.f32 %v1352, %v1363
        %v1389 = vmul.f32 %v1353, %v1363
        %v1390 = vmul.f32 %v1354, %v1363
        %v1391 = vmul.f32 %v1355, %v1363
        %v1392 = vmul.f32 %v1356, %v1363
        %v1393 = vmul.f32 %v1357, %v1363
        %v1394 = vmul.f32 %v1358, %v1363
        %v1395 = vmul.f32 %v1359, %v1363
        %v1396 = vadd.f32 %v1364, 0.0
        %v1397 = vadd.f32 %v1365, 0.0
        %v1398 = vadd.f32 %v1366, 0.0
        %v1399 = vadd.f32 %v1367, 0.0
        %v1400 = vadd.f32 %v1368, 0.0
        %v1401 = vadd.f32 %v1369, 0.0
        %v1402 = vadd.f32 %v1370, 0.0
        %v1403 = vadd.f32 %v1371, 0.0
        %v1404 = vadd.f32 %v1372, 0.0
        %v1405 = vadd.f32 %v1373, 0.0
        %v1406 = vadd.f32 %v1374, 0.0
        %v1407 = vadd.f32 %v1375, 0.0
        %v1408 = vadd.f32 %v1376, 0.0
        %v1409 = vadd.f32 %v1377, 0.0
        %v1410 = vadd.f32 %v1378, 0.0
        %v1411 = vadd.f32 %v1379, 0.0
        %v1412 = vadd.f32 %v1380, 0.0
        %v1413 = vadd.f32 %v1381, 0.0
        %v1414 = vadd.f32 %v1382, 0.0
        %v1415 = vadd.f32 %v1383, 0.0
        %v1416 = vadd.f32 %v1384, 0.0
        %v1417 = vadd.f32 %v1385, 0.0
        %v1418 = vadd.f32 %v1386, 0.0
        %v1419 = vadd.f32 %v1387, 0.0
        %v1420 = vadd.f32 %v1388, 0.0
        %v1421 = vadd.f32 %v1389, 0.0
        %v1422 = vadd.f32 %v1390, 0.0
        %v1423 = vadd.f32 %v1391, 0.0
        %v1424 = vadd.f32 %v1392, 0.0
        %v1425 = vadd.f32 %v1393, 0.0
        %v1426 = vadd.f32 %v1394, 0.0
        %v1427 = vadd.f32 %v1395, 0.0
        %v1428 = vld [vmem:[%s1326 + $0x1] sm:$0x1]
        %v1429 = vld [vmem:[#allocation2 + $0x1] sm:$0xff]
        %v1430 = vld [vmem:[#allocation2 + $0x9] sm:$0xff]
        %v1431 = vld [vmem:[#allocation2 + $0x19] sm:$0xff]
        %v1432 = vld [vmem:[#allocation2 + $0x21] sm:$0xff]
        %v1433 = vld [vmem:[#allocation2 + $0x31] sm:$0xff]
        %v1434 = vld [vmem:[#allocation2 + $0x39] sm:$0xff]
        %v1435 = vld [vmem:[#allocation2 + $0x49] sm:$0xff]
        %v1436 = vld [vmem:[#allocation2 + $0x51] sm:$0xff]
        %v1437 = vld [vmem:[#allocation2 + $0x61] sm:$0xff]
        %v1438 = vld [vmem:[#allocation2 + $0x69] sm:$0xff]
        %v1439 = vld [vmem:[#allocation2 + $0x79] sm:$0xff]
        %v1440 = vld [vmem:[#allocation2 + $0x81] sm:$0xff]
        %v1441 = vld [vmem:[#allocation2 + $0x91] sm:$0xff]
        %v1442 = vld [vmem:[#allocation2 + $0x99] sm:$0xff]
        %v1443 = vld [vmem:[#allocation2 + $0xa9] sm:$0xff]
        %v1444 = vld [vmem:[#allocation2 + $0xb1] sm:$0xff]
        %v1445 = vld [vmem:[#allocation2 + $0xc1] sm:$0xff]
        %v1446 = vld [vmem:[#allocation2 + $0xc9] sm:$0xff]
        %v1447 = vld [vmem:[#allocation2 + $0xd9] sm:$0xff]
        %v1448 = vld [vmem:[#allocation2 + $0xe1] sm:$0xff]
        %v1449 = vld [vmem:[#allocation2 + $0xf1] sm:$0xff]
        %v1450 = vld [vmem:[#allocation2 + $0xf9] sm:$0xff]
        %v1451 = vld [vmem:[#allocation2 + $0x109] sm:$0xff]
        %v1452 = vld [vmem:[#allocation2 + $0x111] sm:$0xff]
        %v1453 = vld [vmem:[#allocation2 + $0x121] sm:$0xff]
        %v1454 = vld [vmem:[#allocation2 + $0x129] sm:$0xff]
        %v1455 = vld [vmem:[#allocation2 + $0x139] sm:$0xff]
        %v1456 = vld [vmem:[#allocation2 + $0x141] sm:$0xff]
        %v1457 = vld [vmem:[#allocation2 + $0x151] sm:$0xff]
        %v1458 = vld [vmem:[#allocation2 + $0x159] sm:$0xff]
        %v1459 = vld [vmem:[#allocation2 + $0x169] sm:$0xff]
        %v1460 = vld [vmem:[#allocation2 + $0x171] sm:$0xff]
        %v1461 = vlaneseq
        %v1462 = vshrl.u32 %v1461, 7
        %v1463 = vsub.s32 0, %v1462
        %v1464 = vrot.slane %v1428, %v1463
        %v1465 = vmul.f32 %v1429, %v1464
        %v1466 = vmul.f32 %v1430, %v1464
        %v1467 = vmul.f32 %v1431, %v1464
        %v1468 = vmul.f32 %v1432, %v1464
        %v1469 = vmul.f32 %v1433, %v1464
        %v1470 = vmul.f32 %v1434, %v1464
        %v1471 = vmul.f32 %v1435, %v1464
        %v1472 = vmul.f32 %v1436, %v1464
        %v1473 = vmul.f32 %v1437, %v1464
        %v1474 = vmul.f32 %v1438, %v1464
        %v1475 = vmul.f32 %v1439, %v1464
        %v1476 = vmul.f32 %v1440, %v1464
        %v1477 = vmul.f32 %v1441, %v1464
        %v1478 = vmul.f32 %v1442, %v1464
        %v1479 = vmul.f32 %v1443, %v1464
        %v1480 = vmul.f32 %v1444, %v1464
        %v1481 = vmul.f32 %v1445, %v1464
        %v1482 = vmul.f32 %v1446, %v1464
        %v1483 = vmul.f32 %v1447, %v1464
        %v1484 = vmul.f32 %v1448, %v1464
        %v1485 = vmul.f32 %v1449, %v1464
        %v1486 = vmul.f32 %v1450, %v1464
        %v1487 = vmul.f32 %v1451, %v1464
        %v1488 = vmul.f32 %v1452, %v1464
        %v1489 = vmul.f32 %v1453, %v1464
        %v1490 = vmul.f32 %v1454, %v1464
        %v1491 = vmul.f32 %v1455, %v1464
        %v1492 = vmul.f32 %v1456, %v1464
        %v1493 = vmul.f32 %v1457, %v1464
        %v1494 = vmul.f32 %v1458, %v1464
        %v1495 = vmul.f32 %v1459, %v1464
        %v1496 = vmul.f32 %v1460, %v1464
        %v1497 = vadd.f32 %v1396, %v1465
        %v1498 = vadd.f32 %v1397, %v1466
        %v1499 = vadd.f32 %v1398, %v1467
        %v1500 = vadd.f32 %v1399, %v1468
        %v1501 = vadd.f32 %v1400, %v1469
        %v1502 = vadd.f32 %v1401, %v1470
        %v1503 = vadd.f32 %v1402, %v1471
        %v1504 = vadd.f32 %v1403, %v1472
        %v1505 = vadd.f32 %v1404, %v1473
        %v1506 = vadd.f32 %v1405, %v1474
        %v1507 = vadd.f32 %v1406, %v1475
        %v1508 = vadd.f32 %v1407, %v1476
        %v1509 = vadd.f32 %v1408, %v1477
        %v1510 = vadd.f32 %v1409, %v1478
        %v1511 = vadd.f32 %v1410, %v1479
        %v1512 = vadd.f32 %v1411, %v1480
        %v1513 = vadd.f32 %v1412, %v1481
        %v1514 = vadd.f32 %v1413, %v1482
        %v1515 = vadd.f32 %v1414, %v1483
        %v1516 = vadd.f32 %v1415, %v1484
        %v1517 = vadd.f32 %v1416, %v1485
        %v1518 = vadd.f32 %v1417, %v1486
        %v1519 = vadd.f32 %v1418, %v1487
        %v1520 = vadd.f32 %v1419, %v1488
        %v1521 = vadd.f32 %v1420, %v1489
        %v1522 = vadd.f32 %v1421, %v1490
        %v1523 = vadd.f32 %v1422, %v1491
        %v1524 = vadd.f32 %v1423, %v1492
        %v1525 = vadd.f32 %v1424, %v1493
        %v1526 = vadd.f32 %v1425, %v1494
        %v1527 = vadd.f32 %v1426, %v1495
        %v1528 = vadd.f32 %v1427, %v1496
        %v1529 = vld [vmem:[%s1326 + $0x2] sm:$0x1]
        %v1530 = vld [vmem:[#allocation2 + $0x2] sm:$0xff]
        %v1531 = vld [vmem:[#allocation2 + $0xa] sm:$0xff]
        %v1532 = vld [vmem:[#allocation2 + $0x1a] sm:$0xff]
        %v1533 = vld [vmem:[#allocation2 + $0x22] sm:$0xff]
        %v1534 = vld [vmem:[#allocation2 + $0x32] sm:$0xff]
        %v1535 = vld [vmem:[#allocation2 + $0x3a] sm:$0xff]
        %v1536 = vld [vmem:[#allocation2 + $0x4a] sm:$0xff]
        %v1537 = vld [vmem:[#allocation2 + $0x52] sm:$0xff]
        %v1538 = vld [vmem:[#allocation2 + $0x62] sm:$0xff]
        %v1539 = vld [vmem:[#allocation2 + $0x6a] sm:$0xff]
        %v1540 = vld [vmem:[#allocation2 + $0x7a] sm:$0xff]
        %v1541 = vld [vmem:[#allocation2 + $0x82] sm:$0xff]
        %v1542 = vld [vmem:[#allocation2 + $0x92] sm:$0xff]
        %v1543 = vld [vmem:[#allocation2 + $0x9a] sm:$0xff]
        %v1544 = vld [vmem:[#allocation2 + $0xaa] sm:$0xff]
        %v1545 = vld [vmem:[#allocation2 + $0xb2] sm:$0xff]
        %v1546 = vld [vmem:[#allocation2 + $0xc2] sm:$0xff]
        %v1547 = vld [vmem:[#allocation2 + $0xca] sm:$0xff]
        %v1548 = vld [vmem:[#allocation2 + $0xda] sm:$0xff]
        %v1549 = vld [vmem:[#allocation2 + $0xe2] sm:$0xff]
        %v1550 = vld [vmem:[#allocation2 + $0xf2] sm:$0xff]
        %v1551 = vld [vmem:[#allocation2 + $0xfa] sm:$0xff]
        %v1552 = vld [vmem:[#allocation2 + $0x10a] sm:$0xff]
        %v1553 = vld [vmem:[#allocation2 + $0x112] sm:$0xff]
        %v1554 = vld [vmem:[#allocation2 + $0x122] sm:$0xff]
        %v1555 = vld [vmem:[#allocation2 + $0x12a] sm:$0xff]
        %v1556 = vld [vmem:[#allocation2 + $0x13a] sm:$0xff]
        %v1557 = vld [vmem:[#allocation2 + $0x142] sm:$0xff]
        %v1558 = vld [vmem:[#allocation2 + $0x152] sm:$0xff]
        %v1559 = vld [vmem:[#allocation2 + $0x15a] sm:$0xff]
        %v1560 = vld [vmem:[#allocation2 + $0x16a] sm:$0xff]
        %v1561 = vld [vmem:[#allocation2 + $0x172] sm:$0xff]
        %v1562 = vlaneseq
        %v1563 = vshrl.u32 %v1562, 7
        %v1564 = vsub.s32 0, %v1563
        %v1565 = vrot.slane %v1529, %v1564
        %v1566 = vmul.f32 %v1530, %v1565
        %v1567 = vmul.f32 %v1531, %v1565
        %v1568 = vmul.f32 %v1532, %v1565
        %v1569 = vmul.f32 %v1533, %v1565
        %v1570 = vmul.f32 %v1534, %v1565
        %v1571 = vmul.f32 %v1535, %v1565
        %v1572 = vmul.f32 %v1536, %v1565
        %v1573 = vmul.f32 %v1537, %v1565
        %v1574 = vmul.f32 %v1538, %v1565
        %v1575 = vmul.f32 %v1539, %v1565
        %v1576 = vmul.f32 %v1540, %v1565
        %v1577 = vmul.f32 %v1541, %v1565
        %v1578 = vmul.f32 %v1542, %v1565
        %v1579 = vmul.f32 %v1543, %v1565
        %v1580 = vmul.f32 %v1544, %v1565
        %v1581 = vmul.f32 %v1545, %v1565
        %v1582 = vmul.f32 %v1546, %v1565
        %v1583 = vmul.f32 %v1547, %v1565
        %v1584 = vmul.f32 %v1548, %v1565
        %v1585 = vmul.f32 %v1549, %v1565
        %v1586 = vmul.f32 %v1550, %v1565
        %v1587 = vmul.f32 %v1551, %v1565
        %v1588 = vmul.f32 %v1552, %v1565
        %v1589 = vmul.f32 %v1553, %v1565
        %v1590 = vmul.f32 %v1554, %v1565
        %v1591 = vmul.f32 %v1555, %v1565
        %v1592 = vmul.f32 %v1556, %v1565
        %v1593 = vmul.f32 %v1557, %v1565
        %v1594 = vmul.f32 %v1558, %v1565
        %v1595 = vmul.f32 %v1559, %v1565
        %v1596 = vmul.f32 %v1560, %v1565
        %v1597 = vmul.f32 %v1561, %v1565
        %v1598 = vadd.f32 %v1497, %v1566
        %v1599 = vadd.f32 %v1498, %v1567
        %v1600 = vadd.f32 %v1499, %v1568
        %v1601 = vadd.f32 %v1500, %v1569
        %v1602 = vadd.f32 %v1501, %v1570
        %v1603 = vadd.f32 %v1502, %v1571
        %v1604 = vadd.f32 %v1503, %v1572
        %v1605 = vadd.f32 %v1504, %v1573
        %v1606 = vadd.f32 %v1505, %v1574
        %v1607 = vadd.f32 %v1506, %v1575
        %v1608 = vadd.f32 %v1507, %v1576
        %v1609 = vadd.f32 %v1508, %v1577
        %v1610 = vadd.f32 %v1509, %v1578
        %v1611 = vadd.f32 %v1510, %v1579
        %v1612 = vadd.f32 %v1511, %v1580
        %v1613 = vadd.f32 %v1512, %v1581
        %v1614 = vadd.f32 %v1513, %v1582
        %v1615 = vadd.f32 %v1514, %v1583
        %v1616 = vadd.f32 %v1515, %v1584
        %v1617 = vadd.f32 %v1516, %v1585
        %v1618 = vadd.f32 %v1517, %v1586
        %v1619 = vadd.f32 %v1518, %v1587
        %v1620 = vadd.f32 %v1519, %v1588
        %v1621 = vadd.f32 %v1520, %v1589
        %v1622 = vadd.f32 %v1521, %v1590
        %v1623 = vadd.f32 %v1522, %v1591
        %v1624 = vadd.f32 %v1523, %v1592
        %v1625 = vadd.f32 %v1524, %v1593
        %v1626 = vadd.f32 %v1525, %v1594
        %v1627 = vadd.f32 %v1526, %v1595
        %v1628 = vadd.f32 %v1527, %v1596
        %v1629 = vadd.f32 %v1528, %v1597
        %s1630 = scalar_lea.vmem %s219, 16
        %v1631 = vld [vmem:[%s1630] sm:$0x1]
        %v1632 = vld [vmem:[%s312] sm:$0xff]
        %v1633 = vld [vmem:[%s312 + $0x8] sm:$0xff]
        %v1634 = vld [vmem:[%s312 + $0x18] sm:$0xff]
        %v1635 = vld [vmem:[%s312 + $0x20] sm:$0xff]
        %v1636 = vld [vmem:[%s312 + $0x30] sm:$0xff]
        %v1637 = vld [vmem:[%s312 + $0x38] sm:$0xff]
        %v1638 = vld [vmem:[%s312 + $0x48] sm:$0xff]
        %v1639 = vld [vmem:[%s312 + $0x50] sm:$0xff]
        %v1640 = vld [vmem:[%s312 + $0x60] sm:$0xff]
        %v1641 = vld [vmem:[%s312 + $0x68] sm:$0xff]
        %v1642 = vld [vmem:[%s312 + $0x78] sm:$0xff]
        %v1643 = vld [vmem:[%s312 + $0x80] sm:$0xff]
        %v1644 = vld [vmem:[%s312 + $0x90] sm:$0xff]
        %v1645 = vld [vmem:[%s312 + $0x98] sm:$0xff]
        %v1646 = vld [vmem:[%s312 + $0xa8] sm:$0xff]
        %v1647 = vld [vmem:[%s312 + $0xb0] sm:$0xff]
        %v1648 = vld [vmem:[%s312 + $0xc0] sm:$0xff]
        %v1649 = vld [vmem:[%s312 + $0xc8] sm:$0xff]
        %v1650 = vld [vmem:[%s312 + $0xd8] sm:$0xff]
        %v1651 = vld [vmem:[%s312 + $0xe0] sm:$0xff]
        %v1652 = vld [vmem:[%s312 + $0xf0] sm:$0xff]
        %v1653 = vld [vmem:[%s312 + $0xf8] sm:$0xff]
        %v1654 = vld [vmem:[%s312 + $0x108] sm:$0xff]
        %v1655 = vld [vmem:[%s312 + $0x110] sm:$0xff]
        %v1656 = vld [vmem:[%s312 + $0x120] sm:$0xff]
        %v1657 = vld [vmem:[%s312 + $0x128] sm:$0xff]
        %v1658 = vld [vmem:[%s312 + $0x138] sm:$0xff]
        %v1659 = vld [vmem:[%s312 + $0x140] sm:$0xff]
        %v1660 = vld [vmem:[%s312 + $0x150] sm:$0xff]
        %v1661 = vld [vmem:[%s312 + $0x158] sm:$0xff]
        %v1662 = vld [vmem:[%s312 + $0x168] sm:$0xff]
        %v1663 = vld [vmem:[%s312 + $0x170] sm:$0xff]
        %v1664 = vlaneseq
        %v1665 = vshrl.u32 %v1664, 7
        %v1666 = vsub.s32 0, %v1665
        %v1667 = vrot.slane %v1631, %v1666
        %v1668 = vmul.f32 %v1632, %v1667
        %v1669 = vmul.f32 %v1633, %v1667
        %v1670 = vmul.f32 %v1634, %v1667
        %v1671 = vmul.f32 %v1635, %v1667
        %v1672 = vmul.f32 %v1636, %v1667
        %v1673 = vmul.f32 %v1637, %v1667
        %v1674 = vmul.f32 %v1638, %v1667
        %v1675 = vmul.f32 %v1639, %v1667
        %v1676 = vmul.f32 %v1640, %v1667
        %v1677 = vmul.f32 %v1641, %v1667
        %v1678 = vmul.f32 %v1642, %v1667
        %v1679 = vmul.f32 %v1643, %v1667
        %v1680 = vmul.f32 %v1644, %v1667
        %v1681 = vmul.f32 %v1645, %v1667
        %v1682 = vmul.f32 %v1646, %v1667
        %v1683 = vmul.f32 %v1647, %v1667
        %v1684 = vmul.f32 %v1648, %v1667
        %v1685 = vmul.f32 %v1649, %v1667
        %v1686 = vmul.f32 %v1650, %v1667
        %v1687 = vmul.f32 %v1651, %v1667
        %v1688 = vmul.f32 %v1652, %v1667
        %v1689 = vmul.f32 %v1653, %v1667
        %v1690 = vmul.f32 %v1654, %v1667
        %v1691 = vmul.f32 %v1655, %v1667
        %v1692 = vmul.f32 %v1656, %v1667
        %v1693 = vmul.f32 %v1657, %v1667
        %v1694 = vmul.f32 %v1658, %v1667
        %v1695 = vmul.f32 %v1659, %v1667
        %v1696 = vmul.f32 %v1660, %v1667
        %v1697 = vmul.f32 %v1661, %v1667
        %v1698 = vmul.f32 %v1662, %v1667
        %v1699 = vmul.f32 %v1663, %v1667
        %v1700 = vadd.f32 %v1598, %v1668
        %v1701 = vadd.f32 %v1599, %v1669
        %v1702 = vadd.f32 %v1600, %v1670
        %v1703 = vadd.f32 %v1601, %v1671
        %v1704 = vadd.f32 %v1602, %v1672
        %v1705 = vadd.f32 %v1603, %v1673
        %v1706 = vadd.f32 %v1604, %v1674
        %v1707 = vadd.f32 %v1605, %v1675
        %v1708 = vadd.f32 %v1606, %v1676
        %v1709 = vadd.f32 %v1607, %v1677
        %v1710 = vadd.f32 %v1608, %v1678
        %v1711 = vadd.f32 %v1609, %v1679
        %v1712 = vadd.f32 %v1610, %v1680
        %v1713 = vadd.f32 %v1611, %v1681
        %v1714 = vadd.f32 %v1612, %v1682
        %v1715 = vadd.f32 %v1613, %v1683
        %v1716 = vadd.f32 %v1614, %v1684
        %v1717 = vadd.f32 %v1615, %v1685
        %v1718 = vadd.f32 %v1616, %v1686
        %v1719 = vadd.f32 %v1617, %v1687
        %v1720 = vadd.f32 %v1618, %v1688
        %v1721 = vadd.f32 %v1619, %v1689
        %v1722 = vadd.f32 %v1620, %v1690
        %v1723 = vadd.f32 %v1621, %v1691
        %v1724 = vadd.f32 %v1622, %v1692
        %v1725 = vadd.f32 %v1623, %v1693
        %v1726 = vadd.f32 %v1624, %v1694
        %v1727 = vadd.f32 %v1625, %v1695
        %v1728 = vadd.f32 %v1626, %v1696
        %v1729 = vadd.f32 %v1627, %v1697
        %v1730 = vadd.f32 %v1628, %v1698
        %v1731 = vadd.f32 %v1629, %v1699
        %v1732 = vld [vmem:[%s1630 + $0x1] sm:$0x1]
        %v1733 = vld [vmem:[%s312 + $0x1] sm:$0xff]
        %v1734 = vld [vmem:[%s312 + $0x9] sm:$0xff]
        %v1735 = vld [vmem:[%s312 + $0x19] sm:$0xff]
        %v1736 = vld [vmem:[%s312 + $0x21] sm:$0xff]
        %v1737 = vld [vmem:[%s312 + $0x31] sm:$0xff]
        %v1738 = vld [vmem:[%s312 + $0x39] sm:$0xff]
        %v1739 = vld [vmem:[%s312 + $0x49] sm:$0xff]
        %v1740 = vld [vmem:[%s312 + $0x51] sm:$0xff]
        %v1741 = vld [vmem:[%s312 + $0x61] sm:$0xff]
        %v1742 = vld [vmem:[%s312 + $0x69] sm:$0xff]
        %v1743 = vld [vmem:[%s312 + $0x79] sm:$0xff]
        %v1744 = vld [vmem:[%s312 + $0x81] sm:$0xff]
        %v1745 = vld [vmem:[%s312 + $0x91] sm:$0xff]
        %v1746 = vld [vmem:[%s312 + $0x99] sm:$0xff]
        %v1747 = vld [vmem:[%s312 + $0xa9] sm:$0xff]
        %v1748 = vld [vmem:[%s312 + $0xb1] sm:$0xff]
        %v1749 = vld [vmem:[%s312 + $0xc1] sm:$0xff]
        %v1750 = vld [vmem:[%s312 + $0xc9] sm:$0xff]
        %v1751 = vld [vmem:[%s312 + $0xd9] sm:$0xff]
        %v1752 = vld [vmem:[%s312 + $0xe1] sm:$0xff]
        %v1753 = vld [vmem:[%s312 + $0xf1] sm:$0xff]
        %v1754 = vld [vmem:[%s312 + $0xf9] sm:$0xff]
        %v1755 = vld [vmem:[%s312 + $0x109] sm:$0xff]
        %v1756 = vld [vmem:[%s312 + $0x111] sm:$0xff]
        %v1757 = vld [vmem:[%s312 + $0x121] sm:$0xff]
        %v1758 = vld [vmem:[%s312 + $0x129] sm:$0xff]
        %v1759 = vld [vmem:[%s312 + $0x139] sm:$0xff]
        %v1760 = vld [vmem:[%s312 + $0x141] sm:$0xff]
        %v1761 = vld [vmem:[%s312 + $0x151] sm:$0xff]
        %v1762 = vld [vmem:[%s312 + $0x159] sm:$0xff]
        %v1763 = vld [vmem:[%s312 + $0x169] sm:$0xff]
        %v1764 = vld [vmem:[%s312 + $0x171] sm:$0xff]
        %v1765 = vlaneseq
        %v1766 = vshrl.u32 %v1765, 7
        %v1767 = vsub.s32 0, %v1766
        %v1768 = vrot.slane %v1732, %v1767
        %v1769 = vmul.f32 %v1733, %v1768
        %v1770 = vmul.f32 %v1734, %v1768
        %v1771 = vmul.f32 %v1735, %v1768
        %v1772 = vmul.f32 %v1736, %v1768
        %v1773 = vmul.f32 %v1737, %v1768
        %v1774 = vmul.f32 %v1738, %v1768
        %v1775 = vmul.f32 %v1739, %v1768
        %v1776 = vmul.f32 %v1740, %v1768
        %v1777 = vmul.f32 %v1741, %v1768
        %v1778 = vmul.f32 %v1742, %v1768
        %v1779 = vmul.f32 %v1743, %v1768
        %v1780 = vmul.f32 %v1744, %v1768
        %v1781 = vmul.f32 %v1745, %v1768
        %v1782 = vmul.f32 %v1746, %v1768
        %v1783 = vmul.f32 %v1747, %v1768
        %v1784 = vmul.f32 %v1748, %v1768
        %v1785 = vmul.f32 %v1749, %v1768
        %v1786 = vmul.f32 %v1750, %v1768
        %v1787 = vmul.f32 %v1751, %v1768
        %v1788 = vmul.f32 %v1752, %v1768
        %v1789 = vmul.f32 %v1753, %v1768
        %v1790 = vmul.f32 %v1754, %v1768
        %v1791 = vmul.f32 %v1755, %v1768
        %v1792 = vmul.f32 %v1756, %v1768
        %v1793 = vmul.f32 %v1757, %v1768
        %v1794 = vmul.f32 %v1758, %v1768
        %v1795 = vmul.f32 %v1759, %v1768
        %v1796 = vmul.f32 %v1760, %v1768
        %v1797 = vmul.f32 %v1761, %v1768
        %v1798 = vmul.f32 %v1762, %v1768
        %v1799 = vmul.f32 %v1763, %v1768
        %v1800 = vmul.f32 %v1764, %v1768
        %v1801 = vadd.f32 %v1700, %v1769
        %v1802 = vadd.f32 %v1701, %v1770
        %v1803 = vadd.f32 %v1702, %v1771
        %v1804 = vadd.f32 %v1703, %v1772
        %v1805 = vadd.f32 %v1704, %v1773
        %v1806 = vadd.f32 %v1705, %v1774
        %v1807 = vadd.f32 %v1706, %v1775
        %v1808 = vadd.f32 %v1707, %v1776
        %v1809 = vadd.f32 %v1708, %v1777
        %v1810 = vadd.f32 %v1709, %v1778
        %v1811 = vadd.f32 %v1710, %v1779
        %v1812 = vadd.f32 %v1711, %v1780
        %v1813 = vadd.f32 %v1712, %v1781
        %v1814 = vadd.f32 %v1713, %v1782
        %v1815 = vadd.f32 %v1714, %v1783
        %v1816 = vadd.f32 %v1715, %v1784
        %v1817 = vadd.f32 %v1716, %v1785
        %v1818 = vadd.f32 %v1717, %v1786
        %v1819 = vadd.f32 %v1718, %v1787
        %v1820 = vadd.f32 %v1719, %v1788
        %v1821 = vadd.f32 %v1720, %v1789
        %v1822 = vadd.f32 %v1721, %v1790
        %v1823 = vadd.f32 %v1722, %v1791
        %v1824 = vadd.f32 %v1723, %v1792
        %v1825 = vadd.f32 %v1724, %v1793
        %v1826 = vadd.f32 %v1725, %v1794
        %v1827 = vadd.f32 %v1726, %v1795
        %v1828 = vadd.f32 %v1727, %v1796
        %v1829 = vadd.f32 %v1728, %v1797
        %v1830 = vadd.f32 %v1729, %v1798
        %v1831 = vadd.f32 %v1730, %v1799
        %v1832 = vadd.f32 %v1731, %v1800
        %v1833 = vld [vmem:[%s1630 + $0x2] sm:$0x1]
        %v1834 = vld [vmem:[%s312 + $0x2] sm:$0xff]
        %v1835 = vld [vmem:[%s312 + $0xa] sm:$0xff]
        %v1836 = vld [vmem:[%s312 + $0x1a] sm:$0xff]
        %v1837 = vld [vmem:[%s312 + $0x22] sm:$0xff]
        %v1838 = vld [vmem:[%s312 + $0x32] sm:$0xff]
        %v1839 = vld [vmem:[%s312 + $0x3a] sm:$0xff]
        %v1840 = vld [vmem:[%s312 + $0x4a] sm:$0xff]
        %v1841 = vld [vmem:[%s312 + $0x52] sm:$0xff]
        %v1842 = vld [vmem:[%s312 + $0x62] sm:$0xff]
        %v1843 = vld [vmem:[%s312 + $0x6a] sm:$0xff]
        %v1844 = vld [vmem:[%s312 + $0x7a] sm:$0xff]
        %v1845 = vld [vmem:[%s312 + $0x82] sm:$0xff]
        %v1846 = vld [vmem:[%s312 + $0x92] sm:$0xff]
        %v1847 = vld [vmem:[%s312 + $0x9a] sm:$0xff]
        %v1848 = vld [vmem:[%s312 + $0xaa] sm:$0xff]
        %v1849 = vld [vmem:[%s312 + $0xb2] sm:$0xff]
        %v1850 = vld [vmem:[%s312 + $0xc2] sm:$0xff]
        %v1851 = vld [vmem:[%s312 + $0xca] sm:$0xff]
        %v1852 = vld [vmem:[%s312 + $0xda] sm:$0xff]
        %v1853 = vld [vmem:[%s312 + $0xe2] sm:$0xff]
        %v1854 = vld [vmem:[%s312 + $0xf2] sm:$0xff]
        %v1855 = vld [vmem:[%s312 + $0xfa] sm:$0xff]
        %v1856 = vld [vmem:[%s312 + $0x10a] sm:$0xff]
        %v1857 = vld [vmem:[%s312 + $0x112] sm:$0xff]
        %v1858 = vld [vmem:[%s312 + $0x122] sm:$0xff]
        %v1859 = vld [vmem:[%s312 + $0x12a] sm:$0xff]
        %v1860 = vld [vmem:[%s312 + $0x13a] sm:$0xff]
        %v1861 = vld [vmem:[%s312 + $0x142] sm:$0xff]
        %v1862 = vld [vmem:[%s312 + $0x152] sm:$0xff]
        %v1863 = vld [vmem:[%s312 + $0x15a] sm:$0xff]
        %v1864 = vld [vmem:[%s312 + $0x16a] sm:$0xff]
        %v1865 = vld [vmem:[%s312 + $0x172] sm:$0xff]
        %v1866 = vlaneseq
        %v1867 = vshrl.u32 %v1866, 7
        %v1868 = vsub.s32 0, %v1867
        %v1869 = vrot.slane %v1833, %v1868
        %v1870 = vmul.f32 %v1834, %v1869
        %v1871 = vmul.f32 %v1835, %v1869
        %v1872 = vmul.f32 %v1836, %v1869
        %v1873 = vmul.f32 %v1837, %v1869
        %v1874 = vmul.f32 %v1838, %v1869
        %v1875 = vmul.f32 %v1839, %v1869
        %v1876 = vmul.f32 %v1840, %v1869
        %v1877 = vmul.f32 %v1841, %v1869
        %v1878 = vmul.f32 %v1842, %v1869
        %v1879 = vmul.f32 %v1843, %v1869
        %v1880 = vmul.f32 %v1844, %v1869
        %v1881 = vmul.f32 %v1845, %v1869
        %v1882 = vmul.f32 %v1846, %v1869
        %v1883 = vmul.f32 %v1847, %v1869
        %v1884 = vmul.f32 %v1848, %v1869
        %v1885 = vmul.f32 %v1849, %v1869
        %v1886 = vmul.f32 %v1850, %v1869
        %v1887 = vmul.f32 %v1851, %v1869
        %v1888 = vmul.f32 %v1852, %v1869
        %v1889 = vmul.f32 %v1853, %v1869
        %v1890 = vmul.f32 %v1854, %v1869
        %v1891 = vmul.f32 %v1855, %v1869
        %v1892 = vmul.f32 %v1856, %v1869
        %v1893 = vmul.f32 %v1857, %v1869
        %v1894 = vmul.f32 %v1858, %v1869
        %v1895 = vmul.f32 %v1859, %v1869
        %v1896 = vmul.f32 %v1860, %v1869
        %v1897 = vmul.f32 %v1861, %v1869
        %v1898 = vmul.f32 %v1862, %v1869
        %v1899 = vmul.f32 %v1863, %v1869
        %v1900 = vmul.f32 %v1864, %v1869
        %v1901 = vmul.f32 %v1865, %v1869
        %v1902 = vadd.f32 %v1801, %v1870
        %v1903 = vadd.f32 %v1802, %v1871
        %v1904 = vadd.f32 %v1803, %v1872
        %v1905 = vadd.f32 %v1804, %v1873
        %v1906 = vadd.f32 %v1805, %v1874
        %v1907 = vadd.f32 %v1806, %v1875
        %v1908 = vadd.f32 %v1807, %v1876
        %v1909 = vadd.f32 %v1808, %v1877
        %v1910 = vadd.f32 %v1809, %v1878
        %v1911 = vadd.f32 %v1810, %v1879
        %v1912 = vadd.f32 %v1811, %v1880
        %v1913 = vadd.f32 %v1812, %v1881
        %v1914 = vadd.f32 %v1813, %v1882
        %v1915 = vadd.f32 %v1814, %v1883
        %v1916 = vadd.f32 %v1815, %v1884
        %v1917 = vadd.f32 %v1816, %v1885
        %v1918 = vadd.f32 %v1817, %v1886
        %v1919 = vadd.f32 %v1818, %v1887
        %v1920 = vadd.f32 %v1819, %v1888
        %v1921 = vadd.f32 %v1820, %v1889
        %v1922 = vadd.f32 %v1821, %v1890
        %v1923 = vadd.f32 %v1822, %v1891
        %v1924 = vadd.f32 %v1823, %v1892
        %v1925 = vadd.f32 %v1824, %v1893
        %v1926 = vadd.f32 %v1825, %v1894
        %v1927 = vadd.f32 %v1826, %v1895
        %v1928 = vadd.f32 %v1827, %v1896
        %v1929 = vadd.f32 %v1828, %v1897
        %v1930 = vadd.f32 %v1829, %v1898
        %v1931 = vadd.f32 %v1830, %v1899
        %v1932 = vadd.f32 %v1831, %v1900
        %v1933 = vadd.f32 %v1832, %v1901
        %s1934 = scalar_lea.vmem %s219, 20
        %v1935 = vld [vmem:[%s1934] sm:$0x1]
        %v1936 = vld [vmem:[%s954] sm:$0xff]
        %v1937 = vld [vmem:[%s954 + $0x8] sm:$0xff]
        %v1938 = vld [vmem:[%s954 + $0x18] sm:$0xff]
        %v1939 = vld [vmem:[%s954 + $0x20] sm:$0xff]
        %v1940 = vld [vmem:[%s954 + $0x30] sm:$0xff]
        %v1941 = vld [vmem:[%s954 + $0x38] sm:$0xff]
        %v1942 = vld [vmem:[%s954 + $0x48] sm:$0xff]
        %v1943 = vld [vmem:[%s954 + $0x50] sm:$0xff]
        %v1944 = vld [vmem:[%s954 + $0x60] sm:$0xff]
        %v1945 = vld [vmem:[%s954 + $0x68] sm:$0xff]
        %v1946 = vld [vmem:[%s954 + $0x78] sm:$0xff]
        %v1947 = vld [vmem:[%s954 + $0x80] sm:$0xff]
        %v1948 = vld [vmem:[%s954 + $0x90] sm:$0xff]
        %v1949 = vld [vmem:[%s954 + $0x98] sm:$0xff]
        %v1950 = vld [vmem:[%s954 + $0xa8] sm:$0xff]
        %v1951 = vld [vmem:[%s954 + $0xb0] sm:$0xff]
        %v1952 = vld [vmem:[%s954 + $0xc0] sm:$0xff]
        %v1953 = vld [vmem:[%s954 + $0xc8] sm:$0xff]
        %v1954 = vld [vmem:[%s954 + $0xd8] sm:$0xff]
        %v1955 = vld [vmem:[%s954 + $0xe0] sm:$0xff]
        %v1956 = vld [vmem:[%s954 + $0xf0] sm:$0xff]
        %v1957 = vld [vmem:[%s954 + $0xf8] sm:$0xff]
        %v1958 = vld [vmem:[%s954 + $0x108] sm:$0xff]
        %v1959 = vld [vmem:[%s954 + $0x110] sm:$0xff]
        %v1960 = vld [vmem:[%s954 + $0x120] sm:$0xff]
        %v1961 = vld [vmem:[%s954 + $0x128] sm:$0xff]
        %v1962 = vld [vmem:[%s954 + $0x138] sm:$0xff]
        %v1963 = vld [vmem:[%s954 + $0x140] sm:$0xff]
        %v1964 = vld [vmem:[%s954 + $0x150] sm:$0xff]
        %v1965 = vld [vmem:[%s954 + $0x158] sm:$0xff]
        %v1966 = vld [vmem:[%s954 + $0x168] sm:$0xff]
        %v1967 = vld [vmem:[%s954 + $0x170] sm:$0xff]
        %v1968 = vlaneseq
        %v1969 = vshrl.u32 %v1968, 7
        %v1970 = vsub.s32 0, %v1969
        %v1971 = vrot.slane %v1935, %v1970
        %v1972 = vmul.f32 %v1936, %v1971
        %v1973 = vmul.f32 %v1937, %v1971
        %v1974 = vmul.f32 %v1938, %v1971
        %v1975 = vmul.f32 %v1939, %v1971
        %v1976 = vmul.f32 %v1940, %v1971
        %v1977 = vmul.f32 %v1941, %v1971
        %v1978 = vmul.f32 %v1942, %v1971
        %v1979 = vmul.f32 %v1943, %v1971
        %v1980 = vmul.f32 %v1944, %v1971
        %v1981 = vmul.f32 %v1945, %v1971
        %v1982 = vmul.f32 %v1946, %v1971
        %v1983 = vmul.f32 %v1947, %v1971
        %v1984 = vmul.f32 %v1948, %v1971
        %v1985 = vmul.f32 %v1949, %v1971
        %v1986 = vmul.f32 %v1950, %v1971
        %v1987 = vmul.f32 %v1951, %v1971
        %v1988 = vmul.f32 %v1952, %v1971
        %v1989 = vmul.f32 %v1953, %v1971
        %v1990 = vmul.f32 %v1954, %v1971
        %v1991 = vmul.f32 %v1955, %v1971
        %v1992 = vmul.f32 %v1956, %v1971
        %v1993 = vmul.f32 %v1957, %v1971
        %v1994 = vmul.f32 %v1958, %v1971
        %v1995 = vmul.f32 %v1959, %v1971
        %v1996 = vmul.f32 %v1960, %v1971
        %v1997 = vmul.f32 %v1961, %v1971
        %v1998 = vmul.f32 %v1962, %v1971
        %v1999 = vmul.f32 %v1963, %v1971
        %v2000 = vmul.f32 %v1964, %v1971
        %v2001 = vmul.f32 %v1965, %v1971
        %v2002 = vmul.f32 %v1966, %v1971
        %v2003 = vmul.f32 %v1967, %v1971
        %v2004 = vadd.f32 %v1902, %v1972
        %v2005 = vadd.f32 %v1903, %v1973
        %v2006 = vadd.f32 %v1904, %v1974
        %v2007 = vadd.f32 %v1905, %v1975
        %v2008 = vadd.f32 %v1906, %v1976
        %v2009 = vadd.f32 %v1907, %v1977
        %v2010 = vadd.f32 %v1908, %v1978
        %v2011 = vadd.f32 %v1909, %v1979
        %v2012 = vadd.f32 %v1910, %v1980
        %v2013 = vadd.f32 %v1911, %v1981
        %v2014 = vadd.f32 %v1912, %v1982
        %v2015 = vadd.f32 %v1913, %v1983
        %v2016 = vadd.f32 %v1914, %v1984
        %v2017 = vadd.f32 %v1915, %v1985
        %v2018 = vadd.f32 %v1916, %v1986
        %v2019 = vadd.f32 %v1917, %v1987
        %v2020 = vadd.f32 %v1918, %v1988
        %v2021 = vadd.f32 %v1919, %v1989
        %v2022 = vadd.f32 %v1920, %v1990
        %v2023 = vadd.f32 %v1921, %v1991
        %v2024 = vadd.f32 %v1922, %v1992
        %v2025 = vadd.f32 %v1923, %v1993
        %v2026 = vadd.f32 %v1924, %v1994
        %v2027 = vadd.f32 %v1925, %v1995
        %v2028 = vadd.f32 %v1926, %v1996
        %v2029 = vadd.f32 %v1927, %v1997
        %v2030 = vadd.f32 %v1928, %v1998
        %v2031 = vadd.f32 %v1929, %v1999
        %v2032 = vadd.f32 %v1930, %v2000
        %v2033 = vadd.f32 %v1931, %v2001
        %v2034 = vadd.f32 %v1932, %v2002
        %v2035 = vadd.f32 %v1933, %v2003
        %v2036 = vld [vmem:[%s1934 + $0x1] sm:$0x1]
        %v2037 = vld [vmem:[%s954 + $0x1] sm:$0xff]
        %v2038 = vld [vmem:[%s954 + $0x9] sm:$0xff]
        %v2039 = vld [vmem:[%s954 + $0x19] sm:$0xff]
        %v2040 = vld [vmem:[%s954 + $0x21] sm:$0xff]
        %v2041 = vld [vmem:[%s954 + $0x31] sm:$0xff]
        %v2042 = vld [vmem:[%s954 + $0x39] sm:$0xff]
        %v2043 = vld [vmem:[%s954 + $0x49] sm:$0xff]
        %v2044 = vld [vmem:[%s954 + $0x51] sm:$0xff]
        %v2045 = vld [vmem:[%s954 + $0x61] sm:$0xff]
        %v2046 = vld [vmem:[%s954 + $0x69] sm:$0xff]
        %v2047 = vld [vmem:[%s954 + $0x79] sm:$0xff]
        %v2048 = vld [vmem:[%s954 + $0x81] sm:$0xff]
        %v2049 = vld [vmem:[%s954 + $0x91] sm:$0xff]
        %v2050 = vld [vmem:[%s954 + $0x99] sm:$0xff]
        %v2051 = vld [vmem:[%s954 + $0xa9] sm:$0xff]
        %v2052 = vld [vmem:[%s954 + $0xb1] sm:$0xff]
        %v2053 = vld [vmem:[%s954 + $0xc1] sm:$0xff]
        %v2054 = vld [vmem:[%s954 + $0xc9] sm:$0xff]
        %v2055 = vld [vmem:[%s954 + $0xd9] sm:$0xff]
        %v2056 = vld [vmem:[%s954 + $0xe1] sm:$0xff]
        %v2057 = vld [vmem:[%s954 + $0xf1] sm:$0xff]
        %v2058 = vld [vmem:[%s954 + $0xf9] sm:$0xff]
        %v2059 = vld [vmem:[%s954 + $0x109] sm:$0xff]
        %v2060 = vld [vmem:[%s954 + $0x111] sm:$0xff]
        %v2061 = vld [vmem:[%s954 + $0x121] sm:$0xff]
        %v2062 = vld [vmem:[%s954 + $0x129] sm:$0xff]
        %v2063 = vld [vmem:[%s954 + $0x139] sm:$0xff]
        %v2064 = vld [vmem:[%s954 + $0x141] sm:$0xff]
        %v2065 = vld [vmem:[%s954 + $0x151] sm:$0xff]
        %v2066 = vld [vmem:[%s954 + $0x159] sm:$0xff]
        %v2067 = vld [vmem:[%s954 + $0x169] sm:$0xff]
        %v2068 = vld [vmem:[%s954 + $0x171] sm:$0xff]
        %v2069 = vlaneseq
        %v2070 = vshrl.u32 %v2069, 7
        %v2071 = vsub.s32 0, %v2070
        %v2072 = vrot.slane %v2036, %v2071
        %v2073 = vmul.f32 %v2037, %v2072
        %v2074 = vmul.f32 %v2038, %v2072
        %v2075 = vmul.f32 %v2039, %v2072
        %v2076 = vmul.f32 %v2040, %v2072
        %v2077 = vmul.f32 %v2041, %v2072
        %v2078 = vmul.f32 %v2042, %v2072
        %v2079 = vmul.f32 %v2043, %v2072
        %v2080 = vmul.f32 %v2044, %v2072
        %v2081 = vmul.f32 %v2045, %v2072
        %v2082 = vmul.f32 %v2046, %v2072
        %v2083 = vmul.f32 %v2047, %v2072
        %v2084 = vmul.f32 %v2048, %v2072
        %v2085 = vmul.f32 %v2049, %v2072
        %v2086 = vmul.f32 %v2050, %v2072
        %v2087 = vmul.f32 %v2051, %v2072
        %v2088 = vmul.f32 %v2052, %v2072
        %v2089 = vmul.f32 %v2053, %v2072
        %v2090 = vmul.f32 %v2054, %v2072
        %v2091 = vmul.f32 %v2055, %v2072
        %v2092 = vmul.f32 %v2056, %v2072
        %v2093 = vmul.f32 %v2057, %v2072
        %v2094 = vmul.f32 %v2058, %v2072
        %v2095 = vmul.f32 %v2059, %v2072
        %v2096 = vmul.f32 %v2060, %v2072
        %v2097 = vmul.f32 %v2061, %v2072
        %v2098 = vmul.f32 %v2062, %v2072
        %v2099 = vmul.f32 %v2063, %v2072
        %v2100 = vmul.f32 %v2064, %v2072
        %v2101 = vmul.f32 %v2065, %v2072
        %v2102 = vmul.f32 %v2066, %v2072
        %v2103 = vmul.f32 %v2067, %v2072
        %v2104 = vmul.f32 %v2068, %v2072
        %v2105 = vadd.f32 %v2004, %v2073
        %v2106 = vadd.f32 %v2005, %v2074
        %v2107 = vadd.f32 %v2006, %v2075
        %v2108 = vadd.f32 %v2007, %v2076
        %v2109 = vadd.f32 %v2008, %v2077
        %v2110 = vadd.f32 %v2009, %v2078
        %v2111 = vadd.f32 %v2010, %v2079
        %v2112 = vadd.f32 %v2011, %v2080
        %v2113 = vadd.f32 %v2012, %v2081
        %v2114 = vadd.f32 %v2013, %v2082
        %v2115 = vadd.f32 %v2014, %v2083
        %v2116 = vadd.f32 %v2015, %v2084
        %v2117 = vadd.f32 %v2016, %v2085
        %v2118 = vadd.f32 %v2017, %v2086
        %v2119 = vadd.f32 %v2018, %v2087
        %v2120 = vadd.f32 %v2019, %v2088
        %v2121 = vadd.f32 %v2020, %v2089
        %v2122 = vadd.f32 %v2021, %v2090
        %v2123 = vadd.f32 %v2022, %v2091
        %v2124 = vadd.f32 %v2023, %v2092
        %v2125 = vadd.f32 %v2024, %v2093
        %v2126 = vadd.f32 %v2025, %v2094
        %v2127 = vadd.f32 %v2026, %v2095
        %v2128 = vadd.f32 %v2027, %v2096
        %v2129 = vadd.f32 %v2028, %v2097
        %v2130 = vadd.f32 %v2029, %v2098
        %v2131 = vadd.f32 %v2030, %v2099
        %v2132 = vadd.f32 %v2031, %v2100
        %v2133 = vadd.f32 %v2032, %v2101
        %v2134 = vadd.f32 %v2033, %v2102
        %v2135 = vadd.f32 %v2034, %v2103
        %v2136 = vadd.f32 %v2035, %v2104
        %v2137 = vld [vmem:[%s1934 + $0x2] sm:$0x1]
        %v2138 = vld [vmem:[%s954 + $0x2] sm:$0xff]
        %v2139 = vld [vmem:[%s954 + $0xa] sm:$0xff]
        %v2140 = vld [vmem:[%s954 + $0x1a] sm:$0xff]
        %v2141 = vld [vmem:[%s954 + $0x22] sm:$0xff]
        %v2142 = vld [vmem:[%s954 + $0x32] sm:$0xff]
        %v2143 = vld [vmem:[%s954 + $0x3a] sm:$0xff]
        %v2144 = vld [vmem:[%s954 + $0x4a] sm:$0xff]
        %v2145 = vld [vmem:[%s954 + $0x52] sm:$0xff]
        %v2146 = vld [vmem:[%s954 + $0x62] sm:$0xff]
        %v2147 = vld [vmem:[%s954 + $0x6a] sm:$0xff]
        %v2148 = vld [vmem:[%s954 + $0x7a] sm:$0xff]
        %v2149 = vld [vmem:[%s954 + $0x82] sm:$0xff]
        %v2150 = vld [vmem:[%s954 + $0x92] sm:$0xff]
        %v2151 = vld [vmem:[%s954 + $0x9a] sm:$0xff]
        %v2152 = vld [vmem:[%s954 + $0xaa] sm:$0xff]
        %v2153 = vld [vmem:[%s954 + $0xb2] sm:$0xff]
        %v2154 = vld [vmem:[%s954 + $0xc2] sm:$0xff]
        %v2155 = vld [vmem:[%s954 + $0xca] sm:$0xff]
        %v2156 = vld [vmem:[%s954 + $0xda] sm:$0xff]
        %v2157 = vld [vmem:[%s954 + $0xe2] sm:$0xff]
        %v2158 = vld [vmem:[%s954 + $0xf2] sm:$0xff]
        %v2159 = vld [vmem:[%s954 + $0xfa] sm:$0xff]
        %v2160 = vld [vmem:[%s954 + $0x10a] sm:$0xff]
        %v2161 = vld [vmem:[%s954 + $0x112] sm:$0xff]
        %v2162 = vld [vmem:[%s954 + $0x122] sm:$0xff]
        %v2163 = vld [vmem:[%s954 + $0x12a] sm:$0xff]
        %v2164 = vld [vmem:[%s954 + $0x13a] sm:$0xff]
        %v2165 = vld [vmem:[%s954 + $0x142] sm:$0xff]
        %v2166 = vld [vmem:[%s954 + $0x152] sm:$0xff]
        %v2167 = vld [vmem:[%s954 + $0x15a] sm:$0xff]
        %v2168 = vld [vmem:[%s954 + $0x16a] sm:$0xff]
        %v2169 = vld [vmem:[%s954 + $0x172] sm:$0xff]
        %v2170 = vlaneseq
        %v2171 = vshrl.u32 %v2170, 7
        %v2172 = vsub.s32 0, %v2171
        %v2173 = vrot.slane %v2137, %v2172
        %v2174 = vmul.f32 %v2138, %v2173
        %v2175 = vmul.f32 %v2139, %v2173
        %v2176 = vmul.f32 %v2140, %v2173
        %v2177 = vmul.f32 %v2141, %v2173
        %v2178 = vmul.f32 %v2142, %v2173
        %v2179 = vmul.f32 %v2143, %v2173
        %v2180 = vmul.f32 %v2144, %v2173
        %v2181 = vmul.f32 %v2145, %v2173
        %v2182 = vmul.f32 %v2146, %v2173
        %v2183 = vmul.f32 %v2147, %v2173
        %v2184 = vmul.f32 %v2148, %v2173
        %v2185 = vmul.f32 %v2149, %v2173
        %v2186 = vmul.f32 %v2150, %v2173
        %v2187 = vmul.f32 %v2151, %v2173
        %v2188 = vmul.f32 %v2152, %v2173
        %v2189 = vmul.f32 %v2153, %v2173
        %v2190 = vmul.f32 %v2154, %v2173
        %v2191 = vmul.f32 %v2155, %v2173
        %v2192 = vmul.f32 %v2156, %v2173
        %v2193 = vmul.f32 %v2157, %v2173
        %v2194 = vmul.f32 %v2158, %v2173
        %v2195 = vmul.f32 %v2159, %v2173
        %v2196 = vmul.f32 %v2160, %v2173
        %v2197 = vmul.f32 %v2161, %v2173
        %v2198 = vmul.f32 %v2162, %v2173
        %v2199 = vmul.f32 %v2163, %v2173
        %v2200 = vmul.f32 %v2164, %v2173
        %v2201 = vmul.f32 %v2165, %v2173
        %v2202 = vmul.f32 %v2166, %v2173
        %v2203 = vmul.f32 %v2167, %v2173
        %v2204 = vmul.f32 %v2168, %v2173
        %v2205 = vmul.f32 %v2169, %v2173
        %v2206 = vadd.f32 %v2105, %v2174
        %v2207 = vadd.f32 %v2106, %v2175
        %v2208 = vadd.f32 %v2107, %v2176
        %v2209 = vadd.f32 %v2108, %v2177
        %v2210 = vadd.f32 %v2109, %v2178
        %v2211 = vadd.f32 %v2110, %v2179
        %v2212 = vadd.f32 %v2111, %v2180
        %v2213 = vadd.f32 %v2112, %v2181
        %v2214 = vadd.f32 %v2113, %v2182
        %v2215 = vadd.f32 %v2114, %v2183
        %v2216 = vadd.f32 %v2115, %v2184
        %v2217 = vadd.f32 %v2116, %v2185
        %v2218 = vadd.f32 %v2117, %v2186
        %v2219 = vadd.f32 %v2118, %v2187
        %v2220 = vadd.f32 %v2119, %v2188
        %v2221 = vadd.f32 %v2120, %v2189
        %v2222 = vadd.f32 %v2121, %v2190
        %v2223 = vadd.f32 %v2122, %v2191
        %v2224 = vadd.f32 %v2123, %v2192
        %v2225 = vadd.f32 %v2124, %v2193
        %v2226 = vadd.f32 %v2125, %v2194
        %v2227 = vadd.f32 %v2126, %v2195
        %v2228 = vadd.f32 %v2127, %v2196
        %v2229 = vadd.f32 %v2128, %v2197
        %v2230 = vadd.f32 %v2129, %v2198
        %v2231 = vadd.f32 %v2130, %v2199
        %v2232 = vadd.f32 %v2131, %v2200
        %v2233 = vadd.f32 %v2132, %v2201
        %v2234 = vadd.f32 %v2133, %v2202
        %v2235 = vadd.f32 %v2134, %v2203
        %v2236 = vadd.f32 %v2135, %v2204
        %v2237 = vadd.f32 %v2136, %v2205
        %v2238 = vld [vmem:[%s223 + $0x1] sm:$0x1]
        %v2239 = vlaneseq
        %v2240 = vshrl.u32 %v2239, 7
        %v2241 = vsub.s32 0, %v2240
        %v2242 = vrot.slane %v2238, %v2241
        %v2243 = vadd.f32 %v2206, %v2242
        %v2244 = vadd.f32 %v2207, %v2242
        %v2245 = vadd.f32 %v2208, %v2242
        %v2246 = vadd.f32 %v2209, %v2242
        %v2247 = vadd.f32 %v2210, %v2242
        %v2248 = vadd.f32 %v2211, %v2242
        %v2249 = vadd.f32 %v2212, %v2242
        %v2250 = vadd.f32 %v2213, %v2242
        %v2251 = vadd.f32 %v2214, %v2242
        %v2252 = vadd.f32 %v2215, %v2242
        %v2253 = vadd.f32 %v2216, %v2242
        %v2254 = vadd.f32 %v2217, %v2242
        %v2255 = vadd.f32 %v2218, %v2242
        %v2256 = vadd.f32 %v2219, %v2242
        %v2257 = vadd.f32 %v2220, %v2242
        %v2258 = vadd.f32 %v2221, %v2242
        %v2259 = vadd.f32 %v2222, %v2242
        %v2260 = vadd.f32 %v2223, %v2242
        %v2261 = vadd.f32 %v2224, %v2242
        %v2262 = vadd.f32 %v2225, %v2242
        %v2263 = vadd.f32 %v2226, %v2242
        %v2264 = vadd.f32 %v2227, %v2242
        %v2265 = vadd.f32 %v2228, %v2242
        %v2266 = vadd.f32 %v2229, %v2242
        %v2267 = vadd.f32 %v2230, %v2242
        %v2268 = vadd.f32 %v2231, %v2242
        %v2269 = vadd.f32 %v2232, %v2242
        %v2270 = vadd.f32 %v2233, %v2242
        %v2271 = vadd.f32 %v2234, %v2242
        %v2272 = vadd.f32 %v2235, %v2242
        %v2273 = vadd.f32 %v2236, %v2242
        %v2274 = vadd.f32 %v2237, %v2242
        %s2275 = scalar_lea.vmem %s207, 256 [#allocation3]
        %2276 = vst.msk [vmem:[%s2275] sm:$0xff] %vm224, %v2243
        %2277 = vst.msk [vmem:[%s2275 + $0x8] sm:$0xff] %vm224, %v2244
        %2278 = vst.msk [vmem:[%s2275 + $0x10] sm:$0xff] %vm224, %v2245
        %2279 = vst.msk [vmem:[%s2275 + $0x18] sm:$0xff] %vm224, %v2246
        %2280 = vst.msk [vmem:[%s2275 + $0x20] sm:$0xff] %vm224, %v2247
        %2281 = vst.msk [vmem:[%s2275 + $0x28] sm:$0xff] %vm224, %v2248
        %2282 = vst.msk [vmem:[%s2275 + $0x30] sm:$0xff] %vm224, %v2249
        %2283 = vst.msk [vmem:[%s2275 + $0x38] sm:$0xff] %vm224, %v2250
        %2284 = vst.msk [vmem:[%s2275 + $0x40] sm:$0xff] %vm224, %v2251
        %2285 = vst.msk [vmem:[%s2275 + $0x48] sm:$0xff] %vm224, %v2252
        %2286 = vst.msk [vmem:[%s2275 + $0x50] sm:$0xff] %vm224, %v2253
        %2287 = vst.msk [vmem:[%s2275 + $0x58] sm:$0xff] %vm224, %v2254
        %2288 = vst.msk [vmem:[%s2275 + $0x60] sm:$0xff] %vm224, %v2255
        %2289 = vst.msk [vmem:[%s2275 + $0x68] sm:$0xff] %vm224, %v2256
        %2290 = vst.msk [vmem:[%s2275 + $0x70] sm:$0xff] %vm224, %v2257
        %2291 = vst.msk [vmem:[%s2275 + $0x78] sm:$0xff] %vm224, %v2258
        %2292 = vst.msk [vmem:[%s2275 + $0x80] sm:$0xff] %vm224, %v2259
        %2293 = vst.msk [vmem:[%s2275 + $0x88] sm:$0xff] %vm224, %v2260
        %2294 = vst.msk [vmem:[%s2275 + $0x90] sm:$0xff] %vm224, %v2261
        %2295 = vst.msk [vmem:[%s2275 + $0x98] sm:$0xff] %vm224, %v2262
        %2296 = vst.msk [vmem:[%s2275 + $0xa0] sm:$0xff] %vm224, %v2263
        %2297 = vst.msk [vmem:[%s2275 + $0xa8] sm:$0xff] %vm224, %v2264
        %2298 = vst.msk [vmem:[%s2275 + $0xb0] sm:$0xff] %vm224, %v2265
        %2299 = vst.msk [vmem:[%s2275 + $0xb8] sm:$0xff] %vm224, %v2266
        %2300 = vst.msk [vmem:[%s2275 + $0xc0] sm:$0xff] %vm224, %v2267
        %2301 = vst.msk [vmem:[%s2275 + $0xc8] sm:$0xff] %vm224, %v2268
        %2302 = vst.msk [vmem:[%s2275 + $0xd0] sm:$0xff] %vm224, %v2269
        %2303 = vst.msk [vmem:[%s2275 + $0xd8] sm:$0xff] %vm224, %v2270
        %2304 = vst.msk [vmem:[%s2275 + $0xe0] sm:$0xff] %vm224, %v2271
        %2305 = vst.msk [vmem:[%s2275 + $0xe8] sm:$0xff] %vm224, %v2272
        %2306 = vst.msk [vmem:[%s2275 + $0xf0] sm:$0xff] %vm224, %v2273
        %2307 = vst.msk [vmem:[%s2275 + $0xf8] sm:$0xff] %vm224, %v2274
        %s2308 = sand.u32 %s116, 1
        %s2309 = sand.u32 %s116, 1
        %s2310 = smul.addr %s2309, 512
        %s2311 = scalar_lea.vmem [#allocation3], %s2310
        // Predicated region
        $region33: #{tpu_custom_call.1} parent=31 // pred_check
          %p2312 = pneg %p126
        $region34: #{tpu_custom_call.1} parent=31 // pred_check_branch
          %2314 = sbr.rel (%p2312) target = $region36
        $region35: #{tpu_custom_call.1} parent=31 // pred_region
          %s2315 = smul.addr %s19, 32
          %s2316 = sadd.s32 %s18, %s2315
          %s2317 = smul.addr %s2316, 8
          %s2318 = scalar_lea.vmem %s3, %s2317
          // Predicated region
          $region37: #{tpu_custom_call.1} parent=35 // pred_check
            _
          $region38: #{tpu_custom_call.1} parent=35 // pred_check_branch
            %2320 = sbr.rel (0) target = $region40
          $region39: #{tpu_custom_call.1} parent=35 // pred_region
            // Predicated region
            $region41: #{tpu_custom_call.1} parent=39 // pred_check
              _
            $region42: #{tpu_custom_call.1} parent=39 // pred_check_branch
              %2322 = sbr.rel (0) target = $region44
            $region43: #{tpu_custom_call.1} parent=39 // pred_region
              // Predicated region
              $region56: #{tpu_custom_call.1} parent=43 // pred_check
                _
              $region57: #{tpu_custom_call.1} parent=43 // pred_check_branch
                %2464 = sbr.rel (0) target = $region59
              $region58: #{tpu_custom_call.1} parent=43 // pred_region
                loop: start=0, step=1, limit=1
                $region60: #{tpu_custom_call.1} parent=58 // loop_pre_header
                  _
                $region61: #{tpu_custom_call.1} parent=58 // loop_header
                  %s2466 = sphi 0, %s2470
                  %p2467 = scmp.ge.s32.totalorder %s2466, 1
                  %s2471 = sphi %s2311, %s2311
                  %s2472 = sphi %s2318, %s2318
                $region62: #{tpu_custom_call.1} parent=58 // loop_header_branch
                  %2469 = sbr.rel (%p2467) target = $region66
                $region63: #{tpu_custom_call.1} parent=58 // loop_body
                  %v2473 = vld [vmem:[%s2471] sm:$0xff]
                  %2474 = vst [vmem:[%s2472] sm:$0xff] %v2473
                  %v2475 = vld [vmem:[%s2471 + $0x8] sm:$0xff]
                  %2476 = vst [vmem:[%s2472 + $0x8] sm:$0xff] %v2475
                  %v2477 = vld [vmem:[%s2471 + $0x10] sm:$0xff]
                  %2478 = vst [vmem:[%s2472 + $0x10] sm:$0xff] %v2477
                  %v2479 = vld [vmem:[%s2471 + $0x18] sm:$0xff]
                  %2480 = vst [vmem:[%s2472 + $0x18] sm:$0xff] %v2479
                  %v2481 = vld [vmem:[%s2471 + $0x20] sm:$0xff]
                  %2482 = vst [vmem:[%s2472 + $0x20] sm:$0xff] %v2481
                  %v2483 = vld [vmem:[%s2471 + $0x28] sm:$0xff]
                  %2484 = vst [vmem:[%s2472 + $0x28] sm:$0xff] %v2483
                  %v2485 = vld [vmem:[%s2471 + $0x30] sm:$0xff]
                  %2486 = vst [vmem:[%s2472 + $0x30] sm:$0xff] %v2485
                  %v2487 = vld [vmem:[%s2471 + $0x38] sm:$0xff]
                  %2488 = vst [vmem:[%s2472 + $0x38] sm:$0xff] %v2487
                  %v2489 = vld [vmem:[%s2471 + $0x40] sm:$0xff]
                  %2490 = vst [vmem:[%s2472 + $0x40] sm:$0xff] %v2489
                  %v2491 = vld [vmem:[%s2471 + $0x48] sm:$0xff]
                  %2492 = vst [vmem:[%s2472 + $0x48] sm:$0xff] %v2491
                  %v2493 = vld [vmem:[%s2471 + $0x50] sm:$0xff]
                  %2494 = vst [vmem:[%s2472 + $0x50] sm:$0xff] %v2493
                  %v2495 = vld [vmem:[%s2471 + $0x58] sm:$0xff]
                  %2496 = vst [vmem:[%s2472 + $0x58] sm:$0xff] %v2495
                  %v2497 = vld [vmem:[%s2471 + $0x60] sm:$0xff]
                  %2498 = vst [vmem:[%s2472 + $0x60] sm:$0xff] %v2497
                  %v2499 = vld [vmem:[%s2471 + $0x68] sm:$0xff]
                  %2500 = vst [vmem:[%s2472 + $0x68] sm:$0xff] %v2499
                  %v2501 = vld [vmem:[%s2471 + $0x70] sm:$0xff]
                  %2502 = vst [vmem:[%s2472 + $0x70] sm:$0xff] %v2501
                  %v2503 = vld [vmem:[%s2471 + $0x78] sm:$0xff]
                  %2504 = vst [vmem:[%s2472 + $0x78] sm:$0xff] %v2503
                  %v2505 = vld [vmem:[%s2471 + $0x80] sm:$0xff]
                  %2506 = vst [vmem:[%s2472 + $0x80] sm:$0xff] %v2505
                  %v2507 = vld [vmem:[%s2471 + $0x88] sm:$0xff]
                  %2508 = vst [vmem:[%s2472 + $0x88] sm:$0xff] %v2507
                  %v2509 = vld [vmem:[%s2471 + $0x90] sm:$0xff]
                  %2510 = vst [vmem:[%s2472 + $0x90] sm:$0xff] %v2509
                  %v2511 = vld [vmem:[%s2471 + $0x98] sm:$0xff]
                  %2512 = vst [vmem:[%s2472 + $0x98] sm:$0xff] %v2511
                  %v2513 = vld [vmem:[%s2471 + $0xa0] sm:$0xff]
                  %2514 = vst [vmem:[%s2472 + $0xa0] sm:$0xff] %v2513
                  %v2515 = vld [vmem:[%s2471 + $0xa8] sm:$0xff]
                  %2516 = vst [vmem:[%s2472 + $0xa8] sm:$0xff] %v2515
                  %v2517 = vld [vmem:[%s2471 + $0xb0] sm:$0xff]
                  %2518 = vst [vmem:[%s2472 + $0xb0] sm:$0xff] %v2517
                  %v2519 = vld [vmem:[%s2471 + $0xb8] sm:$0xff]
                  %2520 = vst [vmem:[%s2472 + $0xb8] sm:$0xff] %v2519
                  %v2521 = vld [vmem:[%s2471 + $0xc0] sm:$0xff]
                  %2522 = vst [vmem:[%s2472 + $0xc0] sm:$0xff] %v2521
                  %v2523 = vld [vmem:[%s2471 + $0xc8] sm:$0xff]
                  %2524 = vst [vmem:[%s2472 + $0xc8] sm:$0xff] %v2523
                  %v2525 = vld [vmem:[%s2471 + $0xd0] sm:$0xff]
                  %2526 = vst [vmem:[%s2472 + $0xd0] sm:$0xff] %v2525
                  %v2527 = vld [vmem:[%s2471 + $0xd8] sm:$0xff]
                  %2528 = vst [vmem:[%s2472 + $0xd8] sm:$0xff] %v2527
                  %v2529 = vld [vmem:[%s2471 + $0xe0] sm:$0xff]
                  %2530 = vst [vmem:[%s2472 + $0xe0] sm:$0xff] %v2529
                  %v2531 = vld [vmem:[%s2471 + $0xe8] sm:$0xff]
                  %2532 = vst [vmem:[%s2472 + $0xe8] sm:$0xff] %v2531
                  %v2533 = vld [vmem:[%s2471 + $0xf0] sm:$0xff]
                  %2534 = vst [vmem:[%s2472 + $0xf0] sm:$0xff] %v2533
                  %v2535 = vld [vmem:[%s2471 + $0xf8] sm:$0xff]
                  %2536 = vst [vmem:[%s2472 + $0xf8] sm:$0xff] %v2535
                  %v2537 = vld [vmem:[%s2471 + $0x100] sm:$0xff]
                  %2538 = vst [vmem:[%s2472 + $0x200] sm:$0xff] %v2537
                  %v2539 = vld [vmem:[%s2471 + $0x108] sm:$0xff]
                  %2540 = vst [vmem:[%s2472 + $0x208] sm:$0xff] %v2539
                  %v2541 = vld [vmem:[%s2471 + $0x110] sm:$0xff]
                  %2542 = vst [vmem:[%s2472 + $0x210] sm:$0xff] %v2541
                  %v2543 = vld [vmem:[%s2471 + $0x118] sm:$0xff]
                  %2544 = vst [vmem:[%s2472 + $0x218] sm:$0xff] %v2543
                  %v2545 = vld [vmem:[%s2471 + $0x120] sm:$0xff]
                  %2546 = vst [vmem:[%s2472 + $0x220] sm:$0xff] %v2545
                  %v2547 = vld [vmem:[%s2471 + $0x128] sm:$0xff]
                  %2548 = vst [vmem:[%s2472 + $0x228] sm:$0xff] %v2547
                  %v2549 = vld [vmem:[%s2471 + $0x130] sm:$0xff]
                  %2550 = vst [vmem:[%s2472 + $0x230] sm:$0xff] %v2549
                  %v2551 = vld [vmem:[%s2471 + $0x138] sm:$0xff]
                  %2552 = vst [vmem:[%s2472 + $0x238] sm:$0xff] %v2551
                  %v2553 = vld [vmem:[%s2471 + $0x140] sm:$0xff]
                  %2554 = vst [vmem:[%s2472 + $0x240] sm:$0xff] %v2553
                  %v2555 = vld [vmem:[%s2471 + $0x148] sm:$0xff]
                  %2556 = vst [vmem:[%s2472 + $0x248] sm:$0xff] %v2555
                  %v2557 = vld [vmem:[%s2471 + $0x150] sm:$0xff]
                  %2558 = vst [vmem:[%s2472 + $0x250] sm:$0xff] %v2557
                  %v2559 = vld [vmem:[%s2471 + $0x158] sm:$0xff]
                  %2560 = vst [vmem:[%s2472 + $0x258] sm:$0xff] %v2559
                  %v2561 = vld [vmem:[%s2471 + $0x160] sm:$0xff]
                  %2562 = vst [vmem:[%s2472 + $0x260] sm:$0xff] %v2561
                  %v2563 = vld [vmem:[%s2471 + $0x168] sm:$0xff]
                  %2564 = vst [vmem:[%s2472 + $0x268] sm:$0xff] %v2563
                  %v2565 = vld [vmem:[%s2471 + $0x170] sm:$0xff]
                  %2566 = vst [vmem:[%s2472 + $0x270] sm:$0xff] %v2565
                  %v2567 = vld [vmem:[%s2471 + $0x178] sm:$0xff]
                  %2568 = vst [vmem:[%s2472 + $0x278] sm:$0xff] %v2567
                  %v2569 = vld [vmem:[%s2471 + $0x180] sm:$0xff]
                  %2570 = vst [vmem:[%s2472 + $0x280] sm:$0xff] %v2569
                  %v2571 = vld [vmem:[%s2471 + $0x188] sm:$0xff]
                  %2572 = vst [vmem:[%s2472 + $0x288] sm:$0xff] %v2571
                  %v2573 = vld [vmem:[%s2471 + $0x190] sm:$0xff]
                  %2574 = vst [vmem:[%s2472 + $0x290] sm:$0xff] %v2573
                  %v2575 = vld [vmem:[%s2471 + $0x198] sm:$0xff]
                  %2576 = vst [vmem:[%s2472 + $0x298] sm:$0xff] %v2575
                  %v2577 = vld [vmem:[%s2471 + $0x1a0] sm:$0xff]
                  %2578 = vst [vmem:[%s2472 + $0x2a0] sm:$0xff] %v2577
                  %v2579 = vld [vmem:[%s2471 + $0x1a8] sm:$0xff]
                  %2580 = vst [vmem:[%s2472 + $0x2a8] sm:$0xff] %v2579
                  %v2581 = vld [vmem:[%s2471 + $0x1b0] sm:$0xff]
                  %2582 = vst [vmem:[%s2472 + $0x2b0] sm:$0xff] %v2581
                  %v2583 = vld [vmem:[%s2471 + $0x1b8] sm:$0xff]
                  %2584 = vst [vmem:[%s2472 + $0x2b8] sm:$0xff] %v2583
                  %v2585 = vld [vmem:[%s2471 + $0x1c0] sm:$0xff]
                  %2586 = vst [vmem:[%s2472 + $0x2c0] sm:$0xff] %v2585
                  %v2587 = vld [vmem:[%s2471 + $0x1c8] sm:$0xff]
                  %2588 = vst [vmem:[%s2472 + $0x2c8] sm:$0xff] %v2587
                  %v2589 = vld [vmem:[%s2471 + $0x1d0] sm:$0xff]
                  %2590 = vst [vmem:[%s2472 + $0x2d0] sm:$0xff] %v2589
                  %v2591 = vld [vmem:[%s2471 + $0x1d8] sm:$0xff]
                  %2592 = vst [vmem:[%s2472 + $0x2d8] sm:$0xff] %v2591
                  %v2593 = vld [vmem:[%s2471 + $0x1e0] sm:$0xff]
                  %2594 = vst [vmem:[%s2472 + $0x2e0] sm:$0xff] %v2593
                  %v2595 = vld [vmem:[%s2471 + $0x1e8] sm:$0xff]
                  %2596 = vst [vmem:[%s2472 + $0x2e8] sm:$0xff] %v2595
                  %v2597 = vld [vmem:[%s2471 + $0x1f0] sm:$0xff]
                  %2598 = vst [vmem:[%s2472 + $0x2f0] sm:$0xff] %v2597
                  %v2599 = vld [vmem:[%s2471 + $0x1f8] sm:$0xff]
                  %2600 = vst [vmem:[%s2472 + $0x2f8] sm:$0xff] %v2599
                $region64: #{tpu_custom_call.1} parent=58 // loop_footer
                  %s2470 = sadd.s32 1, %s2466
                $region65: #{tpu_custom_call.1} parent=58 // loop_footer_branch
                  %2465 = sbr.rel target = $region61
                $region66: #{tpu_custom_call.1} parent=58 // loop_exit
                  _
              $region59: #{tpu_custom_call.1} parent=43 // pred_fallthru
                _
              // Predicated region
              $region67: #{tpu_custom_call.1} parent=43 // pred_check
                _
              $region68: #{tpu_custom_call.1} parent=43 // pred_check_branch
                %2602 = sbr.rel target = $region70
              $region69: #{tpu_custom_call.1} parent=43 // pred_region
                _
              $region70: #{tpu_custom_call.1} parent=43 // pred_fallthru
                _
            $region44: #{tpu_custom_call.1} parent=39 // pred_fallthru
              _
            // Predicated region
            $region45: #{tpu_custom_call.1} parent=39 // pred_check
              _
            $region46: #{tpu_custom_call.1} parent=39 // pred_check_branch
              %2324 = sbr.rel target = $region48
            $region47: #{tpu_custom_call.1} parent=39 // pred_region
              %s2326 = ssub.s32 256, 1
              loop: start=0, step=1, limit=1
              $region49: #{tpu_custom_call.1} parent=47 // loop_pre_header
                _
              $region50: #{tpu_custom_call.1} parent=47 // loop_header
                %s2328 = sphi 0, %s2332
                %p2329 = scmp.ge.s32.totalorder %s2328, 1
                %s2333 = sphi %s2311, %s2311
                %s2334 = sphi %s2318, %s2318
              $region51: #{tpu_custom_call.1} parent=47 // loop_header_branch
                %2331 = sbr.rel (%p2329) target = $region55
              $region52: #{tpu_custom_call.1} parent=47 // loop_body
                %v2335 = vld [vmem:[%s2333] sm:%s2326]
                %2336 = vst [vmem:[%s2334] sm:%s2326] %v2335
                %v2337 = vld [vmem:[%s2333 + $0x8] sm:%s2326]
                %2338 = vst [vmem:[%s2334 + $0x8] sm:%s2326] %v2337
                %v2339 = vld [vmem:[%s2333 + $0x10] sm:%s2326]
                %2340 = vst [vmem:[%s2334 + $0x10] sm:%s2326] %v2339
                %v2341 = vld [vmem:[%s2333 + $0x18] sm:%s2326]
                %2342 = vst [vmem:[%s2334 + $0x18] sm:%s2326] %v2341
                %v2343 = vld [vmem:[%s2333 + $0x20] sm:%s2326]
                %2344 = vst [vmem:[%s2334 + $0x20] sm:%s2326] %v2343
                %v2345 = vld [vmem:[%s2333 + $0x28] sm:%s2326]
                %2346 = vst [vmem:[%s2334 + $0x28] sm:%s2326] %v2345
                %v2347 = vld [vmem:[%s2333 + $0x30] sm:%s2326]
                %2348 = vst [vmem:[%s2334 + $0x30] sm:%s2326] %v2347
                %v2349 = vld [vmem:[%s2333 + $0x38] sm:%s2326]
                %2350 = vst [vmem:[%s2334 + $0x38] sm:%s2326] %v2349
                %v2351 = vld [vmem:[%s2333 + $0x40] sm:%s2326]
                %2352 = vst [vmem:[%s2334 + $0x40] sm:%s2326] %v2351
                %v2353 = vld [vmem:[%s2333 + $0x48] sm:%s2326]
                %2354 = vst [vmem:[%s2334 + $0x48] sm:%s2326] %v2353
                %v2355 = vld [vmem:[%s2333 + $0x50] sm:%s2326]
                %2356 = vst [vmem:[%s2334 + $0x50] sm:%s2326] %v2355
                %v2357 = vld [vmem:[%s2333 + $0x58] sm:%s2326]
                %2358 = vst [vmem:[%s2334 + $0x58] sm:%s2326] %v2357
                %v2359 = vld [vmem:[%s2333 + $0x60] sm:%s2326]
                %2360 = vst [vmem:[%s2334 + $0x60] sm:%s2326] %v2359
                %v2361 = vld [vmem:[%s2333 + $0x68] sm:%s2326]
                %2362 = vst [vmem:[%s2334 + $0x68] sm:%s2326] %v2361
                %v2363 = vld [vmem:[%s2333 + $0x70] sm:%s2326]
                %2364 = vst [vmem:[%s2334 + $0x70] sm:%s2326] %v2363
                %v2365 = vld [vmem:[%s2333 + $0x78] sm:%s2326]
                %2366 = vst [vmem:[%s2334 + $0x78] sm:%s2326] %v2365
                %v2367 = vld [vmem:[%s2333 + $0x80] sm:%s2326]
                %2368 = vst [vmem:[%s2334 + $0x80] sm:%s2326] %v2367
                %v2369 = vld [vmem:[%s2333 + $0x88] sm:%s2326]
                %2370 = vst [vmem:[%s2334 + $0x88] sm:%s2326] %v2369
                %v2371 = vld [vmem:[%s2333 + $0x90] sm:%s2326]
                %2372 = vst [vmem:[%s2334 + $0x90] sm:%s2326] %v2371
                %v2373 = vld [vmem:[%s2333 + $0x98] sm:%s2326]
                %2374 = vst [vmem:[%s2334 + $0x98] sm:%s2326] %v2373
                %v2375 = vld [vmem:[%s2333 + $0xa0] sm:%s2326]
                %2376 = vst [vmem:[%s2334 + $0xa0] sm:%s2326] %v2375
                %v2377 = vld [vmem:[%s2333 + $0xa8] sm:%s2326]
                %2378 = vst [vmem:[%s2334 + $0xa8] sm:%s2326] %v2377
                %v2379 = vld [vmem:[%s2333 + $0xb0] sm:%s2326]
                %2380 = vst [vmem:[%s2334 + $0xb0] sm:%s2326] %v2379
                %v2381 = vld [vmem:[%s2333 + $0xb8] sm:%s2326]
                %2382 = vst [vmem:[%s2334 + $0xb8] sm:%s2326] %v2381
                %v2383 = vld [vmem:[%s2333 + $0xc0] sm:%s2326]
                %2384 = vst [vmem:[%s2334 + $0xc0] sm:%s2326] %v2383
                %v2385 = vld [vmem:[%s2333 + $0xc8] sm:%s2326]
                %2386 = vst [vmem:[%s2334 + $0xc8] sm:%s2326] %v2385
                %v2387 = vld [vmem:[%s2333 + $0xd0] sm:%s2326]
                %2388 = vst [vmem:[%s2334 + $0xd0] sm:%s2326] %v2387
                %v2389 = vld [vmem:[%s2333 + $0xd8] sm:%s2326]
                %2390 = vst [vmem:[%s2334 + $0xd8] sm:%s2326] %v2389
                %v2391 = vld [vmem:[%s2333 + $0xe0] sm:%s2326]
                %2392 = vst [vmem:[%s2334 + $0xe0] sm:%s2326] %v2391
                %v2393 = vld [vmem:[%s2333 + $0xe8] sm:%s2326]
                %2394 = vst [vmem:[%s2334 + $0xe8] sm:%s2326] %v2393
                %v2395 = vld [vmem:[%s2333 + $0xf0] sm:%s2326]
                %2396 = vst [vmem:[%s2334 + $0xf0] sm:%s2326] %v2395
                %v2397 = vld [vmem:[%s2333 + $0xf8] sm:%s2326]
                %2398 = vst [vmem:[%s2334 + $0xf8] sm:%s2326] %v2397
                %v2399 = vld [vmem:[%s2333 + $0x100] sm:%s2326]
                %2400 = vst [vmem:[%s2334 + $0x200] sm:%s2326] %v2399
                %v2401 = vld [vmem:[%s2333 + $0x108] sm:%s2326]
                %2402 = vst [vmem:[%s2334 + $0x208] sm:%s2326] %v2401
                %v2403 = vld [vmem:[%s2333 + $0x110] sm:%s2326]
                %2404 = vst [vmem:[%s2334 + $0x210] sm:%s2326] %v2403
                %v2405 = vld [vmem:[%s2333 + $0x118] sm:%s2326]
                %2406 = vst [vmem:[%s2334 + $0x218] sm:%s2326] %v2405
                %v2407 = vld [vmem:[%s2333 + $0x120] sm:%s2326]
                %2408 = vst [vmem:[%s2334 + $0x220] sm:%s2326] %v2407
                %v2409 = vld [vmem:[%s2333 + $0x128] sm:%s2326]
                %2410 = vst [vmem:[%s2334 + $0x228] sm:%s2326] %v2409
                %v2411 = vld [vmem:[%s2333 + $0x130] sm:%s2326]
                %2412 = vst [vmem:[%s2334 + $0x230] sm:%s2326] %v2411
                %v2413 = vld [vmem:[%s2333 + $0x138] sm:%s2326]
                %2414 = vst [vmem:[%s2334 + $0x238] sm:%s2326] %v2413
                %v2415 = vld [vmem:[%s2333 + $0x140] sm:%s2326]
                %2416 = vst [vmem:[%s2334 + $0x240] sm:%s2326] %v2415
                %v2417 = vld [vmem:[%s2333 + $0x148] sm:%s2326]
                %2418 = vst [vmem:[%s2334 + $0x248] sm:%s2326] %v2417
                %v2419 = vld [vmem:[%s2333 + $0x150] sm:%s2326]
                %2420 = vst [vmem:[%s2334 + $0x250] sm:%s2326] %v2419
                %v2421 = vld [vmem:[%s2333 + $0x158] sm:%s2326]
                %2422 = vst [vmem:[%s2334 + $0x258] sm:%s2326] %v2421
                %v2423 = vld [vmem:[%s2333 + $0x160] sm:%s2326]
                %2424 = vst [vmem:[%s2334 + $0x260] sm:%s2326] %v2423
                %v2425 = vld [vmem:[%s2333 + $0x168] sm:%s2326]
                %2426 = vst [vmem:[%s2334 + $0x268] sm:%s2326] %v2425
                %v2427 = vld [vmem:[%s2333 + $0x170] sm:%s2326]
                %2428 = vst [vmem:[%s2334 + $0x270] sm:%s2326] %v2427
                %v2429 = vld [vmem:[%s2333 + $0x178] sm:%s2326]
                %2430 = vst [vmem:[%s2334 + $0x278] sm:%s2326] %v2429
                %v2431 = vld [vmem:[%s2333 + $0x180] sm:%s2326]
                %2432 = vst [vmem:[%s2334 + $0x280] sm:%s2326] %v2431
                %v2433 = vld [vmem:[%s2333 + $0x188] sm:%s2326]
                %2434 = vst [vmem:[%s2334 + $0x288] sm:%s2326] %v2433
                %v2435 = vld [vmem:[%s2333 + $0x190] sm:%s2326]
                %2436 = vst [vmem:[%s2334 + $0x290] sm:%s2326] %v2435
                %v2437 = vld [vmem:[%s2333 + $0x198] sm:%s2326]
                %2438 = vst [vmem:[%s2334 + $0x298] sm:%s2326] %v2437
                %v2439 = vld [vmem:[%s2333 + $0x1a0] sm:%s2326]
                %2440 = vst [vmem:[%s2334 + $0x2a0] sm:%s2326] %v2439
                %v2441 = vld [vmem:[%s2333 + $0x1a8] sm:%s2326]
                %2442 = vst [vmem:[%s2334 + $0x2a8] sm:%s2326] %v2441
                %v2443 = vld [vmem:[%s2333 + $0x1b0] sm:%s2326]
                %2444 = vst [vmem:[%s2334 + $0x2b0] sm:%s2326] %v2443
                %v2445 = vld [vmem:[%s2333 + $0x1b8] sm:%s2326]
                %2446 = vst [vmem:[%s2334 + $0x2b8] sm:%s2326] %v2445
                %v2447 = vld [vmem:[%s2333 + $0x1c0] sm:%s2326]
                %2448 = vst [vmem:[%s2334 + $0x2c0] sm:%s2326] %v2447
                %v2449 = vld [vmem:[%s2333 + $0x1c8] sm:%s2326]
                %2450 = vst [vmem:[%s2334 + $0x2c8] sm:%s2326] %v2449
                %v2451 = vld [vmem:[%s2333 + $0x1d0] sm:%s2326]
                %2452 = vst [vmem:[%s2334 + $0x2d0] sm:%s2326] %v2451
                %v2453 = vld [vmem:[%s2333 + $0x1d8] sm:%s2326]
                %2454 = vst [vmem:[%s2334 + $0x2d8] sm:%s2326] %v2453
                %v2455 = vld [vmem:[%s2333 + $0x1e0] sm:%s2326]
                %2456 = vst [vmem:[%s2334 + $0x2e0] sm:%s2326] %v2455
                %v2457 = vld [vmem:[%s2333 + $0x1e8] sm:%s2326]
                %2458 = vst [vmem:[%s2334 + $0x2e8] sm:%s2326] %v2457
                %v2459 = vld [vmem:[%s2333 + $0x1f0] sm:%s2326]
                %2460 = vst [vmem:[%s2334 + $0x2f0] sm:%s2326] %v2459
                %v2461 = vld [vmem:[%s2333 + $0x1f8] sm:%s2326]
                %2462 = vst [vmem:[%s2334 + $0x2f8] sm:%s2326] %v2461
              $region53: #{tpu_custom_call.1} parent=47 // loop_footer
                %s2332 = sadd.s32 1, %s2328
              $region54: #{tpu_custom_call.1} parent=47 // loop_footer_branch
                %2327 = sbr.rel target = $region50
              $region55: #{tpu_custom_call.1} parent=47 // loop_exit
                _
            $region48: #{tpu_custom_call.1} parent=39 // pred_fallthru
              _
          $region40: #{tpu_custom_call.1} parent=35 // pred_fallthru
            _
          %2603 = vnop
        $region36: #{tpu_custom_call.1} parent=31 // pred_fallthru
          _
      $region32: #{tpu_custom_call.1} parent=5 // pred_fallthru
        _
      %p2604 = scmp.le.s32.totalorder 2, %s9
      // Predicated region
      $region71: #{tpu_custom_call.1} parent=5 // pred_check
        %p2605 = pneg %p2604
      $region72: #{tpu_custom_call.1} parent=5 // pred_check_branch
        %2607 = sbr.rel (%p2605) target = $region74
      $region73: #{tpu_custom_call.1} parent=5 // pred_region
        %s2608 = ssub.s32 %s9, 2
        // Predicated region
        $region75: #{tpu_custom_call.1} parent=73 // pred_check
          %p2609 = pneg %p132
        $region76: #{tpu_custom_call.1} parent=73 // pred_check_branch
          %2611 = sbr.rel (%p2609) target = $region78
        $region77: #{tpu_custom_call.1} parent=73 // pred_region
          %s2612 = sand.u32 %s117, 1
          %s2613 = sand.u32 %s117, 1
          %s2614 = smul.addr %s2613, 512
          %s2615 = scalar_lea.vmem [#allocation3], %s2614
        $region78: #{tpu_custom_call.1} parent=73 // pred_fallthru
          _
      $region74: #{tpu_custom_call.1} parent=5 // pred_fallthru
        _
    $region6: #{tpu_custom_call.1} parent=1 // loop_footer
      %s13 = sadd.s32 1, %s9
    $region7: #{tpu_custom_call.1} parent=1 // loop_footer_branch
      %8 = sbr.rel target = $region3
    $region8: #{tpu_custom_call.1} parent=1 // loop_exit
      _

</llo_original>
